<compile_context>
chip_gen: v7x
topology: tpu7x:2x2x1
jax: 0.10.0
libtpu: 0.0.40
codegen_flags: <defaults>
</compile_context>

<pallas_src>
import numpy as np
import jax
import jax.numpy as jnp
from jax.experimental import pallas as pl
from jax.experimental.pallas import tpu as pltpu

# ---- small, TPU-friendly versions of the module constants ----
H = 32            # hidden_size
LAYERS = 2        # layers_dec
A = 128           # attention_features
V1 = 128          # vocab_features
V = 32            # vocab_size
B = 8             # batch_size
T_ENC = 8         # encoder length
T_DEC = 4         # decoder length
IN_SIZE = 1       # LSTM input_size (forced to 1 by pgen_linear's 2H+H+1 input width)
EXT = V + 8       # extended vocab size ( == max(real_index)+1 )
EXT_PAD = 128     # lane-padded extended vocab width used inside the kernel
LANE = 128

# Matmul operand dtype (per perf review: bf16 on all generations; accumulation stays f32).
MM_DTYPE = jnp.bfloat16

# ---- bf16 matmul-weight slab: every block is (rows, 128), carved with static slices ----
_WSLAB_LAYOUT = [
    ('w_hh0', H),        # layer-0 recurrent           (H, 4H)
    ('w_l1', 2 * H),     # layer-1 fused [w_ih1;w_hh1] (2H, 4H)
    ('wa_enc', 2 * H),   # attention enc projection    (2H, A)
    ('wa_dec', H),       # attention dec projection    (H, A)
    ('w1', 3 * H),       # linearVocab1 fused [dec;ctx](3H, V1)
    ('w2', V1),          # linearVocab2 (lane-padded)  (V1, EXT_PAD)
    ('w_rd', 2 * H),     # reduce_dim (lane-padded)    (2H, 128)
    ('w_out', A),        # attn_out column in lane 0   (A, 1)
    ('wp', 3 * H),       # pgen fused column in lane 0 (3H, 1)
]
_W_SIZES = dict(_WSLAB_LAYOUT)
_W_OFF = {}
_off = 0
for _n, _r in _WSLAB_LAYOUT:
    _W_OFF[_n] = _off
    _off += _r
W_ROWS = _off            # 704 rows (bf16 -> ~176 KB, tiny vs VMEM)

# ---- f32 bias/elementwise slab: exactly 8 rows x 128 lanes (one vreg) ----
_BSLAB_LAYOUT = ['w_ih0', 'b0', 'b1', 'wa_cov', 'b_a', 'b1v', 'b2', 'b_rd']
_B_OFF = {n: i for i, n in enumerate(_BSLAB_LAYOUT)}
B_ROWS = len(_BSLAB_LAYOUT)


def bidecoder_kernel(
    # data
    out_enc_ref,      # (T_ENC*B, 2H) f32
    state_ref,        # (4B, 2H) f32    rows: h0,h1,c0,c1 (already cat along feature dim)
    ri_ref,           # (T_ENC, B, 1) int32
    in_dec_ref,       # (T_DEC, B, 1) f32
    mask_ref,         # (T_ENC, B, 1) f32
    # weights
    w_ref,            # (W_ROWS, 128) bf16 matmul-weight slab
    b_ref,            # (B_ROWS, 128) f32 bias slab
    pscal_ref,        # SMEM (2,): [wp_x, b_p]
    # outputs
    pvocab_ref,       # (T_DEC, B, EXT_PAD) f32
    misc_ref,         # (2B, 128) f32 packed {h0,h1,c0,c1 | covloss,coverage}
    # scratch
    oh_ref,           # VMEM (T_ENC, B, EXT_PAD) pointer one-hot
):
    f32 = jnp.float32

    def dot(a, b):
        return jnp.dot(a.astype(MM_DTYPE), b.astype(MM_DTYPE),
                       preferred_element_type=f32)

    def wblk(name):
        o = _W_OFF[name]
        return w_ref[o:o + _W_SIZES[name]]

    def bblk(name):
        o = _B_OFF[name]
        return b_ref[o:o + 1]

    # ---- hoist every weight slice used below (loaded exactly once, already bf16/f32) ----
    w_hh0 = wblk('w_hh0')
    w_l1 = wblk('w_l1')
    wa_enc = wblk('wa_enc')
    wa_dec = wblk('wa_dec')
    w1 = wblk('w1')
    w2 = wblk('w2')
    w_rd = wblk('w_rd')
    w_out = wblk('w_out')[:, 0:1]        # (A, 1)
    wp = wblk('wp')[:, 0:1]              # (3H, 1)

    w_ih0 = bblk('w_ih0')
    b0 = bblk('b0')
    b1 = bblk('b1')
    wa_cov = bblk('wa_cov')
    b_a = bblk('b_a')
    b1v = bblk('b1v')
    b2 = bblk('b2')
    b_rd = bblk('b_rd')

    # ---- reduce_dim(cat(h_enc pairs)) for (h0,h1,c0,c1): one (4B,2H)@(2H,128) MXU matmul ----
    rd = dot(state_ref[...], w_rd) + b_rd                    # (4B, 128); cols >= H are zero
    h0 = rd[0 * B:1 * B, :H]
    h1 = rd[1 * B:2 * B, :H]
    c0 = rd[2 * B:3 * B, :H]
    c1 = rd[3 * B:4 * B, :H]

    # ---- 2-layer unidirectional LSTM over T_DEC steps (PyTorch gate order i,f,g,o) ----
    x_all = in_dec_ref[...]                                  # (T_DEC, B, 1)
    g0x = x_all * w_ih0 + b0                                 # (T_DEC, B, 4H)  hoisted input term

    def lstm_cell(gates, c_prev):
        i_ = jax.nn.sigmoid(gates[:, 0:H])
        f_ = jax.nn.sigmoid(gates[:, H:2 * H])
        g_ = jnp.tanh(gates[:, 2 * H:3 * H])
        o_ = jax.nn.sigmoid(gates[:, 3 * H:4 * H])
        c_new = f_ * c_prev + i_ * g_
        return o_ * jnp.tanh(c_new), c_new

    out_dec = []
    for t in range(T_DEC):
        h0, c0 = lstm_cell(g0x[t] + dot(h0, w_hh0), c0)
        h01 = jnp.concatenate([h0, h1], axis=1)              # (B, 2H) -> fused layer-1 dot
        h1, c1 = lstm_cell(dot(h01, w_l1) + b1, c1)
        out_dec.append(h1)                                   # (B, H)

    # dense (B, 128) store: [h0 | h1 | c0 | c1] along lanes
    misc_ref[0:B, :] = jnp.concatenate([h0, h1, c0, c1], axis=1)

    # ---- fused encoder attention projection: one (T*B,2H)@(2H,A) matmul, bias folded once ----
    out_enc_flat = out_enc_ref[...]                          # (T_ENC*B, 2H)
    enc_proj = (dot(out_enc_flat, wa_enc) + b_a).reshape(T_ENC, B, A)
    out_enc = out_enc_flat.reshape(T_ENC, B, 2 * H)
    att_mask = mask_ref[...]                                 # (T_ENC, B, 1)

    # pointer/copy one-hot (skip id == 1); built once, parked in VMEM scratch
    ri = ri_ref[...]                                         # (T_ENC, B, 1) int32
    ids = jax.lax.broadcasted_iota(jnp.int32, (T_ENC, B, EXT_PAD), 2)
    oh_ref[...] = jnp.where(jnp.logical_and(ids == ri, ri != 1), 1.0, 0.0).astype(f32)

    # pgen scalar parameters (SMEM) and hoisted per-step input term
    wp_x = pscal_ref[0]
    b_p = pscal_ref[1]
    pgen_x = x_all * wp_x + b_p                              # (T_DEC, B, 1)

    cov = jnp.zeros((T_ENC, B, 1), f32)                      # coverage (first_word=True)
    covloss_cols = []
    for t in range(T_DEC):
        od_t = out_dec[t]                                    # (B, H)

        # e = attn_out(tanh(attention(cat(output_enc, out_dec_t, coverage)))) + att_mask
        dec_proj = dot(od_t, wa_dec)                         # (B, A)
        e = jnp.tanh(enc_proj + dec_proj + cov * wa_cov)     # (T_ENC, B, A)
        score = (dot(e.reshape(T_ENC * B, A), w_out).reshape(T_ENC, B, 1)
                 + att_mask)                                 # (T_ENC, B, 1)

        # softmax over encoder positions (dim 0)
        m = jnp.max(score, axis=0, keepdims=True)
        p = jnp.exp(score - m)
        attn = p / jnp.sum(p, axis=0, keepdims=True)         # (T_ENC, B, 1)

        covloss_cols.append(jnp.sum(jnp.minimum(attn, cov), axis=0))     # (B, 1)
        cov = cov + attn

        context = jnp.sum(attn * out_enc, axis=0)            # (B, 2H)

        # fused operand for vocab + pgen: cat(out_dec_t, context)
        odctx = jnp.concatenate([od_t, context], axis=1).astype(MM_DTYPE)   # (B, 3H)

        # pgen = sigmoid(pgen_linear(cat(context, out_dec_t, input_dec_t)))  -- one N=1 MXU dot
        pgen = jax.nn.sigmoid(
            jnp.dot(odctx, wp, preferred_element_type=f32) + pgen_x[t])     # (B, 1)

        # p_vocab = softmax(linearVocab2(linearVocab1(cat(out_dec_t, context))))
        # (w2/b2 lane-padded to 128: zero weights and -1e30 bias -> exact zero padding)
        pv1 = jnp.dot(odctx, w1, preferred_element_type=f32) + b1v          # (B, V1)
        logits = dot(pv1, w2) + b2                           # (B, EXT_PAD)
        lm = jnp.max(logits, axis=-1, keepdims=True)
        le = jnp.exp(logits - lm)
        pvoc = le / jnp.sum(le, axis=-1, keepdims=True)      # (B, EXT_PAD)

        # pointer/copy distribution: scatter-add of attention over real_index (skip id 1)
        pointer = jnp.sum(oh_ref[...] * attn, axis=0)        # (B, EXT_PAD)
        pvocab_ref[t] = pvoc * pgen + pointer * (1.0 - pgen)

    # dense (B, 128) store: lanes [0:T_DEC]=covloss, [T_DEC:T_DEC+T_ENC]=coverage, rest zero
    pad = jnp.zeros((B, LANE - T_DEC - T_ENC), f32)
    misc_ref[B:2 * B, :] = jnp.concatenate(
        covloss_cols + [cov[j] for j in range(T_ENC)] + [pad], axis=1)


def init_params(key):
    keys = jax.random.split(key, 24)
    it = iter(keys)

    def u(k, shape, fan_in):
        s = 1.0 / np.sqrt(fan_in)
        return jax.random.uniform(k, shape, jnp.float32, -s, s)

    p = {}
    p['reduce_w'] = u(next(it), (H, 2 * H), 2 * H)
    p['reduce_b'] = u(next(it), (H,), 2 * H)
    lstm = []
    for layer in range(LAYERS):
        in_f = IN_SIZE if layer == 0 else H
        w_ih = u(next(it), (4 * H, in_f), H)
        w_hh = u(next(it), (4 * H, H), H)
        b_ih = u(next(it), (4 * H,), H)
        b_hh = u(next(it), (4 * H,), H)
        lstm.append((w_ih, w_hh, b_ih, b_hh))
    p['lstm'] = lstm
    p['att_w'] = u(next(it), (A, 3 * H + 1), 3 * H + 1)
    p['att_b'] = u(next(it), (A,), 3 * H + 1)
    p['attn_out_w'] = u(next(it), (1, A), A)
    p['pgen_w'] = u(next(it), (1, 3 * H + 1), 3 * H + 1)
    p['pgen_b'] = u(next(it), (1,), 3 * H + 1)
    p['v1_w'] = u(next(it), (V1, 3 * H), 3 * H)
    p['v1_b'] = u(next(it), (V1,), 3 * H)
    p['v2_w'] = u(next(it), (V, V1), V1)
    p['v2_b'] = u(next(it), (V,), V1)
    # NOTE: self.linearOut is defined in __init__ but never used in forward -> omitted.
    return p


def pack_params(params):
    """Host-side packing: bf16 matmul-weight slab + f32 bias slab + 2 SMEM scalars."""
    f32 = jnp.float32

    def pad_cols(x, width=LANE):
        x = jnp.asarray(x, f32)
        return jnp.pad(x, ((0, 0), (0, width - x.shape[1])))

    def col_block(vec, rows):
        blk = jnp.zeros((rows, LANE), f32)
        return blk.at[:, 0].set(jnp.asarray(vec, f32))

    Wrd_T = params['reduce_w'].T                             # (2H, H)
    (wi0, wh0, bi0, bh0), (wi1, wh1, bi1, bh1) = params['lstm']
    Wa_T = params['att_w'].T                                 # (3H+1, A)
    W1_T = params['v1_w'].T                                  # (3H, V1)  rows: [dec | ctx]
    W2_T = params['v2_w'].T                                  # (V1, V)

    # pgen weight columns reordered to match the fused operand cat(out_dec_t, context)
    wp_fused = jnp.concatenate([params['pgen_w'][0, 2 * H:3 * H],
                                params['pgen_w'][0, :2 * H]])          # (3H,)

    wblocks = {
        'w_hh0': wh0.T,                                      # (H, 4H)
        'w_l1': jnp.concatenate([wi1.T, wh1.T], axis=0),     # (2H, 4H)  fused layer-1
        'wa_enc': Wa_T[:2 * H],                              # (2H, A)
        'wa_dec': Wa_T[2 * H:3 * H],                         # (H, A)
        'w1': W1_T,                                          # (3H, V1)  fused [dec;ctx]
        'w2': pad_cols(W2_T, EXT_PAD),                       # (V1, 128) padded cols zero
        'w_rd': pad_cols(Wrd_T),                             # (2H, 128) cols >= H zero
        'w_out': col_block(params['attn_out_w'][0], A),      # (A, 128)  lane 0
        'wp': col_block(wp_fused, 3 * H),                    # (3H, 128) lane 0
    }
    wslab = jnp.concatenate([wblocks[n].astype(f32) for n, _ in _WSLAB_LAYOUT],
                            axis=0).astype(MM_DTYPE)
    assert wslab.shape == (W_ROWS, LANE)

    bblocks = {
        'w_ih0': wi0.T,                                      # (1, 4H)
        'b0': (bi0 + bh0).reshape(1, 4 * H),
        'b1': (bi1 + bh1).reshape(1, 4 * H),
        'wa_cov': Wa_T[3 * H:3 * H + 1],                     # (1, A)
        'b_a': params['att_b'].reshape(1, A),
        'b1v': params['v1_b'].reshape(1, V1),
        'b2': jnp.concatenate([params['v2_b'],
                               jnp.full((EXT_PAD - V,), -1e30, f32)]).reshape(1, EXT_PAD),
        'b_rd': pad_cols(params['reduce_b'].reshape(1, H)),
    }
    bslab = jnp.concatenate([bblocks[n].astype(f32) for n in _BSLAB_LAYOUT], axis=0)
    assert bslab.shape == (B_ROWS, LANE)

    pscal = jnp.array([params['pgen_w'][0, 3 * H], params['pgen_b'][0]], f32)   # [wp_x, b_p]
    return wslab, bslab, pscal


def bidecoder_forward(params, output_enc, real_index, input_dec, hidden_enc, cell_enc, att_mask):
    f32 = jnp.float32
    wslab, bslab, pscal = pack_params(params)

    # data reshapes (layout plumbing only)
    out_enc_flat = output_enc.reshape(T_ENC * B, 2 * H)
    old_h = jnp.concatenate([hidden_enc[0:2], hidden_enc[2:4]], axis=-1)     # (2, B, 2H)
    old_c = jnp.concatenate([cell_enc[0:2], cell_enc[2:4]], axis=-1)
    state_cat = jnp.concatenate([old_h, old_c], axis=0).reshape(4 * B, 2 * H)
    ri3 = real_index.reshape(T_ENC, B, 1).astype(jnp.int32)

    inputs = (out_enc_flat, state_cat, ri3, input_dec, att_mask, wslab, bslab, pscal)

    def full_spec(shape):
        nd = len(shape)
        return pl.BlockSpec(shape, lambda i, _nd=nd: (0,) * _nd)

    in_specs = [full_spec(x.shape) for x in inputs[:-1]]
    in_specs.append(pl.BlockSpec(memory_space=pltpu.MemorySpace.SMEM))   # pgen scalars

    out_shape = (
        jax.ShapeDtypeStruct((T_DEC, B, EXT_PAD), f32),   # pvocab (lane-padded, dense stores)
        jax.ShapeDtypeStruct((2 * B, LANE), f32),         # packed states/covloss/coverage
    )
    out_specs = tuple(full_spec(s.shape) for s in out_shape)

    pvocab_pad, misc = pl.pallas_call(
        bidecoder_kernel,
        out_shape=out_shape,
        grid_spec=pltpu.PrefetchScalarGridSpec(
            num_scalar_prefetch=0,
            grid=(1,),
            in_specs=in_specs,
            out_specs=out_specs,
            scratch_shapes=[pltpu.VMEM((T_ENC, B, EXT_PAD), f32)],   # pointer one-hot
        ),
        compiler_params=pltpu.CompilerParams(dimension_semantics=("arbitrary",)),
    )(*inputs)

    # wrapper-side unpacking (layout plumbing only)
    pvocab = pvocab_pad[:, :, :EXT]
    states = misc[:B]                                        # (B, 128)
    hdec = jnp.stack([states[:, 0:H], states[:, H:2 * H]])
    cdec = jnp.stack([states[:, 2 * H:3 * H], states[:, 3 * H:4 * H]])
    packed = misc[B:2 * B]                                   # (B, 128)
    covloss = packed[:, :T_DEC].T.reshape(T_DEC, B, 1)
    coverage = packed[:, T_DEC:T_DEC + T_ENC].T.reshape(T_ENC, B, 1)
    return pvocab, covloss, coverage, hdec, cdec


# ----------------------- pure-JAX / numpy reference (literal PyTorch semantics) -------------
def ref_forward(params, output_enc, real_index, input_dec, hidden_enc, cell_enc, att_mask):
    W_rd, b_rd = params['reduce_w'], params['reduce_b']
    old_enc = jnp.concatenate([hidden_enc[0:2], hidden_enc[2:]], axis=-1)
    old_cell = jnp.concatenate([cell_enc[0:2], cell_enc[2:]], axis=-1)
    new_enc = old_enc @ W_rd.T + b_rd
    new_cell = old_cell @ W_rd.T + b_rd
    coverage = jnp.zeros((T_ENC, B, 1), jnp.float32)

    h = [new_enc[0], new_enc[1]]
    c = [new_cell[0], new_cell[1]]
    outs = []
    for t in range(T_DEC):
        x = input_dec[t]
        for layer in range(LAYERS):
            w_ih, w_hh, b_ih, b_hh = params['lstm'][layer]
            g = x @ w_ih.T + b_ih + h[layer] @ w_hh.T + b_hh
            i_ = jax.nn.sigmoid(g[:, :H])
            f_ = jax.nn.sigmoid(g[:, H:2 * H])
            gg = jnp.tanh(g[:, 2 * H:3 * H])
            o_ = jax.nn.sigmoid(g[:, 3 * H:])
            c[layer] = f_ * c[layer] + i_ * gg
            h[layer] = o_ * jnp.tanh(c[layer])
            x = h[layer]
        outs.append(h[1])
    output_dec = jnp.stack(outs)

    pvocab = np.zeros((T_DEC, B, EXT), np.float32)
    covloss = np.zeros((T_DEC, B, 1), np.float32)
    ri_np = np.asarray(real_index)
    for t in range(T_DEC):
        od_t = output_dec[t]
        inp_att = jnp.concatenate(
            [output_enc, jnp.broadcast_to(od_t[None], (T_ENC, B, H)), coverage], axis=2)
        e = jnp.tanh(inp_att @ params['att_w'].T + params['att_b'])
        e = e @ params['attn_out_w'].T
        e = e + att_mask
        attention = jax.nn.softmax(e, axis=0)
        covloss[t] = np.asarray(jnp.sum(jnp.minimum(attention, coverage), axis=0))
        coverage = coverage + attention
        context = jnp.sum(attention * output_enc, axis=0)
        in_pgen = jnp.concatenate([context, od_t, input_dec[t]], axis=1)
        pgen = jax.nn.sigmoid(in_pgen @ params['pgen_w'].T + params['pgen_b'])
        pv_in = jnp.concatenate([od_t, context], axis=1)
        pv = pv_in @ params['v1_w'].T + params['v1_b']
        pv = pv @ params['v2_w'].T + params['v2_b']
        pv = jax.nn.softmax(pv, axis=-1) * pgen
        pv_full = np.zeros((B, EXT), np.float32)
        pv_full[:, :V] = np.asarray(pv)
        att_np = np.asarray(attention)
        pg_np = np.asarray(pgen)
        for i in range(B):
            for j in range(T_ENC):
                if ri_np[j, i] == 1:
                    pass
                else:
                    idx = int(ri_np[j, i])
                    pv_full[i, idx] += att_np[j, i, 0] * (1.0 - pg_np[i, 0])
        pvocab[t] = pv_full
    return (pvocab, covloss, np.asarray(coverage),
            np.asarray(jnp.stack(h)), np.asarray(jnp.stack(c)))


if __name__ == "__main__":
    key = jax.random.PRNGKey(0)
    kp, kd = jax.random.split(key)
    params = init_params(kp)

    ks = jax.random.split(kd, 8)
    output_enc = jax.random.normal(ks[0], (T_ENC, B, 2 * H), jnp.float32)
    real_index = jax.random.randint(ks[1], (T_ENC, B), 0, EXT, jnp.int32)
    real_index = real_index.at[0, 0].set(EXT - 1)   # ensure max(real_index)+1 == EXT
    real_index = real_index.at[1, 0].set(1)         # exercise the "skip id 1" branch
    input_dec = jax.random.normal(ks[2], (T_DEC, B, IN_SIZE), jnp.float32)
    hidden_enc = jax.random.normal(ks[3], (2 * LAYERS, B, H), jnp.float32)
    cell_enc = jax.random.normal(ks[4], (2 * LAYERS, B, H), jnp.float32)
    att_mask = 0.5 * jax.random.normal(ks[5], (T_ENC, B, 1), jnp.float32)

    outs = bidecoder_forward(params, output_enc, real_index, input_dec,
                             hidden_enc, cell_enc, att_mask)
    outs = jax.block_until_ready(outs)
    pvocab, covloss, coverage, hdec, cdec = outs

    ref = ref_forward(params, output_enc, real_index, input_dec,
                      hidden_enc, cell_enc, att_mask)
    # bf16 MXU operands (f32 accumulation) -> slightly looser tolerance than the f32 path.
    for got, want in zip((pvocab, covloss, coverage, hdec, cdec), ref):
        np.testing.assert_allclose(np.asarray(got), want, rtol=3e-2, atol=1e-2)

    print("KERNEL_OK")
</pallas_src>

<mosaic_0001>
module attributes {stable_mosaic.version = 11 : i64} {
  func.func @bidecoder_kernel(%arg0: i32, %arg1: memref<64x64xf32, #tpu.memory_space<vmem>>, %arg2: memref<32x64xf32, #tpu.memory_space<vmem>>, %arg3: memref<8x8x1xi32, #tpu.memory_space<vmem>>, %arg4: memref<4x8x1xf32, #tpu.memory_space<vmem>>, %arg5: memref<8x8x1xf32, #tpu.memory_space<vmem>>, %arg6: memref<704x128xbf16, #tpu.memory_space<vmem>>, %arg7: memref<8x128xf32, #tpu.memory_space<vmem>>, %arg8: memref<2xf32, #tpu.memory_space<smem>>, %arg9: memref<4x8x128xf32, #tpu.memory_space<vmem>>, %arg10: memref<16x128xf32, #tpu.memory_space<vmem>>, %arg11: memref<8x8x128xf32, #tpu.memory_space<vmem>>) attributes {dimension_semantics = [#tpu.dimension_semantics<arbitrary>], iteration_bounds = array<i64: 1>, scalar_prefetch = 0 : i64, scratch_operands = 1 : i64, tpu.core_type = #tpu.core_type<tc>, window_params = [{pipeline_mode = #tpu.pipeline_mode<synchronous>, transform_indices = @transform_0, window_bounds = array<i64: 64, 64>}, {pipeline_mode = #tpu.pipeline_mode<synchronous>, transform_indices = @transform_1, window_bounds = array<i64: 32, 64>}, {pipeline_mode = #tpu.pipeline_mode<synchronous>, transform_indices = @transform_2, window_bounds = array<i64: 8, 8, 1>}, {pipeline_mode = #tpu.pipeline_mode<synchronous>, transform_indices = @transform_3, window_bounds = array<i64: 4, 8, 1>}, {pipeline_mode = #tpu.pipeline_mode<synchronous>, transform_indices = @transform_4, window_bounds = array<i64: 8, 8, 1>}, {pipeline_mode = #tpu.pipeline_mode<synchronous>, transform_indices = @transform_5, window_bounds = array<i64: 704, 128>}, {pipeline_mode = #tpu.pipeline_mode<synchronous>, transform_indices = @transform_6, window_bounds = array<i64: 8, 128>}, {transform_indices = @transform_7, window_bounds = array<i64: 2>}, {pipeline_mode = #tpu.pipeline_mode<synchronous>, transform_indices = @transform_8, window_bounds = array<i64: 4, 8, 128>}, {pipeline_mode = #tpu.pipeline_mode<synchronous>, transform_indices = @transform_9, window_bounds = array<i64: 16, 128>}]} {
    %c0 = arith.constant 0 : index
    %c0_0 = arith.constant 0 : index
    %0 = vector.load %arg6[%c0, %c0_0] : memref<704x128xbf16, #tpu.memory_space<vmem>>, vector<32x128xbf16>
    %c32 = arith.constant 32 : index
    %c0_1 = arith.constant 0 : index
    %1 = vector.load %arg6[%c32, %c0_1] : memref<704x128xbf16, #tpu.memory_space<vmem>>, vector<64x128xbf16>
    %c96 = arith.constant 96 : index
    %c0_2 = arith.constant 0 : index
    %2 = vector.load %arg6[%c96, %c0_2] : memref<704x128xbf16, #tpu.memory_space<vmem>>, vector<64x128xbf16>
    %c160 = arith.constant 160 : index
    %c0_3 = arith.constant 0 : index
    %3 = vector.load %arg6[%c160, %c0_3] : memref<704x128xbf16, #tpu.memory_space<vmem>>, vector<32x128xbf16>
    %c192 = arith.constant 192 : index
    %c0_4 = arith.constant 0 : index
    %4 = vector.load %arg6[%c192, %c0_4] : memref<704x128xbf16, #tpu.memory_space<vmem>>, vector<96x128xbf16>
    %c288 = arith.constant 288 : index
    %c0_5 = arith.constant 0 : index
    %5 = vector.load %arg6[%c288, %c0_5] : memref<704x128xbf16, #tpu.memory_space<vmem>>, vector<128x128xbf16>
    %c416 = arith.constant 416 : index
    %c0_6 = arith.constant 0 : index
    %6 = vector.load %arg6[%c416, %c0_6] : memref<704x128xbf16, #tpu.memory_space<vmem>>, vector<64x128xbf16>
    %c480 = arith.constant 480 : index
    %c0_7 = arith.constant 0 : index
    %7 = vector.load %arg6[%c480, %c0_7] : memref<704x128xbf16, #tpu.memory_space<vmem>>, vector<128x128xbf16>
    %8 = vector.extract_strided_slice %7 {offsets = [0, 0], sizes = [128, 1], strides = [1, 1]} : vector<128x128xbf16> to vector<128x1xbf16>
    %c608 = arith.constant 608 : index
    %c0_8 = arith.constant 0 : index
    %9 = vector.load %arg6[%c608, %c0_8] : memref<704x128xbf16, #tpu.memory_space<vmem>>, vector<96x128xbf16>
    %10 = vector.extract_strided_slice %9 {offsets = [0, 0], sizes = [96, 1], strides = [1, 1]} : vector<96x128xbf16> to vector<96x1xbf16>
    %c0_9 = arith.constant 0 : index
    %c0_10 = arith.constant 0 : index
    %11 = vector.load %arg7[%c0_9, %c0_10] : memref<8x128xf32, #tpu.memory_space<vmem>>, vector<1x128xf32>
    %c1 = arith.constant 1 : index
    %c0_11 = arith.constant 0 : index
    %12 = vector.load %arg7[%c1, %c0_11] : memref<8x128xf32, #tpu.memory_space<vmem>>, vector<1x128xf32>
    %c2 = arith.constant 2 : index
    %c0_12 = arith.constant 0 : index
    %13 = vector.load %arg7[%c2, %c0_12] : memref<8x128xf32, #tpu.memory_space<vmem>>, vector<1x128xf32>
    %c3 = arith.constant 3 : index
    %c0_13 = arith.constant 0 : index
    %14 = vector.load %arg7[%c3, %c0_13] : memref<8x128xf32, #tpu.memory_space<vmem>>, vector<1x128xf32>
    %c4 = arith.constant 4 : index
    %c0_14 = arith.constant 0 : index
    %15 = vector.load %arg7[%c4, %c0_14] : memref<8x128xf32, #tpu.memory_space<vmem>>, vector<1x128xf32>
    %c5 = arith.constant 5 : index
    %c0_15 = arith.constant 0 : index
    %16 = vector.load %arg7[%c5, %c0_15] : memref<8x128xf32, #tpu.memory_space<vmem>>, vector<1x128xf32>
    %c6 = arith.constant 6 : index
    %c0_16 = arith.constant 0 : index
    %17 = vector.load %arg7[%c6, %c0_16] : memref<8x128xf32, #tpu.memory_space<vmem>>, vector<1x128xf32>
    %c7 = arith.constant 7 : index
    %c0_17 = arith.constant 0 : index
    %18 = vector.load %arg7[%c7, %c0_17] : memref<8x128xf32, #tpu.memory_space<vmem>>, vector<1x128xf32>
    %c0_18 = arith.constant 0 : index
    %c0_19 = arith.constant 0 : index
    %19 = vector.load %arg2[%c0_18, %c0_19] : memref<32x64xf32, #tpu.memory_space<vmem>>, vector<32x64xf32>
    %20 = arith.truncf %19 : vector<32x64xf32> to vector<32x64xbf16>
    %cst = arith.constant dense<0.000000e+00> : vector<32x128xf32>
    %21 = tpu.matmul %20, %6, %cst {dimension_numbers = #tpu.dot_dimension_numbers<[1], [0], [0], [1], [0, 0, 1, 1], [], []>} : vector<32x64xbf16>, vector<64x128xbf16>, vector<32x128xf32> -> vector<32x128xf32>
    %22 = vector.broadcast %18 : vector<1x128xf32> to vector<32x128xf32>
    %23 = arith.addf %21, %22 : vector<32x128xf32>
    %24 = vector.extract_strided_slice %23 {offsets = [0, 0], sizes = [8, 32], strides = [1, 1]} : vector<32x128xf32> to vector<8x32xf32>
    %25 = vector.extract_strided_slice %23 {offsets = [8, 0], sizes = [8, 32], strides = [1, 1]} : vector<32x128xf32> to vector<8x32xf32>
    %26 = vector.extract_strided_slice %23 {offsets = [16, 0], sizes = [8, 32], strides = [1, 1]} : vector<32x128xf32> to vector<8x32xf32>
    %27 = vector.extract_strided_slice %23 {offsets = [24, 0], sizes = [8, 32], strides = [1, 1]} : vector<32x128xf32> to vector<8x32xf32>
    %c0_20 = arith.constant 0 : index
    %c0_21 = arith.constant 0 : index
    %c0_22 = arith.constant 0 : index
    %28 = vector.load %arg4[%c0_20, %c0_21, %c0_22] : memref<4x8x1xf32, #tpu.memory_space<vmem>>, vector<4x8x1xf32>
    %29 = vector.shape_cast %11 : vector<1x128xf32> to vector<1x1x128xf32>
    %30 = vector.broadcast %28 : vector<4x8x1xf32> to vector<4x8x128xf32>
    %31 = vector.broadcast %29 : vector<1x1x128xf32> to vector<4x8x128xf32>
    %32 = arith.mulf %30, %31 : vector<4x8x128xf32>
    %33 = vector.shape_cast %12 : vector<1x128xf32> to vector<1x1x128xf32>
    %34 = vector.broadcast %33 : vector<1x1x128xf32> to vector<4x8x128xf32>
    %35 = arith.addf %32, %34 : vector<4x8x128xf32>
    %36 = vector.extract_strided_slice %35 {offsets = [0, 0, 0], sizes = [1, 8, 128], strides = [1, 1, 1]} : vector<4x8x128xf32> to vector<1x8x128xf32>
    %37 = vector.shape_cast %36 : vector<1x8x128xf32> to vector<8x128xf32>
    %38 = arith.truncf %24 : vector<8x32xf32> to vector<8x32xbf16>
    %cst_23 = arith.constant dense<0.000000e+00> : vector<8x128xf32>
    %39 = tpu.matmul %38, %0, %cst_23 {dimension_numbers = #tpu.dot_dimension_numbers<[1], [0], [0], [1], [0, 0, 1, 1], [], []>} : vector<8x32xbf16>, vector<32x128xbf16>, vector<8x128xf32> -> vector<8x128xf32>
    %40 = arith.addf %37, %39 : vector<8x128xf32>
    %41 = vector.extract_strided_slice %40 {offsets = [0, 0], sizes = [8, 32], strides = [1, 1]} : vector<8x128xf32> to vector<8x32xf32>
    %42 = arith.negf %41 : vector<8x32xf32>
    %43 = math.exp %42 : vector<8x32xf32>
    %cst_24 = arith.constant 1.000000e+00 : f32
    %44 = vector.broadcast %cst_24 : f32 to vector<8x32xf32>
    %45 = arith.addf %44, %43 : vector<8x32xf32>
    %46 = arith.divf %44, %45 : vector<8x32xf32>
    %47 = vector.extract_strided_slice %40 {offsets = [0, 32], sizes = [8, 32], strides = [1, 1]} : vector<8x128xf32> to vector<8x32xf32>
    %48 = arith.negf %47 : vector<8x32xf32>
    %49 = math.exp %48 : vector<8x32xf32>
    %cst_25 = arith.constant 1.000000e+00 : f32
    %50 = vector.broadcast %cst_25 : f32 to vector<8x32xf32>
    %51 = arith.addf %50, %49 : vector<8x32xf32>
    %52 = arith.divf %50, %51 : vector<8x32xf32>
    %53 = vector.extract_strided_slice %40 {offsets = [0, 64], sizes = [8, 32], strides = [1, 1]} : vector<8x128xf32> to vector<8x32xf32>
    %54 = math.tanh %53 : vector<8x32xf32>
    %55 = vector.extract_strided_slice %40 {offsets = [0, 96], sizes = [8, 32], strides = [1, 1]} : vector<8x128xf32> to vector<8x32xf32>
    %56 = arith.negf %55 : vector<8x32xf32>
    %57 = math.exp %56 : vector<8x32xf32>
    %cst_26 = arith.constant 1.000000e+00 : f32
    %58 = vector.broadcast %cst_26 : f32 to vector<8x32xf32>
    %59 = arith.addf %58, %57 : vector<8x32xf32>
    %60 = arith.divf %58, %59 : vector<8x32xf32>
    %61 = arith.mulf %52, %26 : vector<8x32xf32>
    %62 = arith.mulf %46, %54 : vector<8x32xf32>
    %63 = arith.addf %61, %62 : vector<8x32xf32>
    %64 = math.tanh %63 : vector<8x32xf32>
    %65 = arith.mulf %60, %64 : vector<8x32xf32>
    %66 = tpu.concatenate %65, %25 in 1 : vector<8x32xf32>, vector<8x32xf32> -> vector<8x64xf32>
    %67 = arith.truncf %66 : vector<8x64xf32> to vector<8x64xbf16>
    %cst_27 = arith.constant dense<0.000000e+00> : vector<8x128xf32>
    %68 = tpu.matmul %67, %1, %cst_27 {dimension_numbers = #tpu.dot_dimension_numbers<[1], [0], [0], [1], [0, 0, 1, 1], [], []>} : vector<8x64xbf16>, vector<64x128xbf16>, vector<8x128xf32> -> vector<8x128xf32>
    %69 = vector.broadcast %13 : vector<1x128xf32> to vector<8x128xf32>
    %70 = arith.addf %68, %69 : vector<8x128xf32>
    %71 = vector.extract_strided_slice %70 {offsets = [0, 0], sizes = [8, 32], strides = [1, 1]} : vector<8x128xf32> to vector<8x32xf32>
    %72 = arith.negf %71 : vector<8x32xf32>
    %73 = math.exp %72 : vector<8x32xf32>
    %cst_28 = arith.constant 1.000000e+00 : f32
    %74 = vector.broadcast %cst_28 : f32 to vector<8x32xf32>
    %75 = arith.addf %74, %73 : vector<8x32xf32>
    %76 = arith.divf %74, %75 : vector<8x32xf32>
    %77 = vector.extract_strided_slice %70 {offsets = [0, 32], sizes = [8, 32], strides = [1, 1]} : vector<8x128xf32> to vector<8x32xf32>
    %78 = arith.negf %77 : vector<8x32xf32>
    %79 = math.exp %78 : vector<8x32xf32>
    %cst_29 = arith.constant 1.000000e+00 : f32
    %80 = vector.broadcast %cst_29 : f32 to vector<8x32xf32>
    %81 = arith.addf %80, %79 : vector<8x32xf32>
    %82 = arith.divf %80, %81 : vector<8x32xf32>
    %83 = vector.extract_strided_slice %70 {offsets = [0, 64], sizes = [8, 32], strides = [1, 1]} : vector<8x128xf32> to vector<8x32xf32>
    %84 = math.tanh %83 : vector<8x32xf32>
    %85 = vector.extract_strided_slice %70 {offsets = [0, 96], sizes = [8, 32], strides = [1, 1]} : vector<8x128xf32> to vector<8x32xf32>
    %86 = arith.negf %85 : vector<8x32xf32>
    %87 = math.exp %86 : vector<8x32xf32>
    %cst_30 = arith.constant 1.000000e+00 : f32
    %88 = vector.broadcast %cst_30 : f32 to vector<8x32xf32>
    %89 = arith.addf %88, %87 : vector<8x32xf32>
    %90 = arith.divf %88, %89 : vector<8x32xf32>
    %91 = arith.mulf %82, %27 : vector<8x32xf32>
    %92 = arith.mulf %76, %84 : vector<8x32xf32>
    %93 = arith.addf %91, %92 : vector<8x32xf32>
    %94 = math.tanh %93 : vector<8x32xf32>
    %95 = arith.mulf %90, %94 : vector<8x32xf32>
    %96 = vector.extract_strided_slice %35 {offsets = [1, 0, 0], sizes = [1, 8, 128], strides = [1, 1, 1]} : vector<4x8x128xf32> to vector<1x8x128xf32>
    %97 = vector.shape_cast %96 : vector<1x8x128xf32> to vector<8x128xf32>
    %98 = arith.truncf %65 : vector<8x32xf32> to vector<8x32xbf16>
    %cst_31 = arith.constant dense<0.000000e+00> : vector<8x128xf32>
    %99 = tpu.matmul %98, %0, %cst_31 {dimension_numbers = #tpu.dot_dimension_numbers<[1], [0], [0], [1], [0, 0, 1, 1], [], []>} : vector<8x32xbf16>, vector<32x128xbf16>, vector<8x128xf32> -> vector<8x128xf32>
    %100 = arith.addf %97, %99 : vector<8x128xf32>
    %101 = vector.extract_strided_slice %100 {offsets = [0, 0], sizes = [8, 32], strides = [1, 1]} : vector<8x128xf32> to vector<8x32xf32>
    %102 = arith.negf %101 : vector<8x32xf32>
    %103 = math.exp %102 : vector<8x32xf32>
    %cst_32 = arith.constant 1.000000e+00 : f32
    %104 = vector.broadcast %cst_32 : f32 to vector<8x32xf32>
    %105 = arith.addf %104, %103 : vector<8x32xf32>
    %106 = arith.divf %104, %105 : vector<8x32xf32>
    %107 = vector.extract_strided_slice %100 {offsets = [0, 32], sizes = [8, 32], strides = [1, 1]} : vector<8x128xf32> to vector<8x32xf32>
    %108 = arith.negf %107 : vector<8x32xf32>
    %109 = math.exp %108 : vector<8x32xf32>
    %cst_33 = arith.constant 1.000000e+00 : f32
    %110 = vector.broadcast %cst_33 : f32 to vector<8x32xf32>
    %111 = arith.addf %110, %109 : vector<8x32xf32>
    %112 = arith.divf %110, %111 : vector<8x32xf32>
    %113 = vector.extract_strided_slice %100 {offsets = [0, 64], sizes = [8, 32], strides = [1, 1]} : vector<8x128xf32> to vector<8x32xf32>
    %114 = math.tanh %113 : vector<8x32xf32>
    %115 = vector.extract_strided_slice %100 {offsets = [0, 96], sizes = [8, 32], strides = [1, 1]} : vector<8x128xf32> to vector<8x32xf32>
    %116 = arith.negf %115 : vector<8x32xf32>
    %117 = math.exp %116 : vector<8x32xf32>
    %cst_34 = arith.constant 1.000000e+00 : f32
    %118 = vector.broadcast %cst_34 : f32 to vector<8x32xf32>
    %119 = arith.addf %118, %117 : vector<8x32xf32>
    %120 = arith.divf %118, %119 : vector<8x32xf32>
    %121 = arith.mulf %112, %63 : vector<8x32xf32>
    %122 = arith.mulf %106, %114 : vector<8x32xf32>
    %123 = arith.addf %121, %122 : vector<8x32xf32>
    %124 = math.tanh %123 : vector<8x32xf32>
    %125 = arith.mulf %120, %124 : vector<8x32xf32>
    %126 = tpu.concatenate %125, %95 in 1 : vector<8x32xf32>, vector<8x32xf32> -> vector<8x64xf32>
    %127 = arith.truncf %126 : vector<8x64xf32> to vector<8x64xbf16>
    %cst_35 = arith.constant dense<0.000000e+00> : vector<8x128xf32>
    %128 = tpu.matmul %127, %1, %cst_35 {dimension_numbers = #tpu.dot_dimension_numbers<[1], [0], [0], [1], [0, 0, 1, 1], [], []>} : vector<8x64xbf16>, vector<64x128xbf16>, vector<8x128xf32> -> vector<8x128xf32>
    %129 = vector.broadcast %13 : vector<1x128xf32> to vector<8x128xf32>
    %130 = arith.addf %128, %129 : vector<8x128xf32>
    %131 = vector.extract_strided_slice %130 {offsets = [0, 0], sizes = [8, 32], strides = [1, 1]} : vector<8x128xf32> to vector<8x32xf32>
    %132 = arith.negf %131 : vector<8x32xf32>
    %133 = math.exp %132 : vector<8x32xf32>
    %cst_36 = arith.constant 1.000000e+00 : f32
    %134 = vector.broadcast %cst_36 : f32 to vector<8x32xf32>
    %135 = arith.addf %134, %133 : vector<8x32xf32>
    %136 = arith.divf %134, %135 : vector<8x32xf32>
    %137 = vector.extract_strided_slice %130 {offsets = [0, 32], sizes = [8, 32], strides = [1, 1]} : vector<8x128xf32> to vector<8x32xf32>
    %138 = arith.negf %137 : vector<8x32xf32>
    %139 = math.exp %138 : vector<8x32xf32>
    %cst_37 = arith.constant 1.000000e+00 : f32
    %140 = vector.broadcast %cst_37 : f32 to vector<8x32xf32>
    %141 = arith.addf %140, %139 : vector<8x32xf32>
    %142 = arith.divf %140, %141 : vector<8x32xf32>
    %143 = vector.extract_strided_slice %130 {offsets = [0, 64], sizes = [8, 32], strides = [1, 1]} : vector<8x128xf32> to vector<8x32xf32>
    %144 = math.tanh %143 : vector<8x32xf32>
    %145 = vector.extract_strided_slice %130 {offsets = [0, 96], sizes = [8, 32], strides = [1, 1]} : vector<8x128xf32> to vector<8x32xf32>
    %146 = arith.negf %145 : vector<8x32xf32>
    %147 = math.exp %146 : vector<8x32xf32>
    %cst_38 = arith.constant 1.000000e+00 : f32
    %148 = vector.broadcast %cst_38 : f32 to vector<8x32xf32>
    %149 = arith.addf %148, %147 : vector<8x32xf32>
    %150 = arith.divf %148, %149 : vector<8x32xf32>
    %151 = arith.mulf %142, %93 : vector<8x32xf32>
    %152 = arith.mulf %136, %144 : vector<8x32xf32>
    %153 = arith.addf %151, %152 : vector<8x32xf32>
    %154 = math.tanh %153 : vector<8x32xf32>
    %155 = arith.mulf %150, %154 : vector<8x32xf32>
    %156 = vector.extract_strided_slice %35 {offsets = [2, 0, 0], sizes = [1, 8, 128], strides = [1, 1, 1]} : vector<4x8x128xf32> to vector<1x8x128xf32>
    %157 = vector.shape_cast %156 : vector<1x8x128xf32> to vector<8x128xf32>
    %158 = arith.truncf %125 : vector<8x32xf32> to vector<8x32xbf16>
    %cst_39 = arith.constant dense<0.000000e+00> : vector<8x128xf32>
    %159 = tpu.matmul %158, %0, %cst_39 {dimension_numbers = #tpu.dot_dimension_numbers<[1], [0], [0], [1], [0, 0, 1, 1], [], []>} : vector<8x32xbf16>, vector<32x128xbf16>, vector<8x128xf32> -> vector<8x128xf32>
    %160 = arith.addf %157, %159 : vector<8x128xf32>
    %161 = vector.extract_strided_slice %160 {offsets = [0, 0], sizes = [8, 32], strides = [1, 1]} : vector<8x128xf32> to vector<8x32xf32>
    %162 = arith.negf %161 : vector<8x32xf32>
    %163 = math.exp %162 : vector<8x32xf32>
    %cst_40 = arith.constant 1.000000e+00 : f32
    %164 = vector.broadcast %cst_40 : f32 to vector<8x32xf32>
    %165 = arith.addf %164, %163 : vector<8x32xf32>
    %166 = arith.divf %164, %165 : vector<8x32xf32>
    %167 = vector.extract_strided_slice %160 {offsets = [0, 32], sizes = [8, 32], strides = [1, 1]} : vector<8x128xf32> to vector<8x32xf32>
    %168 = arith.negf %167 : vector<8x32xf32>
    %169 = math.exp %168 : vector<8x32xf32>
    %cst_41 = arith.constant 1.000000e+00 : f32
    %170 = vector.broadcast %cst_41 : f32 to vector<8x32xf32>
    %171 = arith.addf %170, %169 : vector<8x32xf32>
    %172 = arith.divf %170, %171 : vector<8x32xf32>
    %173 = vector.extract_strided_slice %160 {offsets = [0, 64], sizes = [8, 32], strides = [1, 1]} : vector<8x128xf32> to vector<8x32xf32>
    %174 = math.tanh %173 : vector<8x32xf32>
    %175 = vector.extract_strided_slice %160 {offsets = [0, 96], sizes = [8, 32], strides = [1, 1]} : vector<8x128xf32> to vector<8x32xf32>
    %176 = arith.negf %175 : vector<8x32xf32>
    %177 = math.exp %176 : vector<8x32xf32>
    %cst_42 = arith.constant 1.000000e+00 : f32
    %178 = vector.broadcast %cst_42 : f32 to vector<8x32xf32>
    %179 = arith.addf %178, %177 : vector<8x32xf32>
    %180 = arith.divf %178, %179 : vector<8x32xf32>
    %181 = arith.mulf %172, %123 : vector<8x32xf32>
    %182 = arith.mulf %166, %174 : vector<8x32xf32>
    %183 = arith.addf %181, %182 : vector<8x32xf32>
    %184 = math.tanh %183 : vector<8x32xf32>
    %185 = arith.mulf %180, %184 : vector<8x32xf32>
    %186 = tpu.concatenate %185, %155 in 1 : vector<8x32xf32>, vector<8x32xf32> -> vector<8x64xf32>
    %187 = arith.truncf %186 : vector<8x64xf32> to vector<8x64xbf16>
    %cst_43 = arith.constant dense<0.000000e+00> : vector<8x128xf32>
    %188 = tpu.matmul %187, %1, %cst_43 {dimension_numbers = #tpu.dot_dimension_numbers<[1], [0], [0], [1], [0, 0, 1, 1], [], []>} : vector<8x64xbf16>, vector<64x128xbf16>, vector<8x128xf32> -> vector<8x128xf32>
    %189 = vector.broadcast %13 : vector<1x128xf32> to vector<8x128xf32>
    %190 = arith.addf %188, %189 : vector<8x128xf32>
    %191 = vector.extract_strided_slice %190 {offsets = [0, 0], sizes = [8, 32], strides = [1, 1]} : vector<8x128xf32> to vector<8x32xf32>
    %192 = arith.negf %191 : vector<8x32xf32>
    %193 = math.exp %192 : vector<8x32xf32>
    %cst_44 = arith.constant 1.000000e+00 : f32
    %194 = vector.broadcast %cst_44 : f32 to vector<8x32xf32>
    %195 = arith.addf %194, %193 : vector<8x32xf32>
    %196 = arith.divf %194, %195 : vector<8x32xf32>
    %197 = vector.extract_strided_slice %190 {offsets = [0, 32], sizes = [8, 32], strides = [1, 1]} : vector<8x128xf32> to vector<8x32xf32>
    %198 = arith.negf %197 : vector<8x32xf32>
    %199 = math.exp %198 : vector<8x32xf32>
    %cst_45 = arith.constant 1.000000e+00 : f32
    %200 = vector.broadcast %cst_45 : f32 to vector<8x32xf32>
    %201 = arith.addf %200, %199 : vector<8x32xf32>
    %202 = arith.divf %200, %201 : vector<8x32xf32>
    %203 = vector.extract_strided_slice %190 {offsets = [0, 64], sizes = [8, 32], strides = [1, 1]} : vector<8x128xf32> to vector<8x32xf32>
    %204 = math.tanh %203 : vector<8x32xf32>
    %205 = vector.extract_strided_slice %190 {offsets = [0, 96], sizes = [8, 32], strides = [1, 1]} : vector<8x128xf32> to vector<8x32xf32>
    %206 = arith.negf %205 : vector<8x32xf32>
    %207 = math.exp %206 : vector<8x32xf32>
    %cst_46 = arith.constant 1.000000e+00 : f32
    %208 = vector.broadcast %cst_46 : f32 to vector<8x32xf32>
    %209 = arith.addf %208, %207 : vector<8x32xf32>
    %210 = arith.divf %208, %209 : vector<8x32xf32>
    %211 = arith.mulf %202, %153 : vector<8x32xf32>
    %212 = arith.mulf %196, %204 : vector<8x32xf32>
    %213 = arith.addf %211, %212 : vector<8x32xf32>
    %214 = math.tanh %213 : vector<8x32xf32>
    %215 = arith.mulf %210, %214 : vector<8x32xf32>
    %216 = vector.extract_strided_slice %35 {offsets = [3, 0, 0], sizes = [1, 8, 128], strides = [1, 1, 1]} : vector<4x8x128xf32> to vector<1x8x128xf32>
    %217 = vector.shape_cast %216 : vector<1x8x128xf32> to vector<8x128xf32>
    %218 = arith.truncf %185 : vector<8x32xf32> to vector<8x32xbf16>
    %cst_47 = arith.constant dense<0.000000e+00> : vector<8x128xf32>
    %219 = tpu.matmul %218, %0, %cst_47 {dimension_numbers = #tpu.dot_dimension_numbers<[1], [0], [0], [1], [0, 0, 1, 1], [], []>} : vector<8x32xbf16>, vector<32x128xbf16>, vector<8x128xf32> -> vector<8x128xf32>
    %220 = arith.addf %217, %219 : vector<8x128xf32>
    %221 = vector.extract_strided_slice %220 {offsets = [0, 0], sizes = [8, 32], strides = [1, 1]} : vector<8x128xf32> to vector<8x32xf32>
    %222 = arith.negf %221 : vector<8x32xf32>
    %223 = math.exp %222 : vector<8x32xf32>
    %cst_48 = arith.constant 1.000000e+00 : f32
    %224 = vector.broadcast %cst_48 : f32 to vector<8x32xf32>
    %225 = arith.addf %224, %223 : vector<8x32xf32>
    %226 = arith.divf %224, %225 : vector<8x32xf32>
    %227 = vector.extract_strided_slice %220 {offsets = [0, 32], sizes = [8, 32], strides = [1, 1]} : vector<8x128xf32> to vector<8x32xf32>
    %228 = arith.negf %227 : vector<8x32xf32>
    %229 = math.exp %228 : vector<8x32xf32>
    %cst_49 = arith.constant 1.000000e+00 : f32
    %230 = vector.broadcast %cst_49 : f32 to vector<8x32xf32>
    %231 = arith.addf %230, %229 : vector<8x32xf32>
    %232 = arith.divf %230, %231 : vector<8x32xf32>
    %233 = vector.extract_strided_slice %220 {offsets = [0, 64], sizes = [8, 32], strides = [1, 1]} : vector<8x128xf32> to vector<8x32xf32>
    %234 = math.tanh %233 : vector<8x32xf32>
    %235 = vector.extract_strided_slice %220 {offsets = [0, 96], sizes = [8, 32], strides = [1, 1]} : vector<8x128xf32> to vector<8x32xf32>
    %236 = arith.negf %235 : vector<8x32xf32>
    %237 = math.exp %236 : vector<8x32xf32>
    %cst_50 = arith.constant 1.000000e+00 : f32
    %238 = vector.broadcast %cst_50 : f32 to vector<8x32xf32>
    %239 = arith.addf %238, %237 : vector<8x32xf32>
    %240 = arith.divf %238, %239 : vector<8x32xf32>
    %241 = arith.mulf %232, %183 : vector<8x32xf32>
    %242 = arith.mulf %226, %234 : vector<8x32xf32>
    %243 = arith.addf %241, %242 : vector<8x32xf32>
    %244 = math.tanh %243 : vector<8x32xf32>
    %245 = arith.mulf %240, %244 : vector<8x32xf32>
    %246 = tpu.concatenate %245, %215 in 1 : vector<8x32xf32>, vector<8x32xf32> -> vector<8x64xf32>
    %247 = arith.truncf %246 : vector<8x64xf32> to vector<8x64xbf16>
    %cst_51 = arith.constant dense<0.000000e+00> : vector<8x128xf32>
    %248 = tpu.matmul %247, %1, %cst_51 {dimension_numbers = #tpu.dot_dimension_numbers<[1], [0], [0], [1], [0, 0, 1, 1], [], []>} : vector<8x64xbf16>, vector<64x128xbf16>, vector<8x128xf32> -> vector<8x128xf32>
    %249 = vector.broadcast %13 : vector<1x128xf32> to vector<8x128xf32>
    %250 = arith.addf %248, %249 : vector<8x128xf32>
    %251 = vector.extract_strided_slice %250 {offsets = [0, 0], sizes = [8, 32], strides = [1, 1]} : vector<8x128xf32> to vector<8x32xf32>
    %252 = arith.negf %251 : vector<8x32xf32>
    %253 = math.exp %252 : vector<8x32xf32>
    %cst_52 = arith.constant 1.000000e+00 : f32
    %254 = vector.broadcast %cst_52 : f32 to vector<8x32xf32>
    %255 = arith.addf %254, %253 : vector<8x32xf32>
    %256 = arith.divf %254, %255 : vector<8x32xf32>
    %257 = vector.extract_strided_slice %250 {offsets = [0, 32], sizes = [8, 32], strides = [1, 1]} : vector<8x128xf32> to vector<8x32xf32>
    %258 = arith.negf %257 : vector<8x32xf32>
    %259 = math.exp %258 : vector<8x32xf32>
    %cst_53 = arith.constant 1.000000e+00 : f32
    %260 = vector.broadcast %cst_53 : f32 to vector<8x32xf32>
    %261 = arith.addf %260, %259 : vector<8x32xf32>
    %262 = arith.divf %260, %261 : vector<8x32xf32>
    %263 = vector.extract_strided_slice %250 {offsets = [0, 64], sizes = [8, 32], strides = [1, 1]} : vector<8x128xf32> to vector<8x32xf32>
    %264 = math.tanh %263 : vector<8x32xf32>
    %265 = vector.extract_strided_slice %250 {offsets = [0, 96], sizes = [8, 32], strides = [1, 1]} : vector<8x128xf32> to vector<8x32xf32>
    %266 = arith.negf %265 : vector<8x32xf32>
    %267 = math.exp %266 : vector<8x32xf32>
    %cst_54 = arith.constant 1.000000e+00 : f32
    %268 = vector.broadcast %cst_54 : f32 to vector<8x32xf32>
    %269 = arith.addf %268, %267 : vector<8x32xf32>
    %270 = arith.divf %268, %269 : vector<8x32xf32>
    %271 = arith.mulf %262, %213 : vector<8x32xf32>
    %272 = arith.mulf %256, %264 : vector<8x32xf32>
    %273 = arith.addf %271, %272 : vector<8x32xf32>
    %274 = math.tanh %273 : vector<8x32xf32>
    %275 = arith.mulf %270, %274 : vector<8x32xf32>
    %276 = tpu.concatenate %245, %275, %243, %273 in 1 : vector<8x32xf32>, vector<8x32xf32>, vector<8x32xf32>, vector<8x32xf32> -> vector<8x128xf32>
    %c0_55 = arith.constant 0 : index
    %c0_56 = arith.constant 0 : index
    %277 = vector.load %arg10[%c0_55, %c0_56] : memref<16x128xf32, #tpu.memory_space<vmem>>, vector<8x128xf32>
    tpu.vector_store %arg10[%c0_55, %c0_56], %276 {strides = array<i32>} : memref<16x128xf32, #tpu.memory_space<vmem>>, vector<8x128xf32>,
    %c0_57 = arith.constant 0 : index
    %c0_58 = arith.constant 0 : index
    %278 = vector.load %arg1[%c0_57, %c0_58] : memref<64x64xf32, #tpu.memory_space<vmem>>, vector<64x64xf32>
    %279 = arith.truncf %278 : vector<64x64xf32> to vector<64x64xbf16>
    %cst_59 = arith.constant dense<0.000000e+00> : vector<64x128xf32>
    %280 = tpu.matmul %279, %2, %cst_59 {dimension_numbers = #tpu.dot_dimension_numbers<[1], [0], [0], [1], [0, 0, 1, 1], [], []>} : vector<64x64xbf16>, vector<64x128xbf16>, vector<64x128xf32> -> vector<64x128xf32>
    %281 = vector.broadcast %15 : vector<1x128xf32> to vector<64x128xf32>
    %282 = arith.addf %280, %281 : vector<64x128xf32>
    %283 = vector.shape_cast %282 : vector<64x128xf32> to vector<8x8x128xf32>
    %284 = vector.shape_cast %278 : vector<64x64xf32> to vector<8x8x64xf32>
    %c0_60 = arith.constant 0 : index
    %c0_61 = arith.constant 0 : index
    %c0_62 = arith.constant 0 : index
    %285 = vector.load %arg5[%c0_60, %c0_61, %c0_62] : memref<8x8x1xf32, #tpu.memory_space<vmem>>, vector<8x8x1xf32>
    %c0_63 = arith.constant 0 : index
    %c0_64 = arith.constant 0 : index
    %c0_65 = arith.constant 0 : index
    %286 = vector.load %arg3[%c0_63, %c0_64, %c0_65] : memref<8x8x1xi32, #tpu.memory_space<vmem>>, vector<8x8x1xi32>
    %287 = tpu.iota {dimensions = array<i32: 2>} : vector<8x8x128xi32>
    %288 = vector.broadcast %286 : vector<8x8x1xi32> to vector<8x8x128xi32>
    %289 = arith.cmpi eq, %287, %288 : vector<8x8x128xi32>
    %c1_i32 = arith.constant 1 : i32
    %290 = vector.broadcast %c1_i32 : i32 to vector<8x8x1xi32>
    %291 = arith.cmpi ne, %286, %290 : vector<8x8x1xi32>
    %292 = vector.broadcast %291 : vector<8x8x1xi1> to vector<8x8x128xi1>
    %293 = arith.andi %289, %292 : vector<8x8x128xi1>
    %cst_66 = arith.constant 1.000000e+00 : f32
    %cst_67 = arith.constant 0.000000e+00 : f32
    %294 = vector.broadcast %cst_66 : f32 to vector<8x8x128xf32>
    %295 = vector.broadcast %cst_67 : f32 to vector<8x8x128xf32>
    %296 = arith.select %293, %294, %295 : vector<8x8x128xi1>, vector<8x8x128xf32>
    %c0_68 = arith.constant 0 : index
    %c0_69 = arith.constant 0 : index
    %c0_70 = arith.constant 0 : index
    %297 = vector.load %arg11[%c0_68, %c0_69, %c0_70] : memref<8x8x128xf32, #tpu.memory_space<vmem>>, vector<8x8x128xf32>
    tpu.vector_store %arg11[%c0_68, %c0_69, %c0_70], %296 {strides = array<i32>} : memref<8x8x128xf32, #tpu.memory_space<vmem>>, vector<8x8x128xf32>,
    %c0_71 = arith.constant 0 : index
    %298 = memref.load %arg8[%c0_71] : memref<2xf32, #tpu.memory_space<smem>>
    %c1_72 = arith.constant 1 : index
    %299 = memref.load %arg8[%c1_72] : memref<2xf32, #tpu.memory_space<smem>>
    %300 = vector.broadcast %298 : f32 to vector<4x8x1xf32>
    %301 = arith.mulf %28, %300 : vector<4x8x1xf32>
    %302 = vector.broadcast %299 : f32 to vector<4x8x1xf32>
    %303 = arith.addf %301, %302 : vector<4x8x1xf32>
    %cst_73 = arith.constant 0.000000e+00 : f32
    %304 = vector.broadcast %cst_73 : f32 to vector<8x8x1xf32>
    %305 = arith.truncf %95 : vector<8x32xf32> to vector<8x32xbf16>
    %cst_74 = arith.constant dense<0.000000e+00> : vector<8x128xf32>
    %306 = tpu.matmul %305, %3, %cst_74 {dimension_numbers = #tpu.dot_dimension_numbers<[1], [0], [0], [1], [0, 0, 1, 1], [], []>} : vector<8x32xbf16>, vector<32x128xbf16>, vector<8x128xf32> -> vector<8x128xf32>
    %307 = vector.shape_cast %306 : vector<8x128xf32> to vector<1x8x128xf32>
    %308 = vector.broadcast %307 : vector<1x8x128xf32> to vector<8x8x128xf32>
    %309 = arith.addf %283, %308 : vector<8x8x128xf32>
    %310 = vector.shape_cast %14 : vector<1x128xf32> to vector<1x1x128xf32>
    %311 = vector.broadcast %304 : vector<8x8x1xf32> to vector<8x8x128xf32>
    %312 = vector.broadcast %310 : vector<1x1x128xf32> to vector<8x8x128xf32>
    %313 = arith.mulf %311, %312 : vector<8x8x128xf32>
    %314 = arith.addf %309, %313 : vector<8x8x128xf32>
    %315 = math.tanh %314 : vector<8x8x128xf32>
    %316 = vector.shape_cast %315 : vector<8x8x128xf32> to vector<64x128xf32>
    %317 = arith.truncf %316 : vector<64x128xf32> to vector<64x128xbf16>
    %cst_75 = arith.constant dense<0.000000e+00> : vector<64x1xf32>
    %318 = tpu.matmul %317, %8, %cst_75 {dimension_numbers = #tpu.dot_dimension_numbers<[1], [0], [0], [1], [0, 0, 1, 1], [], []>} : vector<64x128xbf16>, vector<128x1xbf16>, vector<64x1xf32> -> vector<64x1xf32>
    %319 = vector.shape_cast %318 : vector<64x1xf32> to vector<8x8x1xf32>
    %320 = arith.addf %319, %285 : vector<8x8x1xf32>
    %cst_76 = arith.constant dense<0xFF800000> : vector<8x1xf32>
    %321 = vector.multi_reduction <maximumf>, %320, %cst_76 [0] : vector<8x8x1xf32> to vector<8x1xf32>
    %322 = vector.shape_cast %321 : vector<8x1xf32> to vector<1x8x1xf32>
    %323 = vector.broadcast %322 : vector<1x8x1xf32> to vector<8x8x1xf32>
    %324 = arith.subf %320, %323 : vector<8x8x1xf32>
    %325 = math.exp %324 : vector<8x8x1xf32>
    %cst_77 = arith.constant dense<0.000000e+00> : vector<8x1xf32>
    %326 = vector.multi_reduction <add>, %325, %cst_77 [0] : vector<8x8x1xf32> to vector<8x1xf32>
    %327 = vector.shape_cast %326 : vector<8x1xf32> to vector<1x8x1xf32>
    %328 = vector.broadcast %327 : vector<1x8x1xf32> to vector<8x8x1xf32>
    %329 = arith.divf %325, %328 : vector<8x8x1xf32>
    %330 = arith.minimumf %329, %304 : vector<8x8x1xf32>
    %cst_78 = arith.constant dense<0.000000e+00> : vector<8x1xf32>
    %331 = vector.multi_reduction <add>, %330, %cst_78 [0] : vector<8x8x1xf32> to vector<8x1xf32>
    %332 = arith.addf %304, %329 : vector<8x8x1xf32>
    %333 = vector.broadcast %329 : vector<8x8x1xf32> to vector<8x8x64xf32>
    %334 = arith.mulf %333, %284 : vector<8x8x64xf32>
    %cst_79 = arith.constant dense<0.000000e+00> : vector<8x64xf32>
    %335 = vector.multi_reduction <add>, %334, %cst_79 [0] : vector<8x8x64xf32> to vector<8x64xf32>
    %336 = tpu.concatenate %95, %335 in 1 : vector<8x32xf32>, vector<8x64xf32> -> vector<8x96xf32>
    %337 = arith.truncf %336 : vector<8x96xf32> to vector<8x96xbf16>
    %cst_80 = arith.constant dense<0.000000e+00> : vector<8x1xf32>
    %338 = tpu.matmul %337, %10, %cst_80 {dimension_numbers = #tpu.dot_dimension_numbers<[1], [0], [0], [1], [0, 0, 1, 1], [], []>} : vector<8x96xbf16>, vector<96x1xbf16>, vector<8x1xf32> -> vector<8x1xf32>
    %339 = vector.extract_strided_slice %303 {offsets = [0, 0, 0], sizes = [1, 8, 1], strides = [1, 1, 1]} : vector<4x8x1xf32> to vector<1x8x1xf32>
    %340 = vector.shape_cast %339 : vector<1x8x1xf32> to vector<8x1xf32>
    %341 = arith.addf %338, %340 : vector<8x1xf32>
    %342 = arith.negf %341 : vector<8x1xf32>
    %343 = math.exp %342 : vector<8x1xf32>
    %cst_81 = arith.constant 1.000000e+00 : f32
    %344 = vector.broadcast %cst_81 : f32 to vector<8x1xf32>
    %345 = arith.addf %344, %343 : vector<8x1xf32>
    %346 = arith.divf %344, %345 : vector<8x1xf32>
    %cst_82 = arith.constant dense<0.000000e+00> : vector<8x128xf32>
    %347 = tpu.matmul %337, %4, %cst_82 {dimension_numbers = #tpu.dot_dimension_numbers<[1], [0], [0], [1], [0, 0, 1, 1], [], []>} : vector<8x96xbf16>, vector<96x128xbf16>, vector<8x128xf32> -> vector<8x128xf32>
    %348 = vector.broadcast %16 : vector<1x128xf32> to vector<8x128xf32>
    %349 = arith.addf %347, %348 : vector<8x128xf32>
    %350 = arith.truncf %349 : vector<8x128xf32> to vector<8x128xbf16>
    %cst_83 = arith.constant dense<0.000000e+00> : vector<8x128xf32>
    %351 = tpu.matmul %350, %5, %cst_83 {dimension_numbers = #tpu.dot_dimension_numbers<[1], [0], [0], [1], [0, 0, 1, 1], [], []>} : vector<8x128xbf16>, vector<128x128xbf16>, vector<8x128xf32> -> vector<8x128xf32>
    %352 = vector.broadcast %17 : vector<1x128xf32> to vector<8x128xf32>
    %353 = arith.addf %351, %352 : vector<8x128xf32>
    %cst_84 = arith.constant dense<0xFF800000> : vector<8xf32>
    %354 = vector.multi_reduction <maximumf>, %353, %cst_84 [1] : vector<8x128xf32> to vector<8xf32>
    %355 = vector.shape_cast %354 : vector<8xf32> to vector<8x1xf32>
    %356 = vector.broadcast %355 : vector<8x1xf32> to vector<8x128xf32>
    %357 = arith.subf %353, %356 : vector<8x128xf32>
    %358 = math.exp %357 : vector<8x128xf32>
    %cst_85 = arith.constant dense<0.000000e+00> : vector<8xf32>
    %359 = vector.multi_reduction <add>, %358, %cst_85 [1] : vector<8x128xf32> to vector<8xf32>
    %360 = vector.shape_cast %359 : vector<8xf32> to vector<8x1xf32>
    %361 = vector.broadcast %360 : vector<8x1xf32> to vector<8x128xf32>
    %362 = arith.divf %358, %361 : vector<8x128xf32>
    %c0_86 = arith.constant 0 : index
    %c0_87 = arith.constant 0 : index
    %c0_88 = arith.constant 0 : index
    %363 = vector.load %arg11[%c0_86, %c0_87, %c0_88] : memref<8x8x128xf32, #tpu.memory_space<vmem>>, vector<8x8x128xf32>
    %364 = vector.broadcast %329 : vector<8x8x1xf32> to vector<8x8x128xf32>
    %365 = arith.mulf %363, %364 : vector<8x8x128xf32>
    %cst_89 = arith.constant dense<0.000000e+00> : vector<8x128xf32>
    %366 = vector.multi_reduction <add>, %365, %cst_89 [0] : vector<8x8x128xf32> to vector<8x128xf32>
    %367 = vector.broadcast %346 : vector<8x1xf32> to vector<8x128xf32>
    %368 = arith.mulf %362, %367 : vector<8x128xf32>
    %cst_90 = arith.constant 1.000000e+00 : f32
    %369 = vector.broadcast %cst_90 : f32 to vector<8x1xf32>
    %370 = arith.subf %369, %346 : vector<8x1xf32>
    %371 = vector.broadcast %370 : vector<8x1xf32> to vector<8x128xf32>
    %372 = arith.mulf %366, %371 : vector<8x128xf32>
    %373 = arith.addf %368, %372 : vector<8x128xf32>
    %c0_91 = arith.constant 0 : index
    %c0_92 = arith.constant 0 : index
    %c0_93 = arith.constant 0 : index
    %374 = vector.load %arg9[%c0_91, %c0_92, %c0_93] : memref<4x8x128xf32, #tpu.memory_space<vmem>>, vector<1x8x128xf32>
    %375 = vector.shape_cast %374 : vector<1x8x128xf32> to vector<8x128xf32>
    %376 = vector.shape_cast %373 : vector<8x128xf32> to vector<1x8x128xf32>
    tpu.vector_store %arg9[%c0_91, %c0_92, %c0_93], %376 {strides = array<i32>} : memref<4x8x128xf32, #tpu.memory_space<vmem>>, vector<1x8x128xf32>,
    %377 = arith.truncf %155 : vector<8x32xf32> to vector<8x32xbf16>
    %cst_94 = arith.constant dense<0.000000e+00> : vector<8x128xf32>
    %378 = tpu.matmul %377, %3, %cst_94 {dimension_numbers = #tpu.dot_dimension_numbers<[1], [0], [0], [1], [0, 0, 1, 1], [], []>} : vector<8x32xbf16>, vector<32x128xbf16>, vector<8x128xf32> -> vector<8x128xf32>
    %379 = vector.shape_cast %378 : vector<8x128xf32> to vector<1x8x128xf32>
    %380 = vector.broadcast %379 : vector<1x8x128xf32> to vector<8x8x128xf32>
    %381 = arith.addf %283, %380 : vector<8x8x128xf32>
    %382 = vector.shape_cast %14 : vector<1x128xf32> to vector<1x1x128xf32>
    %383 = vector.broadcast %332 : vector<8x8x1xf32> to vector<8x8x128xf32>
    %384 = vector.broadcast %382 : vector<1x1x128xf32> to vector<8x8x128xf32>
    %385 = arith.mulf %383, %384 : vector<8x8x128xf32>
    %386 = arith.addf %381, %385 : vector<8x8x128xf32>
    %387 = math.tanh %386 : vector<8x8x128xf32>
    %388 = vector.shape_cast %387 : vector<8x8x128xf32> to vector<64x128xf32>
    %389 = arith.truncf %388 : vector<64x128xf32> to vector<64x128xbf16>
    %cst_95 = arith.constant dense<0.000000e+00> : vector<64x1xf32>
    %390 = tpu.matmul %389, %8, %cst_95 {dimension_numbers = #tpu.dot_dimension_numbers<[1], [0], [0], [1], [0, 0, 1, 1], [], []>} : vector<64x128xbf16>, vector<128x1xbf16>, vector<64x1xf32> -> vector<64x1xf32>
    %391 = vector.shape_cast %390 : vector<64x1xf32> to vector<8x8x1xf32>
    %392 = arith.addf %391, %285 : vector<8x8x1xf32>
    %cst_96 = arith.constant dense<0xFF800000> : vector<8x1xf32>
    %393 = vector.multi_reduction <maximumf>, %392, %cst_96 [0] : vector<8x8x1xf32> to vector<8x1xf32>
    %394 = vector.shape_cast %393 : vector<8x1xf32> to vector<1x8x1xf32>
    %395 = vector.broadcast %394 : vector<1x8x1xf32> to vector<8x8x1xf32>
    %396 = arith.subf %392, %395 : vector<8x8x1xf32>
    %397 = math.exp %396 : vector<8x8x1xf32>
    %cst_97 = arith.constant dense<0.000000e+00> : vector<8x1xf32>
    %398 = vector.multi_reduction <add>, %397, %cst_97 [0] : vector<8x8x1xf32> to vector<8x1xf32>
    %399 = vector.shape_cast %398 : vector<8x1xf32> to vector<1x8x1xf32>
    %400 = vector.broadcast %399 : vector<1x8x1xf32> to vector<8x8x1xf32>
    %401 = arith.divf %397, %400 : vector<8x8x1xf32>
    %402 = arith.minimumf %401, %332 : vector<8x8x1xf32>
    %cst_98 = arith.constant dense<0.000000e+00> : vector<8x1xf32>
    %403 = vector.multi_reduction <add>, %402, %cst_98 [0] : vector<8x8x1xf32> to vector<8x1xf32>
    %404 = arith.addf %332, %401 : vector<8x8x1xf32>
    %405 = vector.broadcast %401 : vector<8x8x1xf32> to vector<8x8x64xf32>
    %406 = arith.mulf %405, %284 : vector<8x8x64xf32>
    %cst_99 = arith.constant dense<0.000000e+00> : vector<8x64xf32>
    %407 = vector.multi_reduction <add>, %406, %cst_99 [0] : vector<8x8x64xf32> to vector<8x64xf32>
    %408 = tpu.concatenate %155, %407 in 1 : vector<8x32xf32>, vector<8x64xf32> -> vector<8x96xf32>
    %409 = arith.truncf %408 : vector<8x96xf32> to vector<8x96xbf16>
    %cst_100 = arith.constant dense<0.000000e+00> : vector<8x1xf32>
    %410 = tpu.matmul %409, %10, %cst_100 {dimension_numbers = #tpu.dot_dimension_numbers<[1], [0], [0], [1], [0, 0, 1, 1], [], []>} : vector<8x96xbf16>, vector<96x1xbf16>, vector<8x1xf32> -> vector<8x1xf32>
    %411 = vector.extract_strided_slice %303 {offsets = [1, 0, 0], sizes = [1, 8, 1], strides = [1, 1, 1]} : vector<4x8x1xf32> to vector<1x8x1xf32>
    %412 = vector.shape_cast %411 : vector<1x8x1xf32> to vector<8x1xf32>
    %413 = arith.addf %410, %412 : vector<8x1xf32>
    %414 = arith.negf %413 : vector<8x1xf32>
    %415 = math.exp %414 : vector<8x1xf32>
    %cst_101 = arith.constant 1.000000e+00 : f32
    %416 = vector.broadcast %cst_101 : f32 to vector<8x1xf32>
    %417 = arith.addf %416, %415 : vector<8x1xf32>
    %418 = arith.divf %416, %417 : vector<8x1xf32>
    %cst_102 = arith.constant dense<0.000000e+00> : vector<8x128xf32>
    %419 = tpu.matmul %409, %4, %cst_102 {dimension_numbers = #tpu.dot_dimension_numbers<[1], [0], [0], [1], [0, 0, 1, 1], [], []>} : vector<8x96xbf16>, vector<96x128xbf16>, vector<8x128xf32> -> vector<8x128xf32>
    %420 = vector.broadcast %16 : vector<1x128xf32> to vector<8x128xf32>
    %421 = arith.addf %419, %420 : vector<8x128xf32>
    %422 = arith.truncf %421 : vector<8x128xf32> to vector<8x128xbf16>
    %cst_103 = arith.constant dense<0.000000e+00> : vector<8x128xf32>
    %423 = tpu.matmul %422, %5, %cst_103 {dimension_numbers = #tpu.dot_dimension_numbers<[1], [0], [0], [1], [0, 0, 1, 1], [], []>} : vector<8x128xbf16>, vector<128x128xbf16>, vector<8x128xf32> -> vector<8x128xf32>
    %424 = vector.broadcast %17 : vector<1x128xf32> to vector<8x128xf32>
    %425 = arith.addf %423, %424 : vector<8x128xf32>
    %cst_104 = arith.constant dense<0xFF800000> : vector<8xf32>
    %426 = vector.multi_reduction <maximumf>, %425, %cst_104 [1] : vector<8x128xf32> to vector<8xf32>
    %427 = vector.shape_cast %426 : vector<8xf32> to vector<8x1xf32>
    %428 = vector.broadcast %427 : vector<8x1xf32> to vector<8x128xf32>
    %429 = arith.subf %425, %428 : vector<8x128xf32>
    %430 = math.exp %429 : vector<8x128xf32>
    %cst_105 = arith.constant dense<0.000000e+00> : vector<8xf32>
    %431 = vector.multi_reduction <add>, %430, %cst_105 [1] : vector<8x128xf32> to vector<8xf32>
    %432 = vector.shape_cast %431 : vector<8xf32> to vector<8x1xf32>
    %433 = vector.broadcast %432 : vector<8x1xf32> to vector<8x128xf32>
    %434 = arith.divf %430, %433 : vector<8x128xf32>
    %c0_106 = arith.constant 0 : index
    %c0_107 = arith.constant 0 : index
    %c0_108 = arith.constant 0 : index
    %435 = vector.load %arg11[%c0_106, %c0_107, %c0_108] : memref<8x8x128xf32, #tpu.memory_space<vmem>>, vector<8x8x128xf32>
    %436 = vector.broadcast %401 : vector<8x8x1xf32> to vector<8x8x128xf32>
    %437 = arith.mulf %435, %436 : vector<8x8x128xf32>
    %cst_109 = arith.constant dense<0.000000e+00> : vector<8x128xf32>
    %438 = vector.multi_reduction <add>, %437, %cst_109 [0] : vector<8x8x128xf32> to vector<8x128xf32>
    %439 = vector.broadcast %418 : vector<8x1xf32> to vector<8x128xf32>
    %440 = arith.mulf %434, %439 : vector<8x128xf32>
    %cst_110 = arith.constant 1.000000e+00 : f32
    %441 = vector.broadcast %cst_110 : f32 to vector<8x1xf32>
    %442 = arith.subf %441, %418 : vector<8x1xf32>
    %443 = vector.broadcast %442 : vector<8x1xf32> to vector<8x128xf32>
    %444 = arith.mulf %438, %443 : vector<8x128xf32>
    %445 = arith.addf %440, %444 : vector<8x128xf32>
    %c1_111 = arith.constant 1 : index
    %c0_112 = arith.constant 0 : index
    %c0_113 = arith.constant 0 : index
    %446 = vector.load %arg9[%c1_111, %c0_112, %c0_113] : memref<4x8x128xf32, #tpu.memory_space<vmem>>, vector<1x8x128xf32>
    %447 = vector.shape_cast %446 : vector<1x8x128xf32> to vector<8x128xf32>
    %448 = vector.shape_cast %445 : vector<8x128xf32> to vector<1x8x128xf32>
    tpu.vector_store %arg9[%c1_111, %c0_112, %c0_113], %448 {strides = array<i32>} : memref<4x8x128xf32, #tpu.memory_space<vmem>>, vector<1x8x128xf32>,
    %449 = arith.truncf %215 : vector<8x32xf32> to vector<8x32xbf16>
    %cst_114 = arith.constant dense<0.000000e+00> : vector<8x128xf32>
    %450 = tpu.matmul %449, %3, %cst_114 {dimension_numbers = #tpu.dot_dimension_numbers<[1], [0], [0], [1], [0, 0, 1, 1], [], []>} : vector<8x32xbf16>, vector<32x128xbf16>, vector<8x128xf32> -> vector<8x128xf32>
    %451 = vector.shape_cast %450 : vector<8x128xf32> to vector<1x8x128xf32>
    %452 = vector.broadcast %451 : vector<1x8x128xf32> to vector<8x8x128xf32>
    %453 = arith.addf %283, %452 : vector<8x8x128xf32>
    %454 = vector.shape_cast %14 : vector<1x128xf32> to vector<1x1x128xf32>
    %455 = vector.broadcast %404 : vector<8x8x1xf32> to vector<8x8x128xf32>
    %456 = vector.broadcast %454 : vector<1x1x128xf32> to vector<8x8x128xf32>
    %457 = arith.mulf %455, %456 : vector<8x8x128xf32>
    %458 = arith.addf %453, %457 : vector<8x8x128xf32>
    %459 = math.tanh %458 : vector<8x8x128xf32>
    %460 = vector.shape_cast %459 : vector<8x8x128xf32> to vector<64x128xf32>
    %461 = arith.truncf %460 : vector<64x128xf32> to vector<64x128xbf16>
    %cst_115 = arith.constant dense<0.000000e+00> : vector<64x1xf32>
    %462 = tpu.matmul %461, %8, %cst_115 {dimension_numbers = #tpu.dot_dimension_numbers<[1], [0], [0], [1], [0, 0, 1, 1], [], []>} : vector<64x128xbf16>, vector<128x1xbf16>, vector<64x1xf32> -> vector<64x1xf32>
    %463 = vector.shape_cast %462 : vector<64x1xf32> to vector<8x8x1xf32>
    %464 = arith.addf %463, %285 : vector<8x8x1xf32>
    %cst_116 = arith.constant dense<0xFF800000> : vector<8x1xf32>
    %465 = vector.multi_reduction <maximumf>, %464, %cst_116 [0] : vector<8x8x1xf32> to vector<8x1xf32>
    %466 = vector.shape_cast %465 : vector<8x1xf32> to vector<1x8x1xf32>
    %467 = vector.broadcast %466 : vector<1x8x1xf32> to vector<8x8x1xf32>
    %468 = arith.subf %464, %467 : vector<8x8x1xf32>
    %469 = math.exp %468 : vector<8x8x1xf32>
    %cst_117 = arith.constant dense<0.000000e+00> : vector<8x1xf32>
    %470 = vector.multi_reduction <add>, %469, %cst_117 [0] : vector<8x8x1xf32> to vector<8x1xf32>
    %471 = vector.shape_cast %470 : vector<8x1xf32> to vector<1x8x1xf32>
    %472 = vector.broadcast %471 : vector<1x8x1xf32> to vector<8x8x1xf32>
    %473 = arith.divf %469, %472 : vector<8x8x1xf32>
    %474 = arith.minimumf %473, %404 : vector<8x8x1xf32>
    %cst_118 = arith.constant dense<0.000000e+00> : vector<8x1xf32>
    %475 = vector.multi_reduction <add>, %474, %cst_118 [0] : vector<8x8x1xf32> to vector<8x1xf32>
    %476 = arith.addf %404, %473 : vector<8x8x1xf32>
    %477 = vector.broadcast %473 : vector<8x8x1xf32> to vector<8x8x64xf32>
    %478 = arith.mulf %477, %284 : vector<8x8x64xf32>
    %cst_119 = arith.constant dense<0.000000e+00> : vector<8x64xf32>
    %479 = vector.multi_reduction <add>, %478, %cst_119 [0] : vector<8x8x64xf32> to vector<8x64xf32>
    %480 = tpu.concatenate %215, %479 in 1 : vector<8x32xf32>, vector<8x64xf32> -> vector<8x96xf32>
    %481 = arith.truncf %480 : vector<8x96xf32> to vector<8x96xbf16>
    %cst_120 = arith.constant dense<0.000000e+00> : vector<8x1xf32>
    %482 = tpu.matmul %481, %10, %cst_120 {dimension_numbers = #tpu.dot_dimension_numbers<[1], [0], [0], [1], [0, 0, 1, 1], [], []>} : vector<8x96xbf16>, vector<96x1xbf16>, vector<8x1xf32> -> vector<8x1xf32>
    %483 = vector.extract_strided_slice %303 {offsets = [2, 0, 0], sizes = [1, 8, 1], strides = [1, 1, 1]} : vector<4x8x1xf32> to vector<1x8x1xf32>
    %484 = vector.shape_cast %483 : vector<1x8x1xf32> to vector<8x1xf32>
    %485 = arith.addf %482, %484 : vector<8x1xf32>
    %486 = arith.negf %485 : vector<8x1xf32>
    %487 = math.exp %486 : vector<8x1xf32>
    %cst_121 = arith.constant 1.000000e+00 : f32
    %488 = vector.broadcast %cst_121 : f32 to vector<8x1xf32>
    %489 = arith.addf %488, %487 : vector<8x1xf32>
    %490 = arith.divf %488, %489 : vector<8x1xf32>
    %cst_122 = arith.constant dense<0.000000e+00> : vector<8x128xf32>
    %491 = tpu.matmul %481, %4, %cst_122 {dimension_numbers = #tpu.dot_dimension_numbers<[1], [0], [0], [1], [0, 0, 1, 1], [], []>} : vector<8x96xbf16>, vector<96x128xbf16>, vector<8x128xf32> -> vector<8x128xf32>
    %492 = vector.broadcast %16 : vector<1x128xf32> to vector<8x128xf32>
    %493 = arith.addf %491, %492 : vector<8x128xf32>
    %494 = arith.truncf %493 : vector<8x128xf32> to vector<8x128xbf16>
    %cst_123 = arith.constant dense<0.000000e+00> : vector<8x128xf32>
    %495 = tpu.matmul %494, %5, %cst_123 {dimension_numbers = #tpu.dot_dimension_numbers<[1], [0], [0], [1], [0, 0, 1, 1], [], []>} : vector<8x128xbf16>, vector<128x128xbf16>, vector<8x128xf32> -> vector<8x128xf32>
    %496 = vector.broadcast %17 : vector<1x128xf32> to vector<8x128xf32>
    %497 = arith.addf %495, %496 : vector<8x128xf32>
    %cst_124 = arith.constant dense<0xFF800000> : vector<8xf32>
    %498 = vector.multi_reduction <maximumf>, %497, %cst_124 [1] : vector<8x128xf32> to vector<8xf32>
    %499 = vector.shape_cast %498 : vector<8xf32> to vector<8x1xf32>
    %500 = vector.broadcast %499 : vector<8x1xf32> to vector<8x128xf32>
    %501 = arith.subf %497, %500 : vector<8x128xf32>
    %502 = math.exp %501 : vector<8x128xf32>
    %cst_125 = arith.constant dense<0.000000e+00> : vector<8xf32>
    %503 = vector.multi_reduction <add>, %502, %cst_125 [1] : vector<8x128xf32> to vector<8xf32>
    %504 = vector.shape_cast %503 : vector<8xf32> to vector<8x1xf32>
    %505 = vector.broadcast %504 : vector<8x1xf32> to vector<8x128xf32>
    %506 = arith.divf %502, %505 : vector<8x128xf32>
    %c0_126 = arith.constant 0 : index
    %c0_127 = arith.constant 0 : index
    %c0_128 = arith.constant 0 : index
    %507 = vector.load %arg11[%c0_126, %c0_127, %c0_128] : memref<8x8x128xf32, #tpu.memory_space<vmem>>, vector<8x8x128xf32>
    %508 = vector.broadcast %473 : vector<8x8x1xf32> to vector<8x8x128xf32>
    %509 = arith.mulf %507, %508 : vector<8x8x128xf32>
    %cst_129 = arith.constant dense<0.000000e+00> : vector<8x128xf32>
    %510 = vector.multi_reduction <add>, %509, %cst_129 [0] : vector<8x8x128xf32> to vector<8x128xf32>
    %511 = vector.broadcast %490 : vector<8x1xf32> to vector<8x128xf32>
    %512 = arith.mulf %506, %511 : vector<8x128xf32>
    %cst_130 = arith.constant 1.000000e+00 : f32
    %513 = vector.broadcast %cst_130 : f32 to vector<8x1xf32>
    %514 = arith.subf %513, %490 : vector<8x1xf32>
    %515 = vector.broadcast %514 : vector<8x1xf32> to vector<8x128xf32>
    %516 = arith.mulf %510, %515 : vector<8x128xf32>
    %517 = arith.addf %512, %516 : vector<8x128xf32>
    %c2_131 = arith.constant 2 : index
    %c0_132 = arith.constant 0 : index
    %c0_133 = arith.constant 0 : index
    %518 = vector.load %arg9[%c2_131, %c0_132, %c0_133] : memref<4x8x128xf32, #tpu.memory_space<vmem>>, vector<1x8x128xf32>
    %519 = vector.shape_cast %518 : vector<1x8x128xf32> to vector<8x128xf32>
    %520 = vector.shape_cast %517 : vector<8x128xf32> to vector<1x8x128xf32>
    tpu.vector_store %arg9[%c2_131, %c0_132, %c0_133], %520 {strides = array<i32>} : memref<4x8x128xf32, #tpu.memory_space<vmem>>, vector<1x8x128xf32>,
    %521 = arith.truncf %275 : vector<8x32xf32> to vector<8x32xbf16>
    %cst_134 = arith.constant dense<0.000000e+00> : vector<8x128xf32>
    %522 = tpu.matmul %521, %3, %cst_134 {dimension_numbers = #tpu.dot_dimension_numbers<[1], [0], [0], [1], [0, 0, 1, 1], [], []>} : vector<8x32xbf16>, vector<32x128xbf16>, vector<8x128xf32> -> vector<8x128xf32>
    %523 = vector.shape_cast %522 : vector<8x128xf32> to vector<1x8x128xf32>
    %524 = vector.broadcast %523 : vector<1x8x128xf32> to vector<8x8x128xf32>
    %525 = arith.addf %283, %524 : vector<8x8x128xf32>
    %526 = vector.shape_cast %14 : vector<1x128xf32> to vector<1x1x128xf32>
    %527 = vector.broadcast %476 : vector<8x8x1xf32> to vector<8x8x128xf32>
    %528 = vector.broadcast %526 : vector<1x1x128xf32> to vector<8x8x128xf32>
    %529 = arith.mulf %527, %528 : vector<8x8x128xf32>
    %530 = arith.addf %525, %529 : vector<8x8x128xf32>
    %531 = math.tanh %530 : vector<8x8x128xf32>
    %532 = vector.shape_cast %531 : vector<8x8x128xf32> to vector<64x128xf32>
    %533 = arith.truncf %532 : vector<64x128xf32> to vector<64x128xbf16>
    %cst_135 = arith.constant dense<0.000000e+00> : vector<64x1xf32>
    %534 = tpu.matmul %533, %8, %cst_135 {dimension_numbers = #tpu.dot_dimension_numbers<[1], [0], [0], [1], [0, 0, 1, 1], [], []>} : vector<64x128xbf16>, vector<128x1xbf16>, vector<64x1xf32> -> vector<64x1xf32>
    %535 = vector.shape_cast %534 : vector<64x1xf32> to vector<8x8x1xf32>
    %536 = arith.addf %535, %285 : vector<8x8x1xf32>
    %cst_136 = arith.constant dense<0xFF800000> : vector<8x1xf32>
    %537 = vector.multi_reduction <maximumf>, %536, %cst_136 [0] : vector<8x8x1xf32> to vector<8x1xf32>
    %538 = vector.shape_cast %537 : vector<8x1xf32> to vector<1x8x1xf32>
    %539 = vector.broadcast %538 : vector<1x8x1xf32> to vector<8x8x1xf32>
    %540 = arith.subf %536, %539 : vector<8x8x1xf32>
    %541 = math.exp %540 : vector<8x8x1xf32>
    %cst_137 = arith.constant dense<0.000000e+00> : vector<8x1xf32>
    %542 = vector.multi_reduction <add>, %541, %cst_137 [0] : vector<8x8x1xf32> to vector<8x1xf32>
    %543 = vector.shape_cast %542 : vector<8x1xf32> to vector<1x8x1xf32>
    %544 = vector.broadcast %543 : vector<1x8x1xf32> to vector<8x8x1xf32>
    %545 = arith.divf %541, %544 : vector<8x8x1xf32>
    %546 = arith.minimumf %545, %476 : vector<8x8x1xf32>
    %cst_138 = arith.constant dense<0.000000e+00> : vector<8x1xf32>
    %547 = vector.multi_reduction <add>, %546, %cst_138 [0] : vector<8x8x1xf32> to vector<8x1xf32>
    %548 = arith.addf %476, %545 : vector<8x8x1xf32>
    %549 = vector.broadcast %545 : vector<8x8x1xf32> to vector<8x8x64xf32>
    %550 = arith.mulf %549, %284 : vector<8x8x64xf32>
    %cst_139 = arith.constant dense<0.000000e+00> : vector<8x64xf32>
    %551 = vector.multi_reduction <add>, %550, %cst_139 [0] : vector<8x8x64xf32> to vector<8x64xf32>
    %552 = tpu.concatenate %275, %551 in 1 : vector<8x32xf32>, vector<8x64xf32> -> vector<8x96xf32>
    %553 = arith.truncf %552 : vector<8x96xf32> to vector<8x96xbf16>
    %cst_140 = arith.constant dense<0.000000e+00> : vector<8x1xf32>
    %554 = tpu.matmul %553, %10, %cst_140 {dimension_numbers = #tpu.dot_dimension_numbers<[1], [0], [0], [1], [0, 0, 1, 1], [], []>} : vector<8x96xbf16>, vector<96x1xbf16>, vector<8x1xf32> -> vector<8x1xf32>
    %555 = vector.extract_strided_slice %303 {offsets = [3, 0, 0], sizes = [1, 8, 1], strides = [1, 1, 1]} : vector<4x8x1xf32> to vector<1x8x1xf32>
    %556 = vector.shape_cast %555 : vector<1x8x1xf32> to vector<8x1xf32>
    %557 = arith.addf %554, %556 : vector<8x1xf32>
    %558 = arith.negf %557 : vector<8x1xf32>
    %559 = math.exp %558 : vector<8x1xf32>
    %cst_141 = arith.constant 1.000000e+00 : f32
    %560 = vector.broadcast %cst_141 : f32 to vector<8x1xf32>
    %561 = arith.addf %560, %559 : vector<8x1xf32>
    %562 = arith.divf %560, %561 : vector<8x1xf32>
    %cst_142 = arith.constant dense<0.000000e+00> : vector<8x128xf32>
    %563 = tpu.matmul %553, %4, %cst_142 {dimension_numbers = #tpu.dot_dimension_numbers<[1], [0], [0], [1], [0, 0, 1, 1], [], []>} : vector<8x96xbf16>, vector<96x128xbf16>, vector<8x128xf32> -> vector<8x128xf32>
    %564 = vector.broadcast %16 : vector<1x128xf32> to vector<8x128xf32>
    %565 = arith.addf %563, %564 : vector<8x128xf32>
    %566 = arith.truncf %565 : vector<8x128xf32> to vector<8x128xbf16>
    %cst_143 = arith.constant dense<0.000000e+00> : vector<8x128xf32>
    %567 = tpu.matmul %566, %5, %cst_143 {dimension_numbers = #tpu.dot_dimension_numbers<[1], [0], [0], [1], [0, 0, 1, 1], [], []>} : vector<8x128xbf16>, vector<128x128xbf16>, vector<8x128xf32> -> vector<8x128xf32>
    %568 = vector.broadcast %17 : vector<1x128xf32> to vector<8x128xf32>
    %569 = arith.addf %567, %568 : vector<8x128xf32>
    %cst_144 = arith.constant dense<0xFF800000> : vector<8xf32>
    %570 = vector.multi_reduction <maximumf>, %569, %cst_144 [1] : vector<8x128xf32> to vector<8xf32>
    %571 = vector.shape_cast %570 : vector<8xf32> to vector<8x1xf32>
    %572 = vector.broadcast %571 : vector<8x1xf32> to vector<8x128xf32>
    %573 = arith.subf %569, %572 : vector<8x128xf32>
    %574 = math.exp %573 : vector<8x128xf32>
    %cst_145 = arith.constant dense<0.000000e+00> : vector<8xf32>
    %575 = vector.multi_reduction <add>, %574, %cst_145 [1] : vector<8x128xf32> to vector<8xf32>
    %576 = vector.shape_cast %575 : vector<8xf32> to vector<8x1xf32>
    %577 = vector.broadcast %576 : vector<8x1xf32> to vector<8x128xf32>
    %578 = arith.divf %574, %577 : vector<8x128xf32>
    %c0_146 = arith.constant 0 : index
    %c0_147 = arith.constant 0 : index
    %c0_148 = arith.constant 0 : index
    %579 = vector.load %arg11[%c0_146, %c0_147, %c0_148] : memref<8x8x128xf32, #tpu.memory_space<vmem>>, vector<8x8x128xf32>
    %580 = vector.broadcast %545 : vector<8x8x1xf32> to vector<8x8x128xf32>
    %581 = arith.mulf %579, %580 : vector<8x8x128xf32>
    %cst_149 = arith.constant dense<0.000000e+00> : vector<8x128xf32>
    %582 = vector.multi_reduction <add>, %581, %cst_149 [0] : vector<8x8x128xf32> to vector<8x128xf32>
    %583 = vector.broadcast %562 : vector<8x1xf32> to vector<8x128xf32>
    %584 = arith.mulf %578, %583 : vector<8x128xf32>
    %cst_150 = arith.constant 1.000000e+00 : f32
    %585 = vector.broadcast %cst_150 : f32 to vector<8x1xf32>
    %586 = arith.subf %585, %562 : vector<8x1xf32>
    %587 = vector.broadcast %586 : vector<8x1xf32> to vector<8x128xf32>
    %588 = arith.mulf %582, %587 : vector<8x128xf32>
    %589 = arith.addf %584, %588 : vector<8x128xf32>
    %c3_151 = arith.constant 3 : index
    %c0_152 = arith.constant 0 : index
    %c0_153 = arith.constant 0 : index
    %590 = vector.load %arg9[%c3_151, %c0_152, %c0_153] : memref<4x8x128xf32, #tpu.memory_space<vmem>>, vector<1x8x128xf32>
    %591 = vector.shape_cast %590 : vector<1x8x128xf32> to vector<8x128xf32>
    %592 = vector.shape_cast %589 : vector<8x128xf32> to vector<1x8x128xf32>
    tpu.vector_store %arg9[%c3_151, %c0_152, %c0_153], %592 {strides = array<i32>} : memref<4x8x128xf32, #tpu.memory_space<vmem>>, vector<1x8x128xf32>,
    %cst_154 = arith.constant 0.000000e+00 : f32
    %593 = vector.broadcast %cst_154 : f32 to vector<8x116xf32>
    %594 = vector.extract_strided_slice %548 {offsets = [0, 0, 0], sizes = [1, 8, 1], strides = [1, 1, 1]} : vector<8x8x1xf32> to vector<1x8x1xf32>
    %595 = vector.shape_cast %594 : vector<1x8x1xf32> to vector<8x1xf32>
    %596 = vector.extract_strided_slice %548 {offsets = [1, 0, 0], sizes = [1, 8, 1], strides = [1, 1, 1]} : vector<8x8x1xf32> to vector<1x8x1xf32>
    %597 = vector.shape_cast %596 : vector<1x8x1xf32> to vector<8x1xf32>
    %598 = vector.extract_strided_slice %548 {offsets = [2, 0, 0], sizes = [1, 8, 1], strides = [1, 1, 1]} : vector<8x8x1xf32> to vector<1x8x1xf32>
    %599 = vector.shape_cast %598 : vector<1x8x1xf32> to vector<8x1xf32>
    %600 = vector.extract_strided_slice %548 {offsets = [3, 0, 0], sizes = [1, 8, 1], strides = [1, 1, 1]} : vector<8x8x1xf32> to vector<1x8x1xf32>
    %601 = vector.shape_cast %600 : vector<1x8x1xf32> to vector<8x1xf32>
    %602 = vector.extract_strided_slice %548 {offsets = [4, 0, 0], sizes = [1, 8, 1], strides = [1, 1, 1]} : vector<8x8x1xf32> to vector<1x8x1xf32>
    %603 = vector.shape_cast %602 : vector<1x8x1xf32> to vector<8x1xf32>
    %604 = vector.extract_strided_slice %548 {offsets = [5, 0, 0], sizes = [1, 8, 1], strides = [1, 1, 1]} : vector<8x8x1xf32> to vector<1x8x1xf32>
    %605 = vector.shape_cast %604 : vector<1x8x1xf32> to vector<8x1xf32>
    %606 = vector.extract_strided_slice %548 {offsets = [6, 0, 0], sizes = [1, 8, 1], strides = [1, 1, 1]} : vector<8x8x1xf32> to vector<1x8x1xf32>
    %607 = vector.shape_cast %606 : vector<1x8x1xf32> to vector<8x1xf32>
    %608 = vector.extract_strided_slice %548 {offsets = [7, 0, 0], sizes = [1, 8, 1], strides = [1, 1, 1]} : vector<8x8x1xf32> to vector<1x8x1xf32>
    %609 = vector.shape_cast %608 : vector<1x8x1xf32> to vector<8x1xf32>
    %610 = tpu.concatenate %331, %403, %475, %547, %595, %597, %599, %601, %603, %605, %607, %609, %593 in 1 : vector<8x1xf32>, vector<8x1xf32>, vector<8x1xf32>, vector<8x1xf32>, vector<8x1xf32>, vector<8x1xf32>, vector<8x1xf32>, vector<8x1xf32>, vector<8x1xf32>, vector<8x1xf32>, vector<8x1xf32>, vector<8x1xf32>, vector<8x116xf32> -> vector<8x128xf32>
    %c8 = arith.constant 8 : index
    %c0_155 = arith.constant 0 : index
    %611 = vector.load %arg10[%c8, %c0_155] : memref<16x128xf32, #tpu.memory_space<vmem>>, vector<8x128xf32>
    tpu.vector_store %arg10[%c8, %c0_155], %610 {strides = array<i32>} : memref<16x128xf32, #tpu.memory_space<vmem>>, vector<8x128xf32>,
    return
  }
  func.func @transform_0(%arg0: i32) -> (i32, i32) {
    %c0_i32 = arith.constant 0 : i32
    %c0_i32_0 = arith.constant 0 : i32
    %c0_i32_1 = arith.constant 0 : i32
    return %c0_i32, %c0_i32_0 : i32, i32
  }
  func.func @transform_1(%arg0: i32) -> (i32, i32) {
    %c0_i32 = arith.constant 0 : i32
    %c0_i32_0 = arith.constant 0 : i32
    %c0_i32_1 = arith.constant 0 : i32
    return %c0_i32, %c0_i32_0 : i32, i32
  }
  func.func @transform_2(%arg0: i32) -> (i32, i32, i32) {
    %c0_i32 = arith.constant 0 : i32
    %c0_i32_0 = arith.constant 0 : i32
    %c0_i32_1 = arith.constant 0 : i32
    %c0_i32_2 = arith.constant 0 : i32
    return %c0_i32, %c0_i32_0, %c0_i32_1 : i32, i32, i32
  }
  func.func @transform_3(%arg0: i32) -> (i32, i32, i32) {
    %c0_i32 = arith.constant 0 : i32
    %c0_i32_0 = arith.constant 0 : i32
    %c0_i32_1 = arith.constant 0 : i32
    %c0_i32_2 = arith.constant 0 : i32
    return %c0_i32, %c0_i32_0, %c0_i32_1 : i32, i32, i32
  }
  func.func @transform_4(%arg0: i32) -> (i32, i32, i32) {
    %c0_i32 = arith.constant 0 : i32
    %c0_i32_0 = arith.constant 0 : i32
    %c0_i32_1 = arith.constant 0 : i32
    %c0_i32_2 = arith.constant 0 : i32
    return %c0_i32, %c0_i32_0, %c0_i32_1 : i32, i32, i32
  }
  func.func @transform_5(%arg0: i32) -> (i32, i32) {
    %c0_i32 = arith.constant 0 : i32
    %c0_i32_0 = arith.constant 0 : i32
    %c0_i32_1 = arith.constant 0 : i32
    return %c0_i32, %c0_i32_0 : i32, i32
  }
  func.func @transform_6(%arg0: i32) -> (i32, i32) {
    %c0_i32 = arith.constant 0 : i32
    %c0_i32_0 = arith.constant 0 : i32
    %c0_i32_1 = arith.constant 0 : i32
    return %c0_i32, %c0_i32_0 : i32, i32
  }
  func.func @transform_7(%arg0: i32) -> i32 {
    %c0_i32 = arith.constant 0 : i32
    %c0_i32_0 = arith.constant 0 : i32
    return %c0_i32 : i32
  }
  func.func @transform_8(%arg0: i32) -> (i32, i32, i32) {
    %c0_i32 = arith.constant 0 : i32
    %c0_i32_0 = arith.constant 0 : i32
    %c0_i32_1 = arith.constant 0 : i32
    %c0_i32_2 = arith.constant 0 : i32
    return %c0_i32, %c0_i32_0, %c0_i32_1 : i32, i32, i32
  }
  func.func @transform_9(%arg0: i32) -> (i32, i32) {
    %c0_i32 = arith.constant 0 : i32
    %c0_i32_0 = arith.constant 0 : i32
    %c0_i32_1 = arith.constant 0 : i32
    return %c0_i32, %c0_i32_0 : i32, i32
  }
}

</mosaic_0001>

<llo_original>
// kernel: tpu_custom_call.1
$region0: #{tpu_custom_call.1}
  #allocation0 [shape = 'u32[]', space=smem, size = 0x4, offset = 0x4, fixed_abs, tag = 'smem constant byte address 0x4 - core index']
  #allocation1 [shape = 'u32[144,128]{1,0:T(1,128)}', space=vmem, size = 0x12000, scoped, tag = 'internal scratch']
  #allocation2 [shape = 'f32[8,8,128]{2,1,0:T(8,128)}', space=vmem, size = 0x8000, scoped, tag = 'scratch operand']
  %s0 = inlined_call_operand.vmem [shape: f32[64,64], index: 0, kind: input, shape index: {}]
  %s1 = inlined_call_operand.vmem [shape: f32[32,64], index: 1, kind: input, shape index: {}]
  %s2 = inlined_call_operand.vmem [shape: s32[8,8,1], index: 2, kind: input, shape index: {}]
  %s3 = inlined_call_operand.vmem [shape: f32[4,8,1], index: 3, kind: input, shape index: {}]
  %s4 = inlined_call_operand.vmem [shape: f32[8,8,1], index: 4, kind: input, shape index: {}]
  %s5 = inlined_call_operand.hbm [shape: bf16[704,128], index: 5, kind: input, shape index: {}]
  %s6 = inlined_call_operand.vmem [shape: f32[8,128], index: 6, kind: input, shape index: {}]
  %s7 = inlined_call_operand.vmem [shape: f32[2], index: 7, kind: input, shape index: {}]
  %s8 = inlined_call_operand.hbm [shape: f32[4,8,128], index: 8, kind: output, shape index: {0}]
  %s9 = inlined_call_operand.hbm [shape: f32[16,128], index: 9, kind: output, shape index: {1}]
  %10 = xla_tuple %s8, %s9
  %s11 = sld [smem:[#allocation0]]
  $region58: #{tpu_custom_call.1} parent=0
    _
  %s13 = ssub.s32 1, %s11
  %s14 = scalar_select 0, %s13, %s11
  $region1: #{tpu_custom_call.1} parent=0
    #allocation3 [shape = 'u8[180224]{0}', space=vmem, size = 0x2c000, scoped, tag = 'input window, operand 5, single buffered']
    #allocation4 [shape = 's32[1]{0}', space=sflag, size = 0x4, scoped, tag = 'scoped memory for tpu_custom_call.1']
    #allocation5 [shape = 's32[1]{0}', space=sflag, size = 0x4, scoped, tag = 'scoped memory for tpu_custom_call.1']
    #allocation6 [shape = 's32[1]{0}', space=sflag, size = 0x4, scoped, tag = 'scoped memory for tpu_custom_call.1']
    #allocation7 [shape = 'u8[512]{0}', space=smem, size = 0x200, scoped, tag = 'input window, operand 7, single buffered']
    #allocation8 [shape = 'u8[16384]{0}', space=vmem, size = 0x4000, scoped, tag = 'output window, operand 0, single buffered']
    #allocation9 [shape = 'u8[8192]{0}', space=vmem, size = 0x2000, scoped, tag = 'output window, operand 1, single buffered']
    #allocation10 [shape = 's32[1]{0}', space=sflag, size = 0x4, scoped, tag = 'scoped memory for tpu_custom_call.1']
    %15 = vsyncpa [#allocation4], 0
    %16 = vsyncpa [#allocation6], 0
    %17 = vsyncpa [#allocation5], 0
    %18 = vsyncpa [#allocation10], 0
    // Predicated region
    $region2: #{tpu_custom_call.1} parent=1 // pred_check
      _
    $region3: #{tpu_custom_call.1} parent=1 // pred_check_branch
      %20 = sbr.rel (0) target = $region5
    $region4: #{tpu_custom_call.1} parent=1 // pred_region
      _
    $region5: #{tpu_custom_call.1} parent=1 // pred_fallthru
      _
    // Predicated region
    $region6: #{tpu_custom_call.1} parent=1 // pred_check
      _
    $region7: #{tpu_custom_call.1} parent=1 // pred_check_branch
      %22 = sbr.rel (0) target = $region9
    $region8: #{tpu_custom_call.1} parent=1 // pred_region
      _
    $region9: #{tpu_custom_call.1} parent=1 // pred_fallthru
      _
    // Predicated region
    $region10: #{tpu_custom_call.1} parent=1 // pred_check
      _
    $region11: #{tpu_custom_call.1} parent=1 // pred_check_branch
      %24 = sbr.rel (0) target = $region13
    $region12: #{tpu_custom_call.1} parent=1 // pred_region
      _
    $region13: #{tpu_custom_call.1} parent=1 // pred_fallthru
      _
    // Predicated region
    $region14: #{tpu_custom_call.1} parent=1 // pred_check
      _
    $region15: #{tpu_custom_call.1} parent=1 // pred_check_branch
      %26 = sbr.rel (0) target = $region17
    $region16: #{tpu_custom_call.1} parent=1 // pred_region
      _
    $region17: #{tpu_custom_call.1} parent=1 // pred_fallthru
      _
    // Predicated region
    $region18: #{tpu_custom_call.1} parent=1 // pred_check
      _
    $region19: #{tpu_custom_call.1} parent=1 // pred_check_branch
      %28 = sbr.rel (0) target = $region21
    $region20: #{tpu_custom_call.1} parent=1 // pred_region
      _
    $region21: #{tpu_custom_call.1} parent=1 // pred_fallthru
      _
    // Predicated region
    $region22: #{tpu_custom_call.1} parent=1 // pred_check
      _
    $region23: #{tpu_custom_call.1} parent=1 // pred_check_branch
      %30 = sbr.rel (0) target = $region25
    $region24: #{tpu_custom_call.1} parent=1 // pred_region
      %s32 = ssub.s32 5632, 5632
      %33 = vsyncadd [#allocation4], %s32
      %s34 = sshll.u32 [#allocation3], 4
      %s35 = int_to_ptr.vmem [resolvable:$true] %s34
      %40 = dma.hbm_to_vmem [thread:$0]  %s5, 5632, %s35, [#allocation4], 64, 64, 4
    $region25: #{tpu_custom_call.1} parent=1 // pred_fallthru
      _
    // Predicated region
    $region26: #{tpu_custom_call.1} parent=1 // pred_check
      _
    $region27: #{tpu_custom_call.1} parent=1 // pred_check_branch
      %42 = sbr.rel (0) target = $region29
    $region28: #{tpu_custom_call.1} parent=1 // pred_region
      _
    $region29: #{tpu_custom_call.1} parent=1 // pred_fallthru
      _
    // Predicated region
    $region30: #{tpu_custom_call.1} parent=1 // pred_check
      _
    $region31: #{tpu_custom_call.1} parent=1 // pred_check_branch
      %44 = sbr.rel (0) target = $region33
    $region32: #{tpu_custom_call.1} parent=1 // pred_region
      %s46 = ssub.s32 16, 16
      %47 = vsyncadd [#allocation6], %s46
      %s49 = sshll.u32 %s7, 4
      %s50 = int_to_ptr.vmem [resolvable:$true] %s49
      %52 = dma.vmem_to_smem %s50, 16, [#allocation7], [#allocation6]
    $region33: #{tpu_custom_call.1} parent=1 // pred_fallthru
      _
    // Predicated region
    $region34: #{tpu_custom_call.1} parent=1 // pred_check
      _
    $region35: #{tpu_custom_call.1} parent=1 // pred_check_branch
      %54 = sbr.rel (0) target = $region37
    $region36: #{tpu_custom_call.1} parent=1 // pred_region
      %55 = dma.done [#allocation4], 5632
    $region37: #{tpu_custom_call.1} parent=1 // pred_fallthru
      _
    // Predicated region
    $region38: #{tpu_custom_call.1} parent=1 // pred_check
      _
    $region39: #{tpu_custom_call.1} parent=1 // pred_check_branch
      %57 = sbr.rel (0) target = $region41
    $region40: #{tpu_custom_call.1} parent=1 // pred_region
      %58 = dma.done [#allocation6], 16
    $region41: #{tpu_custom_call.1} parent=1 // pred_fallthru
      _
    %59 = sfence
    %v61 = vld [vmem:[#allocation3] sm:$0xf]
    %v62 = vld [vmem:[#allocation3 + $0x4] sm:$0xf]
    %v63 = vld [vmem:[#allocation3 + $0x8] sm:$0xf]
    %v64 = vld [vmem:[#allocation3 + $0xc] sm:$0xf]
    %v65 = vld [vmem:[#allocation3 + $0x10] sm:$0xf]
    %v66 = vld [vmem:[#allocation3 + $0x14] sm:$0xf]
    %v67 = vld [vmem:[#allocation3 + $0x18] sm:$0xf]
    %v68 = vld [vmem:[#allocation3 + $0x1c] sm:$0xf]
    %v69 = vld [vmem:[#allocation3 + $0x20] sm:$0xf]
    %v70 = vld [vmem:[#allocation3 + $0x24] sm:$0xf]
    %v71 = vld [vmem:[#allocation3 + $0x28] sm:$0xf]
    %v72 = vld [vmem:[#allocation3 + $0x2c] sm:$0xf]
    %v73 = vld [vmem:[#allocation3 + $0x30] sm:$0xf]
    %v74 = vld [vmem:[#allocation3 + $0x34] sm:$0xf]
    %v75 = vld [vmem:[#allocation3 + $0x38] sm:$0xf]
    %v76 = vld [vmem:[#allocation3 + $0x3c] sm:$0xf]
    %v77 = vld [vmem:[#allocation3 + $0x40] sm:$0xf]
    %v78 = vld [vmem:[#allocation3 + $0x44] sm:$0xf]
    %v79 = vld [vmem:[#allocation3 + $0x48] sm:$0xf]
    %v80 = vld [vmem:[#allocation3 + $0x4c] sm:$0xf]
    %v81 = vld [vmem:[#allocation3 + $0x50] sm:$0xf]
    %v82 = vld [vmem:[#allocation3 + $0x54] sm:$0xf]
    %v83 = vld [vmem:[#allocation3 + $0x58] sm:$0xf]
    %v84 = vld [vmem:[#allocation3 + $0x5c] sm:$0xf]
    %v85 = vld [vmem:[#allocation3 + $0x60] sm:$0xf]
    %v86 = vld [vmem:[#allocation3 + $0x64] sm:$0xf]
    %v87 = vld [vmem:[#allocation3 + $0x68] sm:$0xf]
    %v88 = vld [vmem:[#allocation3 + $0x6c] sm:$0xf]
    %v89 = vld [vmem:[#allocation3 + $0x70] sm:$0xf]
    %v90 = vld [vmem:[#allocation3 + $0x74] sm:$0xf]
    %v91 = vld [vmem:[#allocation3 + $0x78] sm:$0xf]
    %v92 = vld [vmem:[#allocation3 + $0x7c] sm:$0xf]
    %v93 = vld [vmem:[#allocation3 + $0x80] sm:$0xf]
    %v94 = vld [vmem:[#allocation3 + $0x84] sm:$0xf]
    %v95 = vld [vmem:[#allocation3 + $0x88] sm:$0xf]
    %v96 = vld [vmem:[#allocation3 + $0x8c] sm:$0xf]
    %v97 = vld [vmem:[#allocation3 + $0x90] sm:$0xf]
    %v98 = vld [vmem:[#allocation3 + $0x94] sm:$0xf]
    %v99 = vld [vmem:[#allocation3 + $0x98] sm:$0xf]
    %v100 = vld [vmem:[#allocation3 + $0x9c] sm:$0xf]
    %v101 = vld [vmem:[#allocation3 + $0xa0] sm:$0xf]
    %v102 = vld [vmem:[#allocation3 + $0xa4] sm:$0xf]
    %v103 = vld [vmem:[#allocation3 + $0xa8] sm:$0xf]
    %v104 = vld [vmem:[#allocation3 + $0xac] sm:$0xf]
    %v105 = vld [vmem:[#allocation3 + $0xb0] sm:$0xf]
    %v106 = vld [vmem:[#allocation3 + $0xb4] sm:$0xf]
    %v107 = vld [vmem:[#allocation3 + $0xb8] sm:$0xf]
    %v108 = vld [vmem:[#allocation3 + $0xbc] sm:$0xf]
    %v109 = vld [vmem:[#allocation3 + $0xc0] sm:$0xf]
    %v110 = vld [vmem:[#allocation3 + $0xc4] sm:$0xf]
    %v111 = vld [vmem:[#allocation3 + $0xc8] sm:$0xf]
    %v112 = vld [vmem:[#allocation3 + $0xcc] sm:$0xf]
    %v113 = vld [vmem:[#allocation3 + $0xd0] sm:$0xf]
    %v114 = vld [vmem:[#allocation3 + $0xd4] sm:$0xf]
    %v115 = vld [vmem:[#allocation3 + $0xd8] sm:$0xf]
    %v116 = vld [vmem:[#allocation3 + $0xdc] sm:$0xf]
    %v117 = vld [vmem:[#allocation3 + $0xe0] sm:$0xf]
    %v118 = vld [vmem:[#allocation3 + $0xe4] sm:$0xf]
    %v119 = vld [vmem:[#allocation3 + $0xe8] sm:$0xf]
    %v120 = vld [vmem:[#allocation3 + $0xec] sm:$0xf]
    %v121 = vld [vmem:[#allocation3 + $0xf0] sm:$0xf]
    %v122 = vld [vmem:[#allocation3 + $0xf4] sm:$0xf]
    %v123 = vld [vmem:[#allocation3 + $0xf8] sm:$0xf]
    %v124 = vld [vmem:[#allocation3 + $0xfc] sm:$0xf]
    %v125 = vld [vmem:[#allocation3 + $0x100] sm:$0xf]
    %v126 = vld [vmem:[#allocation3 + $0x104] sm:$0xf]
    %v127 = vld [vmem:[#allocation3 + $0x108] sm:$0xf]
    %v128 = vld [vmem:[#allocation3 + $0x10c] sm:$0xf]
    %v129 = vld [vmem:[#allocation3 + $0x110] sm:$0xf]
    %v130 = vld [vmem:[#allocation3 + $0x114] sm:$0xf]
    %v131 = vld [vmem:[#allocation3 + $0x118] sm:$0xf]
    %v132 = vld [vmem:[#allocation3 + $0x11c] sm:$0xf]
    %v133 = vld [vmem:[#allocation3 + $0x120] sm:$0xf]
    %v134 = vld [vmem:[#allocation3 + $0x124] sm:$0xf]
    %v135 = vld [vmem:[#allocation3 + $0x128] sm:$0xf]
    %v136 = vld [vmem:[#allocation3 + $0x12c] sm:$0xf]
    %v137 = vld [vmem:[#allocation3 + $0x130] sm:$0xf]
    %v138 = vld [vmem:[#allocation3 + $0x134] sm:$0xf]
    %v139 = vld [vmem:[#allocation3 + $0x138] sm:$0xf]
    %v140 = vld [vmem:[#allocation3 + $0x13c] sm:$0xf]
    %v141 = vld [vmem:[#allocation3 + $0x140] sm:$0xf]
    %v142 = vld [vmem:[#allocation3 + $0x144] sm:$0xf]
    %v143 = vld [vmem:[#allocation3 + $0x148] sm:$0xf]
    %v144 = vld [vmem:[#allocation3 + $0x14c] sm:$0xf]
    %v145 = vld [vmem:[#allocation3 + $0x150] sm:$0xf]
    %v146 = vld [vmem:[#allocation3 + $0x154] sm:$0xf]
    %v147 = vld [vmem:[#allocation3 + $0x158] sm:$0xf]
    %v148 = vld [vmem:[#allocation3 + $0x15c] sm:$0xf]
    %v149 = vld [vmem:[%s6] sm:$0x1]
    %v150 = vld [vmem:[%s6 + $0x1] sm:$0x1]
    %v151 = vld [vmem:[%s6 + $0x2] sm:$0x1]
    %v152 = vld [vmem:[%s6 + $0x3] sm:$0x1]
    %v153 = vld [vmem:[%s6 + $0x4] sm:$0x1]
    %v154 = vld [vmem:[%s6 + $0x5] sm:$0x1]
    %v155 = vld [vmem:[%s6 + $0x6] sm:$0x1]
    %v156 = vld [vmem:[%s6 + $0x7] sm:$0x1]
    %v157 = vld [vmem:[%s1] sm:$0xff]
    %v158 = vld [vmem:[%s1 + $0x8] sm:$0xff]
    %v159 = vld [vmem:[%s1 + $0x10] sm:$0xff]
    %v160 = vld [vmem:[%s1 + $0x18] sm:$0xff]
    %v161 = vpack.c.bf16 %v158, %v157
    %v162 = vpack.c.bf16 %v160, %v159
    %v163 = vlaneseq
    %v164 = vshrl.u32 %v163, 7
    %v165 = vsub.s32 0, %v164
    %v166 = vrot.slane %v156, %v165
    %v175 = vunpack.c.l.b16 %v113
    %v176 = vunpack.c.l.b16 %v114
    %v177 = vunpack.c.l.b16 %v115
    %v178 = vunpack.c.l.b16 %v116
    %v179 = vunpack.c.l.b16 %v117
    %v180 = vunpack.c.l.b16 %v118
    %v181 = vunpack.c.l.b16 %v119
    %v182 = vunpack.c.l.b16 %v120
    %v183 = vpack.c.b16 %v176, %v175
    %v184 = vpack.c.b16 %v178, %v177
    %v185 = vpack.c.b16 %v180, %v179
    %v186 = vpack.c.b16 %v182, %v181
    %vm191 = vcmask 523264
    %v193 = vsel %vm191, %v161, 0
    %v196 = vsel %vm191, %v162, 0
    %198 = vmatprep.subr.bf16.mxu0 0
    %199 = vmatpush1.bf16.msra.mxu0 %v183
    %200 = vmatprep.subr.bf16.mxu0 0
    %201 = vmatpush1.bf16.msra.mxu0 %v184
    %202 = vmatprep.subr.bf16.mxu0 0
    %203 = vmatpush1.bf16.msra.mxu0 %v185
    %204 = vmatprep.subr.bf16.mxu0 0
    %205 = vmatpush1.bf16.msra.mxu0 %v186
    %206 = vmatprep.subr.bf16.mxu0 0
    %207 = vmatpush1.bf16.msra.mxu0 0
    %208 = vmatprep.subr.bf16.mxu0 0
    %209 = vmatpush1.bf16.msra.mxu0 0
    %210 = vmatprep.subr.bf16.mxu0 0
    %211 = vmatpush1.bf16.msra.mxu0 0
    %212 = vmatprep.subr.bf16.mxu0 0
    %213 = vmatpush1.bf16.msra.mxu0 0
    %214 = vmatprep.subr.bf16.mxu0 0
    %215 = vmatpush1.bf16.msra.mxu0 0
    %216 = vmatprep.subr.bf16.mxu0 0
    %217 = vmatpush1.bf16.msra.mxu0 0
    %218 = vmatprep.subr.bf16.mxu0 0
    %219 = vmatpush1.bf16.msra.mxu0 0
    %220 = vmatprep.subr.bf16.mxu0 0
    %221 = vmatpush1.bf16.msra.mxu0 0
    %222 = vmatprep.subr.bf16.mxu0 0
    %223 = vmatpush1.bf16.msra.mxu0 0
    %224 = vmatprep.subr.bf16.mxu0 0
    %225 = vmatpush1.bf16.msra.mxu0 0
    %226 = vmatprep.subr.bf16.mxu0 0
    %227 = vmatpush1.bf16.msra.mxu0 0
    %228 = vmatprep.subr.bf16.mxu0 0
    %229 = vmatpush1.bf16.msra.mxu0 0
    %230 = vmatprep.mubr.bf16.mxu0 0
    %231 = vmatmul.mubr.bf16.gmra.mrb[0].mxu0 %v193
    %v232 = vpop.f32.mrb[0].mxu0
    %v233 = vadd.f32 %v166, %v232
    %v234 = vpop.f32.mrb[0].mxu0
    %v235 = vpop.f32.mrb[0].mxu0
    %v236 = vadd.f32 %v166, %v235
    %v237 = vpop.f32.mrb[0].mxu0
    %238 = vmatprep.mubr.bf16.mxu0 0
    %239 = vmatmul.mubr.bf16.gmra.mrb[0].mxu0 %v196
    %v240 = vpop.f32.mrb[0].mxu0
    %v241 = vadd.f32 %v166, %v240
    %v242 = vpop.f32.mrb[0].mxu0
    %v243 = vpop.f32.mrb[0].mxu0
    %v244 = vadd.f32 %v166, %v243
    %v245 = vpop.f32.mrb[0].mxu0
    %246 = vdwg.mxu0
    %v247 = vld [vmem:[%s3] sm:$0xff]
    %v248 = vld [vmem:[%s3 + $0x8] sm:$0xff]
    %v249 = vld [vmem:[%s3 + $0x10] sm:$0xff]
    %v250 = vld [vmem:[%s3 + $0x18] sm:$0xff]
    %252 = vset.pattern.permute.xlu0 0
    %253 = vperm.xlu0 %252, %v247
    %v254 = vpop.permute.xlu0 %253
    %257 = vset.pattern.permute.xlu0 0
    %258 = vperm.xlu0 %257, %v248
    %v259 = vpop.permute.xlu0 %258
    %262 = vset.pattern.permute.xlu0 0
    %263 = vperm.xlu0 %262, %v249
    %v264 = vpop.permute.xlu0 %263
    %267 = vset.pattern.permute.xlu0 0
    %268 = vperm.xlu0 %267, %v250
    %v269 = vpop.permute.xlu0 %268
    %v271 = vlaneseq
    %v272 = vshrl.u32 %v271, 7
    %v273 = vsub.s32 0, %v272
    %v274 = vrot.slane %v149, %v273
    %v275 = vmul.f32 %v254, %v274
    %v276 = vmul.f32 %v259, %v274
    %v277 = vmul.f32 %v264, %v274
    %v278 = vmul.f32 %v269, %v274
    %v279 = vlaneseq
    %v280 = vshrl.u32 %v279, 7
    %v281 = vsub.s32 0, %v280
    %v282 = vrot.slane %v150, %v281
    %v283 = vadd.f32 %v275, %v282
    %v284 = vadd.f32 %v276, %v282
    %v285 = vadd.f32 %v277, %v282
    %v286 = vadd.f32 %v278, %v282
    %v287 = vpack.c.bf16 %v233, %v233
    %v292 = vunpack.c.l.b16 %v61
    %v293 = vunpack.c.l.b16 %v62
    %v294 = vunpack.c.l.b16 %v63
    %v295 = vunpack.c.l.b16 %v64
    %v296 = vpack.c.b16 %v293, %v292
    %v297 = vpack.c.b16 %v295, %v294
    %vm300 = vcmask 261120
    %v302 = vsel %vm300, %v287, 0
    %304 = vmatprep.subr.bf16.mxu0 0
    %305 = vmatpush1.bf16.msra.mxu0 %v296
    %306 = vmatprep.subr.bf16.mxu0 0
    %307 = vmatpush1.bf16.msra.mxu0 %v297
    %308 = vmatprep.subr.bf16.mxu0 0
    %309 = vmatpush1.bf16.msra.mxu0 0
    %310 = vmatprep.subr.bf16.mxu0 0
    %311 = vmatpush1.bf16.msra.mxu0 0
    %312 = vmatprep.subr.bf16.mxu0 0
    %313 = vmatpush1.bf16.msra.mxu0 0
    %314 = vmatprep.subr.bf16.mxu0 0
    %315 = vmatpush1.bf16.msra.mxu0 0
    %316 = vmatprep.subr.bf16.mxu0 0
    %317 = vmatpush1.bf16.msra.mxu0 0
    %318 = vmatprep.subr.bf16.mxu0 0
    %319 = vmatpush1.bf16.msra.mxu0 0
    %320 = vmatprep.subr.bf16.mxu0 0
    %321 = vmatpush1.bf16.msra.mxu0 0
    %322 = vmatprep.subr.bf16.mxu0 0
    %323 = vmatpush1.bf16.msra.mxu0 0
    %324 = vmatprep.subr.bf16.mxu0 0
    %325 = vmatpush1.bf16.msra.mxu0 0
    %326 = vmatprep.subr.bf16.mxu0 0
    %327 = vmatpush1.bf16.msra.mxu0 0
    %328 = vmatprep.subr.bf16.mxu0 0
    %329 = vmatpush1.bf16.msra.mxu0 0
    %330 = vmatprep.subr.bf16.mxu0 0
    %331 = vmatpush1.bf16.msra.mxu0 0
    %332 = vmatprep.subr.bf16.mxu0 0
    %333 = vmatpush1.bf16.msra.mxu0 0
    %334 = vmatprep.subr.bf16.mxu0 0
    %335 = vmatpush1.bf16.msra.mxu0 0
    %336 = vmatprep.mubr.bf16.mxu0 0
    %337 = vmatmul.mubr.bf16.gmra.mrb[0].mxu0 %v302
    %v338 = vpop.f32.mrb[0].mxu0
    %v339 = vadd.f32 0.0, %v338
    %v340 = vpop.f32.mrb[0].mxu0
    %v341 = vpop.f32.mrb[0].mxu0
    %v342 = vpop.f32.mrb[0].mxu0
    %343 = vdwg.mxu0
    %v344 = vadd.f32 %v283, %v339
    %v345 = vxor.u32 %v344, 2147483648
    %v346 = vmul.f32 %v345, 1.442695
    %v347 = vpow.pop %v346
    %v348 = vadd.f32 %v347, 1.0
    %v349 = vrcp.pop %v348
    %v350 = vmul.f32 1.0, %v349
    %v351 = vtanh.pop %v344
    %353 = vrot.lane.b32.xlu0 %v241, 32
    %v354 = vpop.permute.xlu0 %353
    %v356 = vmul.f32 %v350, %v354
    %358 = vrot.lane.b32.xlu0 %v351, 64
    %v359 = vpop.permute.xlu0 %358
    %v361 = vmul.f32 %v350, %v359
    %363 = vrot.lane.b32.xlu0 %v361, 32
    %v364 = vpop.permute.xlu0 %363
    %v366 = vadd.f32 %v356, %v364
    %v367 = vtanh.pop %v366
    %369 = vrot.lane.b32.xlu0 %v367, 64
    %v370 = vpop.permute.xlu0 %369
    %v372 = vmul.f32 %v350, %v370
    %374 = vrot.lane.b32.xlu0 %v372, 32
    %v375 = vpop.permute.xlu0 %374
    %378 = vrot.lane.b32.xlu0 %v236, 32
    %v379 = vpop.permute.xlu0 %378
    %v381 = vsel %vm300, %v375, %v379
    %v382 = vpack.c.bf16 %v381, %v381
    %v383 = vlaneseq
    %v384 = vshrl.u32 %v383, 7
    %v385 = vsub.s32 0, %v384
    %v386 = vrot.slane %v151, %v385
    %v395 = vunpack.c.l.b16 %v65
    %v396 = vunpack.c.l.b16 %v66
    %v397 = vunpack.c.l.b16 %v67
    %v398 = vunpack.c.l.b16 %v68
    %v399 = vunpack.c.l.b16 %v69
    %v400 = vunpack.c.l.b16 %v70
    %v401 = vunpack.c.l.b16 %v71
    %v402 = vunpack.c.l.b16 %v72
    %v403 = vpack.c.b16 %v396, %v395
    %v404 = vpack.c.b16 %v398, %v397
    %v405 = vpack.c.b16 %v400, %v399
    %v406 = vpack.c.b16 %v402, %v401
    %v412 = vsel %vm191, %v382, 0
    %414 = vmatprep.subr.bf16.mxu0 0
    %415 = vmatpush1.bf16.msra.mxu0 %v403
    %416 = vmatprep.subr.bf16.mxu0 0
    %417 = vmatpush1.bf16.msra.mxu0 %v404
    %418 = vmatprep.subr.bf16.mxu0 0
    %419 = vmatpush1.bf16.msra.mxu0 %v405
    %420 = vmatprep.subr.bf16.mxu0 0
    %421 = vmatpush1.bf16.msra.mxu0 %v406
    %422 = vmatprep.subr.bf16.mxu0 0
    %423 = vmatpush1.bf16.msra.mxu0 0
    %424 = vmatprep.subr.bf16.mxu0 0
    %425 = vmatpush1.bf16.msra.mxu0 0
    %426 = vmatprep.subr.bf16.mxu0 0
    %427 = vmatpush1.bf16.msra.mxu0 0
    %428 = vmatprep.subr.bf16.mxu0 0
    %429 = vmatpush1.bf16.msra.mxu0 0
    %430 = vmatprep.subr.bf16.mxu0 0
    %431 = vmatpush1.bf16.msra.mxu0 0
    %432 = vmatprep.subr.bf16.mxu0 0
    %433 = vmatpush1.bf16.msra.mxu0 0
    %434 = vmatprep.subr.bf16.mxu0 0
    %435 = vmatpush1.bf16.msra.mxu0 0
    %436 = vmatprep.subr.bf16.mxu0 0
    %437 = vmatpush1.bf16.msra.mxu0 0
    %438 = vmatprep.subr.bf16.mxu0 0
    %439 = vmatpush1.bf16.msra.mxu0 0
    %440 = vmatprep.subr.bf16.mxu0 0
    %441 = vmatpush1.bf16.msra.mxu0 0
    %442 = vmatprep.subr.bf16.mxu0 0
    %443 = vmatpush1.bf16.msra.mxu0 0
    %444 = vmatprep.subr.bf16.mxu0 0
    %445 = vmatpush1.bf16.msra.mxu0 0
    %446 = vmatprep.mubr.bf16.mxu0 0
    %447 = vmatmul.mubr.bf16.gmra.mrb[0].mxu0 %v412
    %v448 = vpop.f32.mrb[0].mxu0
    %v449 = vadd.f32 %v386, %v448
    %v450 = vpop.f32.mrb[0].mxu0
    %v451 = vpop.f32.mrb[0].mxu0
    %v452 = vpop.f32.mrb[0].mxu0
    %453 = vdwg.mxu0
    %v454 = vxor.u32 %v449, 2147483648
    %v455 = vmul.f32 %v454, 1.442695
    %v456 = vpow.pop %v455
    %v457 = vadd.f32 %v456, 1.0
    %v458 = vrcp.pop %v457
    %v459 = vmul.f32 1.0, %v458
    %v460 = vtanh.pop %v449
    %462 = vrot.lane.b32.xlu0 %v244, 32
    %v463 = vpop.permute.xlu0 %462
    %v465 = vmul.f32 %v459, %v463
    %467 = vrot.lane.b32.xlu0 %v460, 64
    %v468 = vpop.permute.xlu0 %467
    %v470 = vmul.f32 %v459, %v468
    %472 = vrot.lane.b32.xlu0 %v470, 32
    %v473 = vpop.permute.xlu0 %472
    %v475 = vadd.f32 %v465, %v473
    %v476 = vtanh.pop %v475
    %478 = vrot.lane.b32.xlu0 %v476, 64
    %v479 = vpop.permute.xlu0 %478
    %v481 = vmul.f32 %v459, %v479
    %v482 = vpack.c.bf16 %v372, %v372
    %484 = vrot.lane.b32.xlu0 %v482, 32
    %v485 = vpop.permute.xlu0 %484
    %v487 = vsel %vm300, %v485, 0
    %489 = vmatprep.subr.bf16.mxu0 0
    %490 = vmatpush1.bf16.msra.mxu0 %v296
    %491 = vmatprep.subr.bf16.mxu0 0
    %492 = vmatpush1.bf16.msra.mxu0 %v297
    %493 = vmatprep.subr.bf16.mxu0 0
    %494 = vmatpush1.bf16.msra.mxu0 0
    %495 = vmatprep.subr.bf16.mxu0 0
    %496 = vmatpush1.bf16.msra.mxu0 0
    %497 = vmatprep.subr.bf16.mxu0 0
    %498 = vmatpush1.bf16.msra.mxu0 0
    %499 = vmatprep.subr.bf16.mxu0 0
    %500 = vmatpush1.bf16.msra.mxu0 0
    %501 = vmatprep.subr.bf16.mxu0 0
    %502 = vmatpush1.bf16.msra.mxu0 0
    %503 = vmatprep.subr.bf16.mxu0 0
    %504 = vmatpush1.bf16.msra.mxu0 0
    %505 = vmatprep.subr.bf16.mxu0 0
    %506 = vmatpush1.bf16.msra.mxu0 0
    %507 = vmatprep.subr.bf16.mxu0 0
    %508 = vmatpush1.bf16.msra.mxu0 0
    %509 = vmatprep.subr.bf16.mxu0 0
    %510 = vmatpush1.bf16.msra.mxu0 0
    %511 = vmatprep.subr.bf16.mxu0 0
    %512 = vmatpush1.bf16.msra.mxu0 0
    %513 = vmatprep.subr.bf16.mxu0 0
    %514 = vmatpush1.bf16.msra.mxu0 0
    %515 = vmatprep.subr.bf16.mxu0 0
    %516 = vmatpush1.bf16.msra.mxu0 0
    %517 = vmatprep.subr.bf16.mxu0 0
    %518 = vmatpush1.bf16.msra.mxu0 0
    %519 = vmatprep.subr.bf16.mxu0 0
    %520 = vmatpush1.bf16.msra.mxu0 0
    %521 = vmatprep.mubr.bf16.mxu0 0
    %522 = vmatmul.mubr.bf16.gmra.mrb[0].mxu0 %v487
    %v523 = vpop.f32.mrb[0].mxu0
    %v524 = vadd.f32 0.0, %v523
    %v525 = vpop.f32.mrb[0].mxu0
    %v526 = vpop.f32.mrb[0].mxu0
    %v527 = vpop.f32.mrb[0].mxu0
    %528 = vdwg.mxu0
    %v529 = vadd.f32 %v284, %v524
    %v530 = vxor.u32 %v529, 2147483648
    %v531 = vmul.f32 %v530, 1.442695
    %v532 = vpow.pop %v531
    %v533 = vadd.f32 %v532, 1.0
    %v534 = vrcp.pop %v533
    %v535 = vmul.f32 1.0, %v534
    %v536 = vtanh.pop %v529
    %v537 = vmul.f32 %v535, %v366
    %539 = vrot.lane.b32.xlu0 %v536, 64
    %v540 = vpop.permute.xlu0 %539
    %v542 = vmul.f32 %v535, %v540
    %544 = vrot.lane.b32.xlu0 %v542, 32
    %v545 = vpop.permute.xlu0 %544
    %v547 = vadd.f32 %v537, %v545
    %v548 = vtanh.pop %v547
    %550 = vrot.lane.b32.xlu0 %v548, 64
    %v551 = vpop.permute.xlu0 %550
    %v553 = vmul.f32 %v535, %v551
    %555 = vrot.lane.b32.xlu0 %v553, 32
    %v556 = vpop.permute.xlu0 %555
    %559 = vrot.lane.b32.xlu0 %v481, 64
    %v560 = vpop.permute.xlu0 %559
    %v562 = vsel %vm300, %v556, %v560
    %v563 = vpack.c.bf16 %v562, %v562
    %v565 = vsel %vm191, %v563, 0
    %567 = vmatprep.subr.bf16.mxu0 0
    %568 = vmatpush1.bf16.msra.mxu0 %v403
    %569 = vmatprep.subr.bf16.mxu0 0
    %570 = vmatpush1.bf16.msra.mxu0 %v404
    %571 = vmatprep.subr.bf16.mxu0 0
    %572 = vmatpush1.bf16.msra.mxu0 %v405
    %573 = vmatprep.subr.bf16.mxu0 0
    %574 = vmatpush1.bf16.msra.mxu0 %v406
    %575 = vmatprep.subr.bf16.mxu0 0
    %576 = vmatpush1.bf16.msra.mxu0 0
    %577 = vmatprep.subr.bf16.mxu0 0
    %578 = vmatpush1.bf16.msra.mxu0 0
    %579 = vmatprep.subr.bf16.mxu0 0
    %580 = vmatpush1.bf16.msra.mxu0 0
    %581 = vmatprep.subr.bf16.mxu0 0
    %582 = vmatpush1.bf16.msra.mxu0 0
    %583 = vmatprep.subr.bf16.mxu0 0
    %584 = vmatpush1.bf16.msra.mxu0 0
    %585 = vmatprep.subr.bf16.mxu0 0
    %586 = vmatpush1.bf16.msra.mxu0 0
    %587 = vmatprep.subr.bf16.mxu0 0
    %588 = vmatpush1.bf16.msra.mxu0 0
    %589 = vmatprep.subr.bf16.mxu0 0
    %590 = vmatpush1.bf16.msra.mxu0 0
    %591 = vmatprep.subr.bf16.mxu0 0
    %592 = vmatpush1.bf16.msra.mxu0 0
    %593 = vmatprep.subr.bf16.mxu0 0
    %594 = vmatpush1.bf16.msra.mxu0 0
    %595 = vmatprep.subr.bf16.mxu0 0
    %596 = vmatpush1.bf16.msra.mxu0 0
    %597 = vmatprep.subr.bf16.mxu0 0
    %598 = vmatpush1.bf16.msra.mxu0 0
    %599 = vmatprep.mubr.bf16.mxu0 0
    %600 = vmatmul.mubr.bf16.gmra.mrb[0].mxu0 %v565
    %v601 = vpop.f32.mrb[0].mxu0
    %v602 = vadd.f32 %v386, %v601
    %v603 = vpop.f32.mrb[0].mxu0
    %v604 = vpop.f32.mrb[0].mxu0
    %v605 = vpop.f32.mrb[0].mxu0
    %606 = vdwg.mxu0
    %v607 = vxor.u32 %v602, 2147483648
    %v608 = vmul.f32 %v607, 1.442695
    %v609 = vpow.pop %v608
    %v610 = vadd.f32 %v609, 1.0
    %v611 = vrcp.pop %v610
    %v612 = vmul.f32 1.0, %v611
    %v613 = vtanh.pop %v602
    %v614 = vmul.f32 %v612, %v475
    %616 = vrot.lane.b32.xlu0 %v613, 64
    %v617 = vpop.permute.xlu0 %616
    %v619 = vmul.f32 %v612, %v617
    %621 = vrot.lane.b32.xlu0 %v619, 32
    %v622 = vpop.permute.xlu0 %621
    %v624 = vadd.f32 %v614, %v622
    %v625 = vtanh.pop %v624
    %627 = vrot.lane.b32.xlu0 %v625, 64
    %v628 = vpop.permute.xlu0 %627
    %v630 = vmul.f32 %v612, %v628
    %v631 = vpack.c.bf16 %v553, %v553
    %633 = vrot.lane.b32.xlu0 %v631, 32
    %v634 = vpop.permute.xlu0 %633
    %v636 = vsel %vm300, %v634, 0
    %638 = vmatprep.subr.bf16.mxu0 0
    %639 = vmatpush1.bf16.msra.mxu0 %v296
    %640 = vmatprep.subr.bf16.mxu0 0
    %641 = vmatpush1.bf16.msra.mxu0 %v297
    %642 = vmatprep.subr.bf16.mxu0 0
    %643 = vmatpush1.bf16.msra.mxu0 0
    %644 = vmatprep.subr.bf16.mxu0 0
    %645 = vmatpush1.bf16.msra.mxu0 0
    %646 = vmatprep.subr.bf16.mxu0 0
    %647 = vmatpush1.bf16.msra.mxu0 0
    %648 = vmatprep.subr.bf16.mxu0 0
    %649 = vmatpush1.bf16.msra.mxu0 0
    %650 = vmatprep.subr.bf16.mxu0 0
    %651 = vmatpush1.bf16.msra.mxu0 0
    %652 = vmatprep.subr.bf16.mxu0 0
    %653 = vmatpush1.bf16.msra.mxu0 0
    %654 = vmatprep.subr.bf16.mxu0 0
    %655 = vmatpush1.bf16.msra.mxu0 0
    %656 = vmatprep.subr.bf16.mxu0 0
    %657 = vmatpush1.bf16.msra.mxu0 0
    %658 = vmatprep.subr.bf16.mxu0 0
    %659 = vmatpush1.bf16.msra.mxu0 0
    %660 = vmatprep.subr.bf16.mxu0 0
    %661 = vmatpush1.bf16.msra.mxu0 0
    %662 = vmatprep.subr.bf16.mxu0 0
    %663 = vmatpush1.bf16.msra.mxu0 0
    %664 = vmatprep.subr.bf16.mxu0 0
    %665 = vmatpush1.bf16.msra.mxu0 0
    %666 = vmatprep.subr.bf16.mxu0 0
    %667 = vmatpush1.bf16.msra.mxu0 0
    %668 = vmatprep.subr.bf16.mxu0 0
    %669 = vmatpush1.bf16.msra.mxu0 0
    %670 = vmatprep.mubr.bf16.mxu0 0
    %671 = vmatmul.mubr.bf16.gmra.mrb[0].mxu0 %v636
    %v672 = vpop.f32.mrb[0].mxu0
    %v673 = vadd.f32 0.0, %v672
    %v674 = vpop.f32.mrb[0].mxu0
    %v675 = vpop.f32.mrb[0].mxu0
    %v676 = vpop.f32.mrb[0].mxu0
    %677 = vdwg.mxu0
    %v678 = vadd.f32 %v285, %v673
    %v679 = vxor.u32 %v678, 2147483648
    %v680 = vmul.f32 %v679, 1.442695
    %v681 = vpow.pop %v680
    %v682 = vadd.f32 %v681, 1.0
    %v683 = vrcp.pop %v682
    %v684 = vmul.f32 1.0, %v683
    %v685 = vtanh.pop %v678
    %v686 = vmul.f32 %v684, %v547
    %688 = vrot.lane.b32.xlu0 %v685, 64
    %v689 = vpop.permute.xlu0 %688
    %v691 = vmul.f32 %v684, %v689
    %693 = vrot.lane.b32.xlu0 %v691, 32
    %v694 = vpop.permute.xlu0 %693
    %v696 = vadd.f32 %v686, %v694
    %v697 = vtanh.pop %v696
    %699 = vrot.lane.b32.xlu0 %v697, 64
    %v700 = vpop.permute.xlu0 %699
    %v702 = vmul.f32 %v684, %v700
    %704 = vrot.lane.b32.xlu0 %v702, 32
    %v705 = vpop.permute.xlu0 %704
    %708 = vrot.lane.b32.xlu0 %v630, 64
    %v709 = vpop.permute.xlu0 %708
    %v711 = vsel %vm300, %v705, %v709
    %v712 = vpack.c.bf16 %v711, %v711
    %v714 = vsel %vm191, %v712, 0
    %716 = vmatprep.subr.bf16.mxu0 0
    %717 = vmatpush1.bf16.msra.mxu0 %v403
    %718 = vmatprep.subr.bf16.mxu0 0
    %719 = vmatpush1.bf16.msra.mxu0 %v404
    %720 = vmatprep.subr.bf16.mxu0 0
    %721 = vmatpush1.bf16.msra.mxu0 %v405
    %722 = vmatprep.subr.bf16.mxu0 0
    %723 = vmatpush1.bf16.msra.mxu0 %v406
    %724 = vmatprep.subr.bf16.mxu0 0
    %725 = vmatpush1.bf16.msra.mxu0 0
    %726 = vmatprep.subr.bf16.mxu0 0
    %727 = vmatpush1.bf16.msra.mxu0 0
    %728 = vmatprep.subr.bf16.mxu0 0
    %729 = vmatpush1.bf16.msra.mxu0 0
    %730 = vmatprep.subr.bf16.mxu0 0
    %731 = vmatpush1.bf16.msra.mxu0 0
    %732 = vmatprep.subr.bf16.mxu0 0
    %733 = vmatpush1.bf16.msra.mxu0 0
    %734 = vmatprep.subr.bf16.mxu0 0
    %735 = vmatpush1.bf16.msra.mxu0 0
    %736 = vmatprep.subr.bf16.mxu0 0
    %737 = vmatpush1.bf16.msra.mxu0 0
    %738 = vmatprep.subr.bf16.mxu0 0
    %739 = vmatpush1.bf16.msra.mxu0 0
    %740 = vmatprep.subr.bf16.mxu0 0
    %741 = vmatpush1.bf16.msra.mxu0 0
    %742 = vmatprep.subr.bf16.mxu0 0
    %743 = vmatpush1.bf16.msra.mxu0 0
    %744 = vmatprep.subr.bf16.mxu0 0
    %745 = vmatpush1.bf16.msra.mxu0 0
    %746 = vmatprep.subr.bf16.mxu0 0
    %747 = vmatpush1.bf16.msra.mxu0 0
    %748 = vmatprep.mubr.bf16.mxu0 0
    %749 = vmatmul.mubr.bf16.gmra.mrb[0].mxu0 %v714
    %v750 = vpop.f32.mrb[0].mxu0
    %v751 = vadd.f32 %v386, %v750
    %v752 = vpop.f32.mrb[0].mxu0
    %v753 = vpop.f32.mrb[0].mxu0
    %v754 = vpop.f32.mrb[0].mxu0
    %755 = vdwg.mxu0
    %v756 = vxor.u32 %v751, 2147483648
    %v757 = vmul.f32 %v756, 1.442695
    %v758 = vpow.pop %v757
    %v759 = vadd.f32 %v758, 1.0
    %v760 = vrcp.pop %v759
    %v761 = vmul.f32 1.0, %v760
    %v762 = vtanh.pop %v751
    %v763 = vmul.f32 %v761, %v624
    %765 = vrot.lane.b32.xlu0 %v762, 64
    %v766 = vpop.permute.xlu0 %765
    %v768 = vmul.f32 %v761, %v766
    %770 = vrot.lane.b32.xlu0 %v768, 32
    %v771 = vpop.permute.xlu0 %770
    %v773 = vadd.f32 %v763, %v771
    %v774 = vtanh.pop %v773
    %776 = vrot.lane.b32.xlu0 %v774, 64
    %v777 = vpop.permute.xlu0 %776
    %v779 = vmul.f32 %v761, %v777
    %v780 = vpack.c.bf16 %v702, %v702
    %782 = vrot.lane.b32.xlu0 %v780, 32
    %v783 = vpop.permute.xlu0 %782
    %v785 = vsel %vm300, %v783, 0
    %787 = vmatprep.subr.bf16.mxu0 0
    %788 = vmatpush1.bf16.msra.mxu0 %v296
    %789 = vmatprep.subr.bf16.mxu0 0
    %790 = vmatpush1.bf16.msra.mxu0 %v297
    %791 = vmatprep.subr.bf16.mxu0 0
    %792 = vmatpush1.bf16.msra.mxu0 0
    %793 = vmatprep.subr.bf16.mxu0 0
    %794 = vmatpush1.bf16.msra.mxu0 0
    %795 = vmatprep.subr.bf16.mxu0 0
    %796 = vmatpush1.bf16.msra.mxu0 0
    %797 = vmatprep.subr.bf16.mxu0 0
    %798 = vmatpush1.bf16.msra.mxu0 0
    %799 = vmatprep.subr.bf16.mxu0 0
    %800 = vmatpush1.bf16.msra.mxu0 0
    %801 = vmatprep.subr.bf16.mxu0 0
    %802 = vmatpush1.bf16.msra.mxu0 0
    %803 = vmatprep.subr.bf16.mxu0 0
    %804 = vmatpush1.bf16.msra.mxu0 0
    %805 = vmatprep.subr.bf16.mxu0 0
    %806 = vmatpush1.bf16.msra.mxu0 0
    %807 = vmatprep.subr.bf16.mxu0 0
    %808 = vmatpush1.bf16.msra.mxu0 0
    %809 = vmatprep.subr.bf16.mxu0 0
    %810 = vmatpush1.bf16.msra.mxu0 0
    %811 = vmatprep.subr.bf16.mxu0 0
    %812 = vmatpush1.bf16.msra.mxu0 0
    %813 = vmatprep.subr.bf16.mxu0 0
    %814 = vmatpush1.bf16.msra.mxu0 0
    %815 = vmatprep.subr.bf16.mxu0 0
    %816 = vmatpush1.bf16.msra.mxu0 0
    %817 = vmatprep.subr.bf16.mxu0 0
    %818 = vmatpush1.bf16.msra.mxu0 0
    %819 = vmatprep.mubr.bf16.mxu0 0
    %820 = vmatmul.mubr.bf16.gmra.mrb[0].mxu0 %v785
    %v821 = vpop.f32.mrb[0].mxu0
    %v822 = vadd.f32 0.0, %v821
    %v823 = vpop.f32.mrb[0].mxu0
    %v824 = vpop.f32.mrb[0].mxu0
    %v825 = vpop.f32.mrb[0].mxu0
    %826 = vdwg.mxu0
    %v827 = vadd.f32 %v286, %v822
    %v828 = vxor.u32 %v827, 2147483648
    %v829 = vmul.f32 %v828, 1.442695
    %v830 = vpow.pop %v829
    %v831 = vadd.f32 %v830, 1.0
    %v832 = vrcp.pop %v831
    %v833 = vmul.f32 1.0, %v832
    %v834 = vtanh.pop %v827
    %v835 = vmul.f32 %v833, %v696
    %837 = vrot.lane.b32.xlu0 %v834, 64
    %v838 = vpop.permute.xlu0 %837
    %v840 = vmul.f32 %v833, %v838
    %842 = vrot.lane.b32.xlu0 %v840, 32
    %v843 = vpop.permute.xlu0 %842
    %v845 = vadd.f32 %v835, %v843
    %v846 = vtanh.pop %v845
    %848 = vrot.lane.b32.xlu0 %v846, 64
    %v849 = vpop.permute.xlu0 %848
    %v851 = vmul.f32 %v833, %v849
    %853 = vrot.lane.b32.xlu0 %v851, 32
    %v854 = vpop.permute.xlu0 %853
    %857 = vrot.lane.b32.xlu0 %v779, 64
    %v858 = vpop.permute.xlu0 %857
    %v860 = vsel %vm300, %v854, %v858
    %v861 = vpack.c.bf16 %v860, %v860
    %v863 = vsel %vm191, %v861, 0
    %865 = vmatprep.subr.bf16.mxu0 0
    %866 = vmatpush1.bf16.msra.mxu0 %v403
    %867 = vmatprep.subr.bf16.mxu0 0
    %868 = vmatpush1.bf16.msra.mxu0 %v404
    %869 = vmatprep.subr.bf16.mxu0 0
    %870 = vmatpush1.bf16.msra.mxu0 %v405
    %871 = vmatprep.subr.bf16.mxu0 0
    %872 = vmatpush1.bf16.msra.mxu0 %v406
    %873 = vmatprep.subr.bf16.mxu0 0
    %874 = vmatpush1.bf16.msra.mxu0 0
    %875 = vmatprep.subr.bf16.mxu0 0
    %876 = vmatpush1.bf16.msra.mxu0 0
    %877 = vmatprep.subr.bf16.mxu0 0
    %878 = vmatpush1.bf16.msra.mxu0 0
    %879 = vmatprep.subr.bf16.mxu0 0
    %880 = vmatpush1.bf16.msra.mxu0 0
    %881 = vmatprep.subr.bf16.mxu0 0
    %882 = vmatpush1.bf16.msra.mxu0 0
    %883 = vmatprep.subr.bf16.mxu0 0
    %884 = vmatpush1.bf16.msra.mxu0 0
    %885 = vmatprep.subr.bf16.mxu0 0
    %886 = vmatpush1.bf16.msra.mxu0 0
    %887 = vmatprep.subr.bf16.mxu0 0
    %888 = vmatpush1.bf16.msra.mxu0 0
    %889 = vmatprep.subr.bf16.mxu0 0
    %890 = vmatpush1.bf16.msra.mxu0 0
    %891 = vmatprep.subr.bf16.mxu0 0
    %892 = vmatpush1.bf16.msra.mxu0 0
    %893 = vmatprep.subr.bf16.mxu0 0
    %894 = vmatpush1.bf16.msra.mxu0 0
    %895 = vmatprep.subr.bf16.mxu0 0
    %896 = vmatpush1.bf16.msra.mxu0 0
    %897 = vmatprep.mubr.bf16.mxu0 0
    %898 = vmatmul.mubr.bf16.gmra.mrb[0].mxu0 %v863
    %v899 = vpop.f32.mrb[0].mxu0
    %v900 = vadd.f32 %v386, %v899
    %v901 = vpop.f32.mrb[0].mxu0
    %v902 = vpop.f32.mrb[0].mxu0
    %v903 = vpop.f32.mrb[0].mxu0
    %904 = vdwg.mxu0
    %v905 = vxor.u32 %v900, 2147483648
    %v906 = vmul.f32 %v905, 1.442695
    %v907 = vpow.pop %v906
    %v908 = vadd.f32 %v907, 1.0
    %v909 = vrcp.pop %v908
    %v910 = vmul.f32 1.0, %v909
    %v911 = vtanh.pop %v900
    %v912 = vmul.f32 %v910, %v773
    %914 = vrot.lane.b32.xlu0 %v911, 64
    %v915 = vpop.permute.xlu0 %914
    %v917 = vmul.f32 %v910, %v915
    %919 = vrot.lane.b32.xlu0 %v917, 32
    %v920 = vpop.permute.xlu0 %919
    %v922 = vadd.f32 %v912, %v920
    %v923 = vtanh.pop %v922
    %925 = vrot.lane.b32.xlu0 %v923, 64
    %v926 = vpop.permute.xlu0 %925
    %v928 = vmul.f32 %v910, %v926
    %930 = vrot.lane.b32.xlu0 %v928, 64
    %v931 = vpop.permute.xlu0 %930
    %934 = vrot.lane.b32.xlu0 %v845, 32
    %v935 = vpop.permute.xlu0 %934
    %938 = vrot.lane.b32.xlu0 %v922, 64
    %v939 = vpop.permute.xlu0 %938
    %v941 = vsel %vm300, %v854, %v931
    %v942 = vsel %vm191, %v941, %v935
    %vm943 = vcmask 785408
    %v944 = vsel %vm943, %v942, %v939
    %945 = vst [vmem:[#allocation9] sm:$0xff] %v944
    %v946 = vld [vmem:[%s0] sm:$0xff]
    %v947 = vld [vmem:[%s0 + $0x8] sm:$0xff]
    %v948 = vld [vmem:[%s0 + $0x10] sm:$0xff]
    %v949 = vld [vmem:[%s0 + $0x18] sm:$0xff]
    %v950 = vld [vmem:[%s0 + $0x20] sm:$0xff]
    %v951 = vld [vmem:[%s0 + $0x28] sm:$0xff]
    %v952 = vld [vmem:[%s0 + $0x30] sm:$0xff]
    %v953 = vld [vmem:[%s0 + $0x38] sm:$0xff]
    %v954 = vpack.c.bf16 %v947, %v946
    %v955 = vpack.c.bf16 %v949, %v948
    %v956 = vpack.c.bf16 %v951, %v950
    %v957 = vpack.c.bf16 %v953, %v952
    %v958 = vlaneseq
    %v959 = vshrl.u32 %v958, 7
    %v960 = vsub.s32 0, %v959
    %v961 = vrot.slane %v153, %v960
    %v970 = vunpack.c.l.b16 %v73
    %v971 = vunpack.c.l.b16 %v74
    %v972 = vunpack.c.l.b16 %v75
    %v973 = vunpack.c.l.b16 %v76
    %v974 = vunpack.c.l.b16 %v77
    %v975 = vunpack.c.l.b16 %v78
    %v976 = vunpack.c.l.b16 %v79
    %v977 = vunpack.c.l.b16 %v80
    %v978 = vpack.c.b16 %v971, %v970
    %v979 = vpack.c.b16 %v973, %v972
    %v980 = vpack.c.b16 %v975, %v974
    %v981 = vpack.c.b16 %v977, %v976
    %v987 = vsel %vm191, %v954, 0
    %v990 = vsel %vm191, %v955, 0
    %v993 = vsel %vm191, %v956, 0
    %v996 = vsel %vm191, %v957, 0
    %998 = vmatprep.subr.bf16.mxu0 0
    %999 = vmatpush1.bf16.msra.mxu0 %v978
    %1000 = vmatprep.subr.bf16.mxu0 0
    %1001 = vmatpush1.bf16.msra.mxu0 %v979
    %1002 = vmatprep.subr.bf16.mxu0 0
    %1003 = vmatpush1.bf16.msra.mxu0 %v980
    %1004 = vmatprep.subr.bf16.mxu0 0
    %1005 = vmatpush1.bf16.msra.mxu0 %v981
    %1006 = vmatprep.subr.bf16.mxu0 0
    %1007 = vmatpush1.bf16.msra.mxu0 0
    %1008 = vmatprep.subr.bf16.mxu0 0
    %1009 = vmatpush1.bf16.msra.mxu0 0
    %1010 = vmatprep.subr.bf16.mxu0 0
    %1011 = vmatpush1.bf16.msra.mxu0 0
    %1012 = vmatprep.subr.bf16.mxu0 0
    %1013 = vmatpush1.bf16.msra.mxu0 0
    %1014 = vmatprep.subr.bf16.mxu0 0
    %1015 = vmatpush1.bf16.msra.mxu0 0
    %1016 = vmatprep.subr.bf16.mxu0 0
    %1017 = vmatpush1.bf16.msra.mxu0 0
    %1018 = vmatprep.subr.bf16.mxu0 0
    %1019 = vmatpush1.bf16.msra.mxu0 0
    %1020 = vmatprep.subr.bf16.mxu0 0
    %1021 = vmatpush1.bf16.msra.mxu0 0
    %1022 = vmatprep.subr.bf16.mxu0 0
    %1023 = vmatpush1.bf16.msra.mxu0 0
    %1024 = vmatprep.subr.bf16.mxu0 0
    %1025 = vmatpush1.bf16.msra.mxu0 0
    %1026 = vmatprep.subr.bf16.mxu0 0
    %1027 = vmatpush1.bf16.msra.mxu0 0
    %1028 = vmatprep.subr.bf16.mxu0 0
    %1029 = vmatpush1.bf16.msra.mxu0 0
    %1030 = vmatprep.mubr.bf16.mxu0 0
    %1031 = vmatmul.mubr.bf16.gmra.mrb[0].mxu0 %v987
    %v1032 = vpop.f32.mrb[0].mxu0
    %v1033 = vadd.f32 %v961, %v1032
    %v1034 = vpop.f32.mrb[0].mxu0
    %v1035 = vpop.f32.mrb[0].mxu0
    %v1036 = vadd.f32 %v961, %v1035
    %v1037 = vpop.f32.mrb[0].mxu0
    %1038 = vmatprep.mubr.bf16.mxu0 0
    %1039 = vmatmul.mubr.bf16.gmra.mrb[0].mxu0 %v990
    %v1040 = vpop.f32.mrb[0].mxu0
    %v1041 = vadd.f32 %v961, %v1040
    %v1042 = vpop.f32.mrb[0].mxu0
    %v1043 = vpop.f32.mrb[0].mxu0
    %v1044 = vadd.f32 %v961, %v1043
    %v1045 = vpop.f32.mrb[0].mxu0
    %1046 = vmatprep.mubr.bf16.mxu0 0
    %1047 = vmatmul.mubr.bf16.gmra.mrb[0].mxu0 %v993
    %v1048 = vpop.f32.mrb[0].mxu0
    %v1049 = vadd.f32 %v961, %v1048
    %v1050 = vpop.f32.mrb[0].mxu0
    %v1051 = vpop.f32.mrb[0].mxu0
    %v1052 = vadd.f32 %v961, %v1051
    %v1053 = vpop.f32.mrb[0].mxu0
    %1054 = vmatprep.mubr.bf16.mxu0 0
    %1055 = vmatmul.mubr.bf16.gmra.mrb[0].mxu0 %v996
    %v1056 = vpop.f32.mrb[0].mxu0
    %v1057 = vadd.f32 %v961, %v1056
    %v1058 = vpop.f32.mrb[0].mxu0
    %v1059 = vpop.f32.mrb[0].mxu0
    %v1060 = vadd.f32 %v961, %v1059
    %v1061 = vpop.f32.mrb[0].mxu0
    %1062 = vdwg.mxu0
    %v1063 = vld [vmem:[%s4] sm:$0xff]
    %v1064 = vld [vmem:[%s4 + $0x8] sm:$0xff]
    %v1065 = vld [vmem:[%s4 + $0x10] sm:$0xff]
    %v1066 = vld [vmem:[%s4 + $0x18] sm:$0xff]
    %v1067 = vld [vmem:[%s4 + $0x20] sm:$0xff]
    %v1068 = vld [vmem:[%s4 + $0x28] sm:$0xff]
    %v1069 = vld [vmem:[%s4 + $0x30] sm:$0xff]
    %v1070 = vld [vmem:[%s4 + $0x38] sm:$0xff]
    %v1071 = vld [vmem:[%s2] sm:$0xff]
    %v1072 = vld [vmem:[%s2 + $0x8] sm:$0xff]
    %v1073 = vld [vmem:[%s2 + $0x10] sm:$0xff]
    %v1074 = vld [vmem:[%s2 + $0x18] sm:$0xff]
    %v1075 = vld [vmem:[%s2 + $0x20] sm:$0xff]
    %v1076 = vld [vmem:[%s2 + $0x28] sm:$0xff]
    %v1077 = vld [vmem:[%s2 + $0x30] sm:$0xff]
    %v1078 = vld [vmem:[%s2 + $0x38] sm:$0xff]
    %v1079 = vlaneseq
    %v1080 = vand.u32 %v1079, 127
    %1081 = vset.pattern.permute.xlu0 0
    %1082 = vperm.xlu0 %1081, %v1071
    %v1083 = vpop.permute.xlu0 %1082
    %1084 = vset.pattern.permute.xlu0 0
    %1085 = vperm.xlu0 %1084, %v1072
    %v1086 = vpop.permute.xlu0 %1085
    %1087 = vset.pattern.permute.xlu0 0
    %1088 = vperm.xlu0 %1087, %v1073
    %v1089 = vpop.permute.xlu0 %1088
    %1090 = vset.pattern.permute.xlu0 0
    %1091 = vperm.xlu0 %1090, %v1074
    %v1092 = vpop.permute.xlu0 %1091
    %1093 = vset.pattern.permute.xlu0 0
    %1094 = vperm.xlu0 %1093, %v1075
    %v1095 = vpop.permute.xlu0 %1094
    %1096 = vset.pattern.permute.xlu0 0
    %1097 = vperm.xlu0 %1096, %v1076
    %v1098 = vpop.permute.xlu0 %1097
    %1099 = vset.pattern.permute.xlu0 0
    %1100 = vperm.xlu0 %1099, %v1077
    %v1101 = vpop.permute.xlu0 %1100
    %1102 = vset.pattern.permute.xlu0 0
    %1103 = vperm.xlu0 %1102, %v1078
    %v1104 = vpop.permute.xlu0 %1103
    %vm1105 = vcmp.eq.s32.totalorder %v1080, %v1083
    %vm1106 = vcmp.eq.s32.totalorder %v1080, %v1086
    %vm1107 = vcmp.eq.s32.totalorder %v1080, %v1089
    %vm1108 = vcmp.eq.s32.totalorder %v1080, %v1092
    %vm1109 = vcmp.eq.s32.totalorder %v1080, %v1095
    %vm1110 = vcmp.eq.s32.totalorder %v1080, %v1098
    %vm1111 = vcmp.eq.s32.totalorder %v1080, %v1101
    %vm1112 = vcmp.eq.s32.totalorder %v1080, %v1104
    %vm1113 = vcmp.ne.s32.totalorder %v1071, 1
    %vm1114 = vcmp.ne.s32.totalorder %v1072, 1
    %vm1115 = vcmp.ne.s32.totalorder %v1073, 1
    %vm1116 = vcmp.ne.s32.totalorder %v1074, 1
    %vm1117 = vcmp.ne.s32.totalorder %v1075, 1
    %vm1118 = vcmp.ne.s32.totalorder %v1076, 1
    %vm1119 = vcmp.ne.s32.totalorder %v1077, 1
    %vm1120 = vcmp.ne.s32.totalorder %v1078, 1
    %v1121 = vsel %vm1113, 1, 0
    %v1122 = vsel %vm1114, 1, 0
    %v1123 = vsel %vm1115, 1, 0
    %v1124 = vsel %vm1116, 1, 0
    %v1125 = vsel %vm1117, 1, 0
    %v1126 = vsel %vm1118, 1, 0
    %v1127 = vsel %vm1119, 1, 0
    %v1128 = vsel %vm1120, 1, 0
    %1129 = vset.pattern.permute.xlu0 0
    %1130 = vperm.xlu0 %1129, %v1121
    %v1131 = vpop.permute.xlu0 %1130
    %1132 = vset.pattern.permute.xlu0 0
    %1133 = vperm.xlu0 %1132, %v1122
    %v1134 = vpop.permute.xlu0 %1133
    %1135 = vset.pattern.permute.xlu0 0
    %1136 = vperm.xlu0 %1135, %v1123
    %v1137 = vpop.permute.xlu0 %1136
    %1138 = vset.pattern.permute.xlu0 0
    %1139 = vperm.xlu0 %1138, %v1124
    %v1140 = vpop.permute.xlu0 %1139
    %1141 = vset.pattern.permute.xlu0 0
    %1142 = vperm.xlu0 %1141, %v1125
    %v1143 = vpop.permute.xlu0 %1142
    %1144 = vset.pattern.permute.xlu0 0
    %1145 = vperm.xlu0 %1144, %v1126
    %v1146 = vpop.permute.xlu0 %1145
    %1147 = vset.pattern.permute.xlu0 0
    %1148 = vperm.xlu0 %1147, %v1127
    %v1149 = vpop.permute.xlu0 %1148
    %1150 = vset.pattern.permute.xlu0 0
    %1151 = vperm.xlu0 %1150, %v1128
    %v1152 = vpop.permute.xlu0 %1151
    %vm1153 = vcmp.eq.s32.totalorder %v1131, 1
    %vm1154 = vcmp.eq.s32.totalorder %v1134, 1
    %vm1155 = vcmp.eq.s32.totalorder %v1137, 1
    %vm1156 = vcmp.eq.s32.totalorder %v1140, 1
    %vm1157 = vcmp.eq.s32.totalorder %v1143, 1
    %vm1158 = vcmp.eq.s32.totalorder %v1146, 1
    %vm1159 = vcmp.eq.s32.totalorder %v1149, 1
    %vm1160 = vcmp.eq.s32.totalorder %v1152, 1
    %vm1161 = vmand %vm1105, %vm1153
    %vm1162 = vmand %vm1106, %vm1154
    %vm1163 = vmand %vm1107, %vm1155
    %vm1164 = vmand %vm1108, %vm1156
    %vm1165 = vmand %vm1109, %vm1157
    %vm1166 = vmand %vm1110, %vm1158
    %vm1167 = vmand %vm1111, %vm1159
    %vm1168 = vmand %vm1112, %vm1160
    %v1169 = vsel %vm1161, 1.0, 0.0
    %v1170 = vsel %vm1162, 1.0, 0.0
    %v1171 = vsel %vm1163, 1.0, 0.0
    %v1172 = vsel %vm1164, 1.0, 0.0
    %v1173 = vsel %vm1165, 1.0, 0.0
    %v1174 = vsel %vm1166, 1.0, 0.0
    %v1175 = vsel %vm1167, 1.0, 0.0
    %v1176 = vsel %vm1168, 1.0, 0.0
    %1177 = vst [vmem:[#allocation2] sm:$0xff] %v1169
    %1178 = vst [vmem:[#allocation2 + $0x8] sm:$0xff] %v1170
    %1179 = vst [vmem:[#allocation2 + $0x10] sm:$0xff] %v1171
    %1180 = vst [vmem:[#allocation2 + $0x18] sm:$0xff] %v1172
    %1181 = vst [vmem:[#allocation2 + $0x20] sm:$0xff] %v1173
    %1182 = vst [vmem:[#allocation2 + $0x28] sm:$0xff] %v1174
    %1183 = vst [vmem:[#allocation2 + $0x30] sm:$0xff] %v1175
    %1184 = vst [vmem:[#allocation2 + $0x38] sm:$0xff] %v1176
    %s1185 = sld [smem:[#allocation7]]
    %s1186 = sld [smem:[#allocation7 + $0x1]]
    %v1187 = vstv %s1185
    %v1188 = vmul.f32 %v247, %v1187
    %v1189 = vmul.f32 %v248, %v1187
    %v1190 = vmul.f32 %v249, %v1187
    %v1191 = vmul.f32 %v250, %v1187
    %v1192 = vstv %s1186
    %v1193 = vadd.f32 %v1188, %v1192
    %v1194 = vadd.f32 %v1189, %v1192
    %v1195 = vadd.f32 %v1190, %v1192
    %v1196 = vadd.f32 %v1191, %v1192
    %v1197 = vpack.c.bf16 %v481, %v481
    %1199 = vrot.lane.b32.xlu0 %v1197, 32
    %v1200 = vpop.permute.xlu0 %1199
    %v1205 = vunpack.c.l.b16 %v81
    %v1206 = vunpack.c.l.b16 %v82
    %v1207 = vunpack.c.l.b16 %v83
    %v1208 = vunpack.c.l.b16 %v84
    %v1209 = vpack.c.b16 %v1206, %v1205
    %v1210 = vpack.c.b16 %v1208, %v1207
    %v1214 = vsel %vm300, %v1200, 0
    %1216 = vmatprep.subr.bf16.mxu0 0
    %1217 = vmatpush1.bf16.msra.mxu0 %v1209
    %1218 = vmatprep.subr.bf16.mxu0 0
    %1219 = vmatpush1.bf16.msra.mxu0 %v1210
    %1220 = vmatprep.subr.bf16.mxu0 0
    %1221 = vmatpush1.bf16.msra.mxu0 0
    %1222 = vmatprep.subr.bf16.mxu0 0
    %1223 = vmatpush1.bf16.msra.mxu0 0
    %1224 = vmatprep.subr.bf16.mxu0 0
    %1225 = vmatpush1.bf16.msra.mxu0 0
    %1226 = vmatprep.subr.bf16.mxu0 0
    %1227 = vmatpush1.bf16.msra.mxu0 0
    %1228 = vmatprep.subr.bf16.mxu0 0
    %1229 = vmatpush1.bf16.msra.mxu0 0
    %1230 = vmatprep.subr.bf16.mxu0 0
    %1231 = vmatpush1.bf16.msra.mxu0 0
    %1232 = vmatprep.subr.bf16.mxu0 0
    %1233 = vmatpush1.bf16.msra.mxu0 0
    %1234 = vmatprep.subr.bf16.mxu0 0
    %1235 = vmatpush1.bf16.msra.mxu0 0
    %1236 = vmatprep.subr.bf16.mxu0 0
    %1237 = vmatpush1.bf16.msra.mxu0 0
    %1238 = vmatprep.subr.bf16.mxu0 0
    %1239 = vmatpush1.bf16.msra.mxu0 0
    %1240 = vmatprep.subr.bf16.mxu0 0
    %1241 = vmatpush1.bf16.msra.mxu0 0
    %1242 = vmatprep.subr.bf16.mxu0 0
    %1243 = vmatpush1.bf16.msra.mxu0 0
    %1244 = vmatprep.subr.bf16.mxu0 0
    %1245 = vmatpush1.bf16.msra.mxu0 0
    %1246 = vmatprep.subr.bf16.mxu0 0
    %1247 = vmatpush1.bf16.msra.mxu0 0
    %1248 = vmatprep.mubr.bf16.mxu0 0
    %1249 = vmatmul.mubr.bf16.gmra.mrb[0].mxu0 %v1214
    %v1250 = vpop.f32.mrb[0].mxu0
    %v1251 = vadd.f32 0.0, %v1250
    %v1252 = vpop.f32.mrb[0].mxu0
    %v1253 = vpop.f32.mrb[0].mxu0
    %v1254 = vpop.f32.mrb[0].mxu0
    %1255 = vdwg.mxu0
    %v1256 = vadd.f32 %v1033, %v1251
    %v1257 = vadd.f32 %v1036, %v1251
    %v1258 = vadd.f32 %v1041, %v1251
    %v1259 = vadd.f32 %v1044, %v1251
    %v1260 = vadd.f32 %v1049, %v1251
    %v1261 = vadd.f32 %v1052, %v1251
    %v1262 = vadd.f32 %v1057, %v1251
    %v1263 = vadd.f32 %v1060, %v1251
    %v1264 = vlaneseq
    %v1265 = vshrl.u32 %v1264, 7
    %v1266 = vsub.s32 0, %v1265
    %v1267 = vrot.slane %v152, %v1266
    %v1268 = vmul.f32 %v1267, 0.0
    %v1269 = vadd.f32 %v1256, %v1268
    %v1270 = vadd.f32 %v1257, %v1268
    %v1271 = vadd.f32 %v1258, %v1268
    %v1272 = vadd.f32 %v1259, %v1268
    %v1273 = vadd.f32 %v1260, %v1268
    %v1274 = vadd.f32 %v1261, %v1268
    %v1275 = vadd.f32 %v1262, %v1268
    %v1276 = vadd.f32 %v1263, %v1268
    %v1277 = vtanh.pop %v1269
    %v1278 = vtanh.pop %v1270
    %v1279 = vtanh.pop %v1271
    %v1280 = vtanh.pop %v1272
    %v1281 = vtanh.pop %v1273
    %v1282 = vtanh.pop %v1274
    %v1283 = vtanh.pop %v1275
    %v1284 = vtanh.pop %v1276
    %v1285 = vpack.c.bf16 %v1278, %v1277
    %v1286 = vpack.c.bf16 %v1280, %v1279
    %v1287 = vpack.c.bf16 %v1282, %v1281
    %v1288 = vpack.c.bf16 %v1284, %v1283
    %v1305 = vunpack.c.l.b16 %v121
    %v1306 = vunpack.c.l.b16 %v122
    %v1307 = vunpack.c.l.b16 %v123
    %v1308 = vunpack.c.l.b16 %v124
    %v1309 = vunpack.c.l.b16 %v125
    %v1310 = vunpack.c.l.b16 %v126
    %v1311 = vunpack.c.l.b16 %v127
    %v1312 = vunpack.c.l.b16 %v128
    %v1313 = vunpack.c.l.b16 %v129
    %v1314 = vunpack.c.l.b16 %v130
    %v1315 = vunpack.c.l.b16 %v131
    %v1316 = vunpack.c.l.b16 %v132
    %v1317 = vunpack.c.l.b16 %v133
    %v1318 = vunpack.c.l.b16 %v134
    %v1319 = vunpack.c.l.b16 %v135
    %v1320 = vunpack.c.l.b16 %v136
    %v1321 = vpack.c.b16 %v1306, %v1305
    %v1322 = vpack.c.b16 %v1308, %v1307
    %v1323 = vpack.c.b16 %v1310, %v1309
    %v1324 = vpack.c.b16 %v1312, %v1311
    %v1325 = vpack.c.b16 %v1314, %v1313
    %v1326 = vpack.c.b16 %v1316, %v1315
    %v1327 = vpack.c.b16 %v1318, %v1317
    %v1328 = vpack.c.b16 %v1320, %v1319
    %1337 = vmatprep.subr.bf16.mxu0 0
    %1338 = vmatpush1.bf16.msra.mxu0 %v1321
    %1339 = vmatprep.subr.bf16.mxu0 0
    %1340 = vmatpush1.bf16.msra.mxu0 %v1322
    %1341 = vmatprep.subr.bf16.mxu0 0
    %1342 = vmatpush1.bf16.msra.mxu0 %v1323
    %1343 = vmatprep.subr.bf16.mxu0 0
    %1344 = vmatpush1.bf16.msra.mxu0 %v1324
    %1345 = vmatprep.subr.bf16.mxu0 0
    %1346 = vmatpush1.bf16.msra.mxu0 %v1325
    %1347 = vmatprep.subr.bf16.mxu0 0
    %1348 = vmatpush1.bf16.msra.mxu0 %v1326
    %1349 = vmatprep.subr.bf16.mxu0 0
    %1350 = vmatpush1.bf16.msra.mxu0 %v1327
    %1351 = vmatprep.subr.bf16.mxu0 0
    %1352 = vmatpush1.bf16.msra.mxu0 %v1328
    %1353 = vmatprep.subr.bf16.mxu0 0
    %1354 = vmatpush1.bf16.msra.mxu0 0
    %1355 = vmatprep.subr.bf16.mxu0 0
    %1356 = vmatpush1.bf16.msra.mxu0 0
    %1357 = vmatprep.subr.bf16.mxu0 0
    %1358 = vmatpush1.bf16.msra.mxu0 0
    %1359 = vmatprep.subr.bf16.mxu0 0
    %1360 = vmatpush1.bf16.msra.mxu0 0
    %1361 = vmatprep.subr.bf16.mxu0 0
    %1362 = vmatpush1.bf16.msra.mxu0 0
    %1363 = vmatprep.subr.bf16.mxu0 0
    %1364 = vmatpush1.bf16.msra.mxu0 0
    %1365 = vmatprep.subr.bf16.mxu0 0
    %1366 = vmatpush1.bf16.msra.mxu0 0
    %1367 = vmatprep.subr.bf16.mxu0 0
    %1368 = vmatpush1.bf16.msra.mxu0 0
    %1369 = vmatprep.mubr.bf16.mxu0 0
    %1370 = vmatmul.mubr.bf16.gmra.mrb[0].mxu0 %v1285
    %v1371 = vpop.f32.mrb[0].mxu0
    %v1372 = vadd.f32 0.0, %v1371
    %v1373 = vpop.f32.mrb[0].mxu0
    %v1374 = vpop.f32.mrb[0].mxu0
    %v1375 = vadd.f32 0.0, %v1374
    %v1376 = vpop.f32.mrb[0].mxu0
    %1377 = vmatprep.mubr.bf16.mxu0 0
    %1378 = vmatmul.mubr.bf16.gmra.mrb[0].mxu0 %v1286
    %v1379 = vpop.f32.mrb[0].mxu0
    %v1380 = vadd.f32 0.0, %v1379
    %v1381 = vpop.f32.mrb[0].mxu0
    %v1382 = vpop.f32.mrb[0].mxu0
    %v1383 = vadd.f32 0.0, %v1382
    %v1384 = vpop.f32.mrb[0].mxu0
    %1385 = vmatprep.mubr.bf16.mxu0 0
    %1386 = vmatmul.mubr.bf16.gmra.mrb[0].mxu0 %v1287
    %v1387 = vpop.f32.mrb[0].mxu0
    %v1388 = vadd.f32 0.0, %v1387
    %v1389 = vpop.f32.mrb[0].mxu0
    %v1390 = vpop.f32.mrb[0].mxu0
    %v1391 = vadd.f32 0.0, %v1390
    %v1392 = vpop.f32.mrb[0].mxu0
    %1393 = vmatprep.mubr.bf16.mxu0 0
    %1394 = vmatmul.mubr.bf16.gmra.mrb[0].mxu0 %v1288
    %v1395 = vpop.f32.mrb[0].mxu0
    %v1396 = vadd.f32 0.0, %v1395
    %v1397 = vpop.f32.mrb[0].mxu0
    %v1398 = vpop.f32.mrb[0].mxu0
    %v1399 = vadd.f32 0.0, %v1398
    %v1400 = vpop.f32.mrb[0].mxu0
    %1401 = vdwg.mxu0
    %v1402 = vadd.f32 %v1372, %v1063
    %v1403 = vadd.f32 %v1375, %v1064
    %v1404 = vadd.f32 %v1380, %v1065
    %v1405 = vadd.f32 %v1383, %v1066
    %v1406 = vadd.f32 %v1388, %v1067
    %v1407 = vadd.f32 %v1391, %v1068
    %v1408 = vadd.f32 %v1396, %v1069
    %v1409 = vadd.f32 %v1399, %v1070
    %vm1410 = vcmask 7168
    %v1411 = vsel %vm1410, %v1402, -inf
    %v1412 = vsel %vm1410, %v1403, -inf
    %v1413 = vsel %vm1410, %v1404, -inf
    %v1414 = vsel %vm1410, %v1405, -inf
    %v1415 = vsel %vm1410, %v1406, -inf
    %v1416 = vmax.f32 %v1411, %v1415
    %v1417 = vsel %vm1410, %v1407, -inf
    %v1418 = vmax.f32 %v1412, %v1417
    %v1419 = vsel %vm1410, %v1408, -inf
    %v1420 = vmax.f32 %v1413, %v1419
    %v1421 = vsel %vm1410, %v1409, -inf
    %v1422 = vmax.f32 %v1414, %v1421
    %v1423 = vmax.f32 %v1416, %v1418
    %v1424 = vmax.f32 %v1420, %v1422
    %v1425 = vmax.f32 %v1423, %v1424
    %v1426 = vsub.f32 %v1402, %v1425
    %v1427 = vsub.f32 %v1403, %v1425
    %v1428 = vsub.f32 %v1404, %v1425
    %v1429 = vsub.f32 %v1405, %v1425
    %v1430 = vsub.f32 %v1406, %v1425
    %v1431 = vsub.f32 %v1407, %v1425
    %v1432 = vsub.f32 %v1408, %v1425
    %v1433 = vsub.f32 %v1409, %v1425
    %v1434 = vmul.f32 %v1426, 1.442695
    %v1435 = vpow.pop %v1434
    %v1436 = vmul.f32 %v1427, 1.442695
    %v1437 = vpow.pop %v1436
    %v1438 = vmul.f32 %v1428, 1.442695
    %v1439 = vpow.pop %v1438
    %v1440 = vmul.f32 %v1429, 1.442695
    %v1441 = vpow.pop %v1440
    %v1442 = vmul.f32 %v1430, 1.442695
    %v1443 = vpow.pop %v1442
    %v1444 = vmul.f32 %v1431, 1.442695
    %v1445 = vpow.pop %v1444
    %v1446 = vmul.f32 %v1432, 1.442695
    %v1447 = vpow.pop %v1446
    %v1448 = vmul.f32 %v1433, 1.442695
    %v1449 = vpow.pop %v1448
    %v1450 = vsel %vm1410, %v1435, 0.0
    %v1451 = vsel %vm1410, %v1437, 0.0
    %v1452 = vadd.f32 %v1450, %v1451
    %v1453 = vsel %vm1410, %v1439, 0.0
    %v1454 = vadd.f32 %v1452, %v1453
    %v1455 = vsel %vm1410, %v1441, 0.0
    %v1456 = vadd.f32 %v1454, %v1455
    %v1457 = vsel %vm1410, %v1443, 0.0
    %v1458 = vadd.f32 %v1456, %v1457
    %v1459 = vsel %vm1410, %v1445, 0.0
    %v1460 = vadd.f32 %v1458, %v1459
    %v1461 = vsel %vm1410, %v1447, 0.0
    %v1462 = vadd.f32 %v1460, %v1461
    %v1463 = vsel %vm1410, %v1449, 0.0
    %v1464 = vadd.f32 %v1462, %v1463
    %v1465 = vrcp.pop %v1464
    %v1466 = vmul.f32 %v1435, %v1465
    %v1467 = vmul.f32 %v1437, %v1465
    %v1468 = vmul.f32 %v1439, %v1465
    %v1469 = vmul.f32 %v1441, %v1465
    %v1470 = vmul.f32 %v1443, %v1465
    %v1471 = vmul.f32 %v1445, %v1465
    %v1472 = vmul.f32 %v1447, %v1465
    %v1473 = vmul.f32 %v1449, %v1465
    %v1474 = vmin.f32 %v1466, 0.0
    %v1475 = vmin.f32 %v1467, 0.0
    %v1476 = vmin.f32 %v1468, 0.0
    %v1477 = vmin.f32 %v1469, 0.0
    %v1478 = vmin.f32 %v1470, 0.0
    %v1479 = vmin.f32 %v1471, 0.0
    %v1480 = vmin.f32 %v1472, 0.0
    %v1481 = vmin.f32 %v1473, 0.0
    %v1482 = vsel %vm1410, %v1474, 0.0
    %v1483 = vsel %vm1410, %v1475, 0.0
    %v1484 = vadd.f32 %v1482, %v1483
    %v1485 = vsel %vm1410, %v1476, 0.0
    %v1486 = vadd.f32 %v1484, %v1485
    %v1487 = vsel %vm1410, %v1477, 0.0
    %v1488 = vadd.f32 %v1486, %v1487
    %v1489 = vsel %vm1410, %v1478, 0.0
    %v1490 = vadd.f32 %v1488, %v1489
    %v1491 = vsel %vm1410, %v1479, 0.0
    %v1492 = vadd.f32 %v1490, %v1491
    %v1493 = vsel %vm1410, %v1480, 0.0
    %v1494 = vadd.f32 %v1492, %v1493
    %v1495 = vsel %vm1410, %v1481, 0.0
    %v1496 = vadd.f32 %v1494, %v1495
    %v1497 = vadd.f32 %v1466, 0.0
    %v1498 = vadd.f32 %v1467, 0.0
    %v1499 = vadd.f32 %v1468, 0.0
    %v1500 = vadd.f32 %v1469, 0.0
    %v1501 = vadd.f32 %v1470, 0.0
    %v1502 = vadd.f32 %v1471, 0.0
    %v1503 = vadd.f32 %v1472, 0.0
    %v1504 = vadd.f32 %v1473, 0.0
    %1506 = vset.pattern.permute.xlu0 0
    %1507 = vperm.xlu0 %1506, %v1466
    %v1508 = vpop.permute.xlu0 %1507
    %1511 = vset.pattern.permute.xlu0 0
    %1512 = vperm.xlu0 %1511, %v1467
    %v1513 = vpop.permute.xlu0 %1512
    %1516 = vset.pattern.permute.xlu0 0
    %1517 = vperm.xlu0 %1516, %v1468
    %v1518 = vpop.permute.xlu0 %1517
    %1521 = vset.pattern.permute.xlu0 0
    %1522 = vperm.xlu0 %1521, %v1469
    %v1523 = vpop.permute.xlu0 %1522
    %1526 = vset.pattern.permute.xlu0 0
    %1527 = vperm.xlu0 %1526, %v1470
    %v1528 = vpop.permute.xlu0 %1527
    %1531 = vset.pattern.permute.xlu0 0
    %1532 = vperm.xlu0 %1531, %v1471
    %v1533 = vpop.permute.xlu0 %1532
    %1536 = vset.pattern.permute.xlu0 0
    %1537 = vperm.xlu0 %1536, %v1472
    %v1538 = vpop.permute.xlu0 %1537
    %1541 = vset.pattern.permute.xlu0 0
    %1542 = vperm.xlu0 %1541, %v1473
    %v1543 = vpop.permute.xlu0 %1542
    %v1545 = vmul.f32 %v1508, %v946
    %v1546 = vmul.f32 %v1513, %v947
    %v1547 = vmul.f32 %v1518, %v948
    %v1548 = vmul.f32 %v1523, %v949
    %v1549 = vmul.f32 %v1528, %v950
    %v1550 = vmul.f32 %v1533, %v951
    %v1551 = vmul.f32 %v1538, %v952
    %v1552 = vmul.f32 %v1543, %v953
    %v1553 = vsel %vm191, %v1545, 0.0
    %v1554 = vsel %vm191, %v1546, 0.0
    %v1555 = vadd.f32 %v1553, %v1554
    %v1556 = vsel %vm191, %v1547, 0.0
    %v1557 = vadd.f32 %v1555, %v1556
    %v1558 = vsel %vm191, %v1548, 0.0
    %v1559 = vadd.f32 %v1557, %v1558
    %v1560 = vsel %vm191, %v1549, 0.0
    %v1561 = vadd.f32 %v1559, %v1560
    %v1562 = vsel %vm191, %v1550, 0.0
    %v1563 = vadd.f32 %v1561, %v1562
    %v1564 = vsel %vm191, %v1551, 0.0
    %v1565 = vadd.f32 %v1563, %v1564
    %v1566 = vsel %vm191, %v1552, 0.0
    %v1567 = vadd.f32 %v1565, %v1566
    %1568 = vrot.lane.b32.xlu0 %v481, 32
    %v1569 = vpop.permute.xlu0 %1568
    %1572 = vrot.lane.b32.xlu0 %v1567, 32
    %v1573 = vpop.permute.xlu0 %1572
    %v1575 = vsel %vm300, %v1569, %v1573
    %v1576 = vpack.c.bf16 %v1575, %v1575
    %v1589 = vunpack.c.l.b16 %v137
    %v1590 = vunpack.c.l.b16 %v138
    %v1591 = vunpack.c.l.b16 %v139
    %v1592 = vunpack.c.l.b16 %v140
    %v1593 = vunpack.c.l.b16 %v141
    %v1594 = vunpack.c.l.b16 %v142
    %v1595 = vunpack.c.l.b16 %v143
    %v1596 = vunpack.c.l.b16 %v144
    %v1597 = vunpack.c.l.b16 %v145
    %v1598 = vunpack.c.l.b16 %v146
    %v1599 = vunpack.c.l.b16 %v147
    %v1600 = vunpack.c.l.b16 %v148
    %v1601 = vpack.c.b16 %v1590, %v1589
    %v1602 = vpack.c.b16 %v1592, %v1591
    %v1603 = vpack.c.b16 %v1594, %v1593
    %v1604 = vpack.c.b16 %v1596, %v1595
    %v1605 = vpack.c.b16 %v1598, %v1597
    %v1606 = vpack.c.b16 %v1600, %v1599
    %v1614 = vsel %vm943, %v1576, 0
    %1616 = vmatprep.subr.bf16.mxu0 0
    %1617 = vmatpush1.bf16.msra.mxu0 %v1601
    %1618 = vmatprep.subr.bf16.mxu0 0
    %1619 = vmatpush1.bf16.msra.mxu0 %v1602
    %1620 = vmatprep.subr.bf16.mxu0 0
    %1621 = vmatpush1.bf16.msra.mxu0 %v1603
    %1622 = vmatprep.subr.bf16.mxu0 0
    %1623 = vmatpush1.bf16.msra.mxu0 %v1604
    %1624 = vmatprep.subr.bf16.mxu0 0
    %1625 = vmatpush1.bf16.msra.mxu0 %v1605
    %1626 = vmatprep.subr.bf16.mxu0 0
    %1627 = vmatpush1.bf16.msra.mxu0 %v1606
    %1628 = vmatprep.subr.bf16.mxu0 0
    %1629 = vmatpush1.bf16.msra.mxu0 0
    %1630 = vmatprep.subr.bf16.mxu0 0
    %1631 = vmatpush1.bf16.msra.mxu0 0
    %1632 = vmatprep.subr.bf16.mxu0 0
    %1633 = vmatpush1.bf16.msra.mxu0 0
    %1634 = vmatprep.subr.bf16.mxu0 0
    %1635 = vmatpush1.bf16.msra.mxu0 0
    %1636 = vmatprep.subr.bf16.mxu0 0
    %1637 = vmatpush1.bf16.msra.mxu0 0
    %1638 = vmatprep.subr.bf16.mxu0 0
    %1639 = vmatpush1.bf16.msra.mxu0 0
    %1640 = vmatprep.subr.bf16.mxu0 0
    %1641 = vmatpush1.bf16.msra.mxu0 0
    %1642 = vmatprep.subr.bf16.mxu0 0
    %1643 = vmatpush1.bf16.msra.mxu0 0
    %1644 = vmatprep.subr.bf16.mxu0 0
    %1645 = vmatpush1.bf16.msra.mxu0 0
    %1646 = vmatprep.subr.bf16.mxu0 0
    %1647 = vmatpush1.bf16.msra.mxu0 0
    %1648 = vmatprep.mubr.bf16.mxu0 0
    %1649 = vmatmul.mubr.bf16.gmra.mrb[0].mxu0 %v1614
    %v1650 = vpop.f32.mrb[0].mxu0
    %v1651 = vadd.f32 %v1193, %v1650
    %v1652 = vpop.f32.mrb[0].mxu0
    %v1653 = vpop.f32.mrb[0].mxu0
    %v1654 = vpop.f32.mrb[0].mxu0
    %1655 = vdwg.mxu0
    %v1656 = vxor.u32 %v1651, 2147483648
    %v1657 = vmul.f32 %v1656, 1.442695
    %v1658 = vpow.pop %v1657
    %v1659 = vadd.f32 %v1658, 1.0
    %v1660 = vrcp.pop %v1659
    %v1661 = vmul.f32 1.0, %v1660
    %v1662 = vlaneseq
    %v1663 = vshrl.u32 %v1662, 7
    %v1664 = vsub.s32 0, %v1663
    %v1665 = vrot.slane %v154, %v1664
    %v1678 = vunpack.c.l.b16 %v85
    %v1679 = vunpack.c.l.b16 %v86
    %v1680 = vunpack.c.l.b16 %v87
    %v1681 = vunpack.c.l.b16 %v88
    %v1682 = vunpack.c.l.b16 %v89
    %v1683 = vunpack.c.l.b16 %v90
    %v1684 = vunpack.c.l.b16 %v91
    %v1685 = vunpack.c.l.b16 %v92
    %v1686 = vunpack.c.l.b16 %v93
    %v1687 = vunpack.c.l.b16 %v94
    %v1688 = vunpack.c.l.b16 %v95
    %v1689 = vunpack.c.l.b16 %v96
    %v1690 = vpack.c.b16 %v1679, %v1678
    %v1691 = vpack.c.b16 %v1681, %v1680
    %v1692 = vpack.c.b16 %v1683, %v1682
    %v1693 = vpack.c.b16 %v1685, %v1684
    %v1694 = vpack.c.b16 %v1687, %v1686
    %v1695 = vpack.c.b16 %v1689, %v1688
    %1702 = vmatprep.subr.bf16.mxu0 0
    %1703 = vmatpush1.bf16.msra.mxu0 %v1690
    %1704 = vmatprep.subr.bf16.mxu0 0
    %1705 = vmatpush1.bf16.msra.mxu0 %v1691
    %1706 = vmatprep.subr.bf16.mxu0 0
    %1707 = vmatpush1.bf16.msra.mxu0 %v1692
    %1708 = vmatprep.subr.bf16.mxu0 0
    %1709 = vmatpush1.bf16.msra.mxu0 %v1693
    %1710 = vmatprep.subr.bf16.mxu0 0
    %1711 = vmatpush1.bf16.msra.mxu0 %v1694
    %1712 = vmatprep.subr.bf16.mxu0 0
    %1713 = vmatpush1.bf16.msra.mxu0 %v1695
    %1714 = vmatprep.subr.bf16.mxu0 0
    %1715 = vmatpush1.bf16.msra.mxu0 0
    %1716 = vmatprep.subr.bf16.mxu0 0
    %1717 = vmatpush1.bf16.msra.mxu0 0
    %1718 = vmatprep.subr.bf16.mxu0 0
    %1719 = vmatpush1.bf16.msra.mxu0 0
    %1720 = vmatprep.subr.bf16.mxu0 0
    %1721 = vmatpush1.bf16.msra.mxu0 0
    %1722 = vmatprep.subr.bf16.mxu0 0
    %1723 = vmatpush1.bf16.msra.mxu0 0
    %1724 = vmatprep.subr.bf16.mxu0 0
    %1725 = vmatpush1.bf16.msra.mxu0 0
    %1726 = vmatprep.subr.bf16.mxu0 0
    %1727 = vmatpush1.bf16.msra.mxu0 0
    %1728 = vmatprep.subr.bf16.mxu0 0
    %1729 = vmatpush1.bf16.msra.mxu0 0
    %1730 = vmatprep.subr.bf16.mxu0 0
    %1731 = vmatpush1.bf16.msra.mxu0 0
    %1732 = vmatprep.subr.bf16.mxu0 0
    %1733 = vmatpush1.bf16.msra.mxu0 0
    %1734 = vmatprep.mubr.bf16.mxu0 0
    %1735 = vmatmul.mubr.bf16.gmra.mrb[0].mxu0 %v1614
    %v1736 = vpop.f32.mrb[0].mxu0
    %v1737 = vadd.f32 %v1665, %v1736
    %v1738 = vpop.f32.mrb[0].mxu0
    %v1739 = vpop.f32.mrb[0].mxu0
    %v1740 = vpop.f32.mrb[0].mxu0
    %1741 = vdwg.mxu0
    %v1742 = vpack.c.bf16 %v1737, %v1737
    %v1743 = vlaneseq
    %v1744 = vshrl.u32 %v1743, 7
    %v1745 = vsub.s32 0, %v1744
    %v1746 = vrot.slane %v155, %v1745
    %v1763 = vunpack.c.l.b16 %v97
    %v1764 = vunpack.c.l.b16 %v98
    %v1765 = vunpack.c.l.b16 %v99
    %v1766 = vunpack.c.l.b16 %v100
    %v1767 = vunpack.c.l.b16 %v101
    %v1768 = vunpack.c.l.b16 %v102
    %v1769 = vunpack.c.l.b16 %v103
    %v1770 = vunpack.c.l.b16 %v104
    %v1771 = vunpack.c.l.b16 %v105
    %v1772 = vunpack.c.l.b16 %v106
    %v1773 = vunpack.c.l.b16 %v107
    %v1774 = vunpack.c.l.b16 %v108
    %v1775 = vunpack.c.l.b16 %v109
    %v1776 = vunpack.c.l.b16 %v110
    %v1777 = vunpack.c.l.b16 %v111
    %v1778 = vunpack.c.l.b16 %v112
    %v1779 = vpack.c.b16 %v1764, %v1763
    %v1780 = vpack.c.b16 %v1766, %v1765
    %v1781 = vpack.c.b16 %v1768, %v1767
    %v1782 = vpack.c.b16 %v1770, %v1769
    %v1783 = vpack.c.b16 %v1772, %v1771
    %v1784 = vpack.c.b16 %v1774, %v1773
    %v1785 = vpack.c.b16 %v1776, %v1775
    %v1786 = vpack.c.b16 %v1778, %v1777
    %1795 = vmatprep.subr.bf16.mxu0 0
    %1796 = vmatpush1.bf16.msra.mxu0 %v1779
    %1797 = vmatprep.subr.bf16.mxu0 0
    %1798 = vmatpush1.bf16.msra.mxu0 %v1780
    %1799 = vmatprep.subr.bf16.mxu0 0
    %1800 = vmatpush1.bf16.msra.mxu0 %v1781
    %1801 = vmatprep.subr.bf16.mxu0 0
    %1802 = vmatpush1.bf16.msra.mxu0 %v1782
    %1803 = vmatprep.subr.bf16.mxu0 0
    %1804 = vmatpush1.bf16.msra.mxu0 %v1783
    %1805 = vmatprep.subr.bf16.mxu0 0
    %1806 = vmatpush1.bf16.msra.mxu0 %v1784
    %1807 = vmatprep.subr.bf16.mxu0 0
    %1808 = vmatpush1.bf16.msra.mxu0 %v1785
    %1809 = vmatprep.subr.bf16.mxu0 0
    %1810 = vmatpush1.bf16.msra.mxu0 %v1786
    %1811 = vmatprep.subr.bf16.mxu0 0
    %1812 = vmatpush1.bf16.msra.mxu0 0
    %1813 = vmatprep.subr.bf16.mxu0 0
    %1814 = vmatpush1.bf16.msra.mxu0 0
    %1815 = vmatprep.subr.bf16.mxu0 0
    %1816 = vmatpush1.bf16.msra.mxu0 0
    %1817 = vmatprep.subr.bf16.mxu0 0
    %1818 = vmatpush1.bf16.msra.mxu0 0
    %1819 = vmatprep.subr.bf16.mxu0 0
    %1820 = vmatpush1.bf16.msra.mxu0 0
    %1821 = vmatprep.subr.bf16.mxu0 0
    %1822 = vmatpush1.bf16.msra.mxu0 0
    %1823 = vmatprep.subr.bf16.mxu0 0
    %1824 = vmatpush1.bf16.msra.mxu0 0
    %1825 = vmatprep.subr.bf16.mxu0 0
    %1826 = vmatpush1.bf16.msra.mxu0 0
    %1827 = vmatprep.mubr.bf16.mxu0 0
    %1828 = vmatmul.mubr.bf16.gmra.mrb[0].mxu0 %v1742
    %v1829 = vpop.f32.mrb[0].mxu0
    %v1830 = vadd.f32 %v1746, %v1829
    %v1831 = vpop.f32.mrb[0].mxu0
    %v1832 = vpop.f32.mrb[0].mxu0
    %v1833 = vpop.f32.mrb[0].mxu0
    %1834 = vdwg.mxu0
    %1835 = vmax.xlane.f32.xlu0 %v1830
    %v1836 = vpop.xlane.xlu0 %1835
    %v1837 = vsub.f32 %v1830, %v1836
    %v1838 = vmul.f32 %v1837, 1.442695
    %v1839 = vpow.pop %v1838
    %1840 = vadd.xlane.f32.xlu0 %v1839
    %v1841 = vpop.xlane.xlu0 %1840
    %v1842 = vrcp.pop %v1841
    %v1843 = vmul.f32 %v1839, %v1842
    %v1844 = vld [vmem:[#allocation2] sm:$0xff]
    %v1845 = vld [vmem:[#allocation2 + $0x8] sm:$0xff]
    %v1846 = vld [vmem:[#allocation2 + $0x10] sm:$0xff]
    %v1847 = vld [vmem:[#allocation2 + $0x18] sm:$0xff]
    %v1848 = vld [vmem:[#allocation2 + $0x20] sm:$0xff]
    %v1849 = vld [vmem:[#allocation2 + $0x28] sm:$0xff]
    %v1850 = vld [vmem:[#allocation2 + $0x30] sm:$0xff]
    %v1851 = vld [vmem:[#allocation2 + $0x38] sm:$0xff]
    %v1852 = vmul.f32 %v1844, %v1508
    %v1853 = vmul.f32 %v1845, %v1513
    %v1854 = vmul.f32 %v1846, %v1518
    %v1855 = vmul.f32 %v1847, %v1523
    %v1856 = vmul.f32 %v1848, %v1528
    %v1857 = vmul.f32 %v1849, %v1533
    %v1858 = vmul.f32 %v1850, %v1538
    %v1859 = vmul.f32 %v1851, %v1543
    %v1860 = vadd.f32 %v1852, %v1853
    %v1861 = vadd.f32 %v1860, %v1854
    %v1862 = vadd.f32 %v1861, %v1855
    %v1863 = vadd.f32 %v1862, %v1856
    %v1864 = vadd.f32 %v1863, %v1857
    %v1865 = vadd.f32 %v1864, %v1858
    %v1866 = vadd.f32 %v1865, %v1859
    %1868 = vset.pattern.permute.xlu0 0
    %1869 = vperm.xlu0 %1868, %v1661
    %v1870 = vpop.permute.xlu0 %1869
    %v1872 = vmul.f32 %v1843, %v1870
    %v1873 = vsub.f32 1.0, %v1661
    %1875 = vset.pattern.permute.xlu0 0
    %1876 = vperm.xlu0 %1875, %v1873
    %v1877 = vpop.permute.xlu0 %1876
    %v1879 = vmul.f32 %v1866, %v1877
    %v1880 = vadd.f32 %v1872, %v1879
    %1881 = vst [vmem:[#allocation8] sm:$0xff] %v1880
    %v1882 = vpack.c.bf16 %v630, %v630
    %1884 = vrot.lane.b32.xlu0 %v1882, 32
    %v1885 = vpop.permute.xlu0 %1884
    %v1887 = vsel %vm300, %v1885, 0
    %1889 = vmatprep.subr.bf16.mxu0 0
    %1890 = vmatpush1.bf16.msra.mxu0 %v1209
    %1891 = vmatprep.subr.bf16.mxu0 0
    %1892 = vmatpush1.bf16.msra.mxu0 %v1210
    %1893 = vmatprep.subr.bf16.mxu0 0
    %1894 = vmatpush1.bf16.msra.mxu0 0
    %1895 = vmatprep.subr.bf16.mxu0 0
    %1896 = vmatpush1.bf16.msra.mxu0 0
    %1897 = vmatprep.subr.bf16.mxu0 0
    %1898 = vmatpush1.bf16.msra.mxu0 0
    %1899 = vmatprep.subr.bf16.mxu0 0
    %1900 = vmatpush1.bf16.msra.mxu0 0
    %1901 = vmatprep.subr.bf16.mxu0 0
    %1902 = vmatpush1.bf16.msra.mxu0 0
    %1903 = vmatprep.subr.bf16.mxu0 0
    %1904 = vmatpush1.bf16.msra.mxu0 0
    %1905 = vmatprep.subr.bf16.mxu0 0
    %1906 = vmatpush1.bf16.msra.mxu0 0
    %1907 = vmatprep.subr.bf16.mxu0 0
    %1908 = vmatpush1.bf16.msra.mxu0 0
    %1909 = vmatprep.subr.bf16.mxu0 0
    %1910 = vmatpush1.bf16.msra.mxu0 0
    %1911 = vmatprep.subr.bf16.mxu0 0
    %1912 = vmatpush1.bf16.msra.mxu0 0
    %1913 = vmatprep.subr.bf16.mxu0 0
    %1914 = vmatpush1.bf16.msra.mxu0 0
    %1915 = vmatprep.subr.bf16.mxu0 0
    %1916 = vmatpush1.bf16.msra.mxu0 0
    %1917 = vmatprep.subr.bf16.mxu0 0
    %1918 = vmatpush1.bf16.msra.mxu0 0
    %1919 = vmatprep.subr.bf16.mxu0 0
    %1920 = vmatpush1.bf16.msra.mxu0 0
    %1921 = vmatprep.mubr.bf16.mxu0 0
    %1922 = vmatmul.mubr.bf16.gmra.mrb[0].mxu0 %v1887
    %v1923 = vpop.f32.mrb[0].mxu0
    %v1924 = vadd.f32 0.0, %v1923
    %v1925 = vpop.f32.mrb[0].mxu0
    %v1926 = vpop.f32.mrb[0].mxu0
    %v1927 = vpop.f32.mrb[0].mxu0
    %1928 = vdwg.mxu0
    %v1929 = vadd.f32 %v1033, %v1924
    %v1930 = vadd.f32 %v1036, %v1924
    %v1931 = vadd.f32 %v1041, %v1924
    %v1932 = vadd.f32 %v1044, %v1924
    %v1933 = vadd.f32 %v1049, %v1924
    %v1934 = vadd.f32 %v1052, %v1924
    %v1935 = vadd.f32 %v1057, %v1924
    %v1936 = vadd.f32 %v1060, %v1924
    %1938 = vset.pattern.permute.xlu0 0
    %1939 = vperm.xlu0 %1938, %v1497
    %v1940 = vpop.permute.xlu0 %1939
    %1943 = vset.pattern.permute.xlu0 0
    %1944 = vperm.xlu0 %1943, %v1498
    %v1945 = vpop.permute.xlu0 %1944
    %1948 = vset.pattern.permute.xlu0 0
    %1949 = vperm.xlu0 %1948, %v1499
    %v1950 = vpop.permute.xlu0 %1949
    %1953 = vset.pattern.permute.xlu0 0
    %1954 = vperm.xlu0 %1953, %v1500
    %v1955 = vpop.permute.xlu0 %1954
    %1958 = vset.pattern.permute.xlu0 0
    %1959 = vperm.xlu0 %1958, %v1501
    %v1960 = vpop.permute.xlu0 %1959
    %1963 = vset.pattern.permute.xlu0 0
    %1964 = vperm.xlu0 %1963, %v1502
    %v1965 = vpop.permute.xlu0 %1964
    %1968 = vset.pattern.permute.xlu0 0
    %1969 = vperm.xlu0 %1968, %v1503
    %v1970 = vpop.permute.xlu0 %1969
    %1973 = vset.pattern.permute.xlu0 0
    %1974 = vperm.xlu0 %1973, %v1504
    %v1975 = vpop.permute.xlu0 %1974
    %v1977 = vmul.f32 %v1940, %v1267
    %v1978 = vmul.f32 %v1945, %v1267
    %v1979 = vmul.f32 %v1950, %v1267
    %v1980 = vmul.f32 %v1955, %v1267
    %v1981 = vmul.f32 %v1960, %v1267
    %v1982 = vmul.f32 %v1965, %v1267
    %v1983 = vmul.f32 %v1970, %v1267
    %v1984 = vmul.f32 %v1975, %v1267
    %v1985 = vadd.f32 %v1929, %v1977
    %v1986 = vadd.f32 %v1930, %v1978
    %v1987 = vadd.f32 %v1931, %v1979
    %v1988 = vadd.f32 %v1932, %v1980
    %v1989 = vadd.f32 %v1933, %v1981
    %v1990 = vadd.f32 %v1934, %v1982
    %v1991 = vadd.f32 %v1935, %v1983
    %v1992 = vadd.f32 %v1936, %v1984
    %v1993 = vtanh.pop %v1985
    %v1994 = vtanh.pop %v1986
    %v1995 = vtanh.pop %v1987
    %v1996 = vtanh.pop %v1988
    %v1997 = vtanh.pop %v1989
    %v1998 = vtanh.pop %v1990
    %v1999 = vtanh.pop %v1991
    %v2000 = vtanh.pop %v1992
    %v2001 = vpack.c.bf16 %v1994, %v1993
    %v2002 = vpack.c.bf16 %v1996, %v1995
    %v2003 = vpack.c.bf16 %v1998, %v1997
    %v2004 = vpack.c.bf16 %v2000, %v1999
    %2005 = vmatprep.subr.bf16.mxu0 0
    %2006 = vmatpush1.bf16.msra.mxu0 %v1321
    %2007 = vmatprep.subr.bf16.mxu0 0
    %2008 = vmatpush1.bf16.msra.mxu0 %v1322
    %2009 = vmatprep.subr.bf16.mxu0 0
    %2010 = vmatpush1.bf16.msra.mxu0 %v1323
    %2011 = vmatprep.subr.bf16.mxu0 0
    %2012 = vmatpush1.bf16.msra.mxu0 %v1324
    %2013 = vmatprep.subr.bf16.mxu0 0
    %2014 = vmatpush1.bf16.msra.mxu0 %v1325
    %2015 = vmatprep.subr.bf16.mxu0 0
    %2016 = vmatpush1.bf16.msra.mxu0 %v1326
    %2017 = vmatprep.subr.bf16.mxu0 0
    %2018 = vmatpush1.bf16.msra.mxu0 %v1327
    %2019 = vmatprep.subr.bf16.mxu0 0
    %2020 = vmatpush1.bf16.msra.mxu0 %v1328
    %2021 = vmatprep.subr.bf16.mxu0 0
    %2022 = vmatpush1.bf16.msra.mxu0 0
    %2023 = vmatprep.subr.bf16.mxu0 0
    %2024 = vmatpush1.bf16.msra.mxu0 0
    %2025 = vmatprep.subr.bf16.mxu0 0
    %2026 = vmatpush1.bf16.msra.mxu0 0
    %2027 = vmatprep.subr.bf16.mxu0 0
    %2028 = vmatpush1.bf16.msra.mxu0 0
    %2029 = vmatprep.subr.bf16.mxu0 0
    %2030 = vmatpush1.bf16.msra.mxu0 0
    %2031 = vmatprep.subr.bf16.mxu0 0
    %2032 = vmatpush1.bf16.msra.mxu0 0
    %2033 = vmatprep.subr.bf16.mxu0 0
    %2034 = vmatpush1.bf16.msra.mxu0 0
    %2035 = vmatprep.subr.bf16.mxu0 0
    %2036 = vmatpush1.bf16.msra.mxu0 0
    %2037 = vmatprep.mubr.bf16.mxu0 0
    %2038 = vmatmul.mubr.bf16.gmra.mrb[0].mxu0 %v2001
    %v2039 = vpop.f32.mrb[0].mxu0
    %v2040 = vadd.f32 0.0, %v2039
    %v2041 = vpop.f32.mrb[0].mxu0
    %v2042 = vpop.f32.mrb[0].mxu0
    %v2043 = vadd.f32 0.0, %v2042
    %v2044 = vpop.f32.mrb[0].mxu0
    %2045 = vmatprep.mubr.bf16.mxu0 0
    %2046 = vmatmul.mubr.bf16.gmra.mrb[0].mxu0 %v2002
    %v2047 = vpop.f32.mrb[0].mxu0
    %v2048 = vadd.f32 0.0, %v2047
    %v2049 = vpop.f32.mrb[0].mxu0
    %v2050 = vpop.f32.mrb[0].mxu0
    %v2051 = vadd.f32 0.0, %v2050
    %v2052 = vpop.f32.mrb[0].mxu0
    %2053 = vmatprep.mubr.bf16.mxu0 0
    %2054 = vmatmul.mubr.bf16.gmra.mrb[0].mxu0 %v2003
    %v2055 = vpop.f32.mrb[0].mxu0
    %v2056 = vadd.f32 0.0, %v2055
    %v2057 = vpop.f32.mrb[0].mxu0
    %v2058 = vpop.f32.mrb[0].mxu0
    %v2059 = vadd.f32 0.0, %v2058
    %v2060 = vpop.f32.mrb[0].mxu0
    %2061 = vmatprep.mubr.bf16.mxu0 0
    %2062 = vmatmul.mubr.bf16.gmra.mrb[0].mxu0 %v2004
    %v2063 = vpop.f32.mrb[0].mxu0
    %v2064 = vadd.f32 0.0, %v2063
    %v2065 = vpop.f32.mrb[0].mxu0
    %v2066 = vpop.f32.mrb[0].mxu0
    %v2067 = vadd.f32 0.0, %v2066
    %v2068 = vpop.f32.mrb[0].mxu0
    %2069 = vdwg.mxu0
    %v2070 = vadd.f32 %v2040, %v1063
    %v2071 = vadd.f32 %v2043, %v1064
    %v2072 = vadd.f32 %v2048, %v1065
    %v2073 = vadd.f32 %v2051, %v1066
    %v2074 = vadd.f32 %v2056, %v1067
    %v2075 = vadd.f32 %v2059, %v1068
    %v2076 = vadd.f32 %v2064, %v1069
    %v2077 = vadd.f32 %v2067, %v1070
    %v2078 = vsel %vm1410, %v2070, -inf
    %v2079 = vsel %vm1410, %v2071, -inf
    %v2080 = vsel %vm1410, %v2072, -inf
    %v2081 = vsel %vm1410, %v2073, -inf
    %v2082 = vsel %vm1410, %v2074, -inf
    %v2083 = vmax.f32 %v2078, %v2082
    %v2084 = vsel %vm1410, %v2075, -inf
    %v2085 = vmax.f32 %v2079, %v2084
    %v2086 = vsel %vm1410, %v2076, -inf
    %v2087 = vmax.f32 %v2080, %v2086
    %v2088 = vsel %vm1410, %v2077, -inf
    %v2089 = vmax.f32 %v2081, %v2088
    %v2090 = vmax.f32 %v2083, %v2085
    %v2091 = vmax.f32 %v2087, %v2089
    %v2092 = vmax.f32 %v2090, %v2091
    %v2093 = vsub.f32 %v2070, %v2092
    %v2094 = vsub.f32 %v2071, %v2092
    %v2095 = vsub.f32 %v2072, %v2092
    %v2096 = vsub.f32 %v2073, %v2092
    %v2097 = vsub.f32 %v2074, %v2092
    %v2098 = vsub.f32 %v2075, %v2092
    %v2099 = vsub.f32 %v2076, %v2092
    %v2100 = vsub.f32 %v2077, %v2092
    %v2101 = vmul.f32 %v2093, 1.442695
    %v2102 = vpow.pop %v2101
    %v2103 = vmul.f32 %v2094, 1.442695
    %v2104 = vpow.pop %v2103
    %v2105 = vmul.f32 %v2095, 1.442695
    %v2106 = vpow.pop %v2105
    %v2107 = vmul.f32 %v2096, 1.442695
    %v2108 = vpow.pop %v2107
    %v2109 = vmul.f32 %v2097, 1.442695
    %v2110 = vpow.pop %v2109
    %v2111 = vmul.f32 %v2098, 1.442695
    %v2112 = vpow.pop %v2111
    %v2113 = vmul.f32 %v2099, 1.442695
    %v2114 = vpow.pop %v2113
    %v2115 = vmul.f32 %v2100, 1.442695
    %v2116 = vpow.pop %v2115
    %v2117 = vsel %vm1410, %v2102, 0.0
    %v2118 = vsel %vm1410, %v2104, 0.0
    %v2119 = vadd.f32 %v2117, %v2118
    %v2120 = vsel %vm1410, %v2106, 0.0
    %v2121 = vadd.f32 %v2119, %v2120
    %v2122 = vsel %vm1410, %v2108, 0.0
    %v2123 = vadd.f32 %v2121, %v2122
    %v2124 = vsel %vm1410, %v2110, 0.0
    %v2125 = vadd.f32 %v2123, %v2124
    %v2126 = vsel %vm1410, %v2112, 0.0
    %v2127 = vadd.f32 %v2125, %v2126
    %v2128 = vsel %vm1410, %v2114, 0.0
    %v2129 = vadd.f32 %v2127, %v2128
    %v2130 = vsel %vm1410, %v2116, 0.0
    %v2131 = vadd.f32 %v2129, %v2130
    %v2132 = vrcp.pop %v2131
    %v2133 = vmul.f32 %v2102, %v2132
    %v2134 = vmul.f32 %v2104, %v2132
    %v2135 = vmul.f32 %v2106, %v2132
    %v2136 = vmul.f32 %v2108, %v2132
    %v2137 = vmul.f32 %v2110, %v2132
    %v2138 = vmul.f32 %v2112, %v2132
    %v2139 = vmul.f32 %v2114, %v2132
    %v2140 = vmul.f32 %v2116, %v2132
    %v2141 = vmin.f32 %v2133, %v1497
    %v2142 = vmin.f32 %v2134, %v1498
    %v2143 = vmin.f32 %v2135, %v1499
    %v2144 = vmin.f32 %v2136, %v1500
    %v2145 = vmin.f32 %v2137, %v1501
    %v2146 = vmin.f32 %v2138, %v1502
    %v2147 = vmin.f32 %v2139, %v1503
    %v2148 = vmin.f32 %v2140, %v1504
    %v2149 = vsel %vm1410, %v2141, 0.0
    %v2150 = vsel %vm1410, %v2142, 0.0
    %v2151 = vadd.f32 %v2149, %v2150
    %v2152 = vsel %vm1410, %v2143, 0.0
    %v2153 = vadd.f32 %v2151, %v2152
    %v2154 = vsel %vm1410, %v2144, 0.0
    %v2155 = vadd.f32 %v2153, %v2154
    %v2156 = vsel %vm1410, %v2145, 0.0
    %v2157 = vadd.f32 %v2155, %v2156
    %v2158 = vsel %vm1410, %v2146, 0.0
    %v2159 = vadd.f32 %v2157, %v2158
    %v2160 = vsel %vm1410, %v2147, 0.0
    %v2161 = vadd.f32 %v2159, %v2160
    %v2162 = vsel %vm1410, %v2148, 0.0
    %v2163 = vadd.f32 %v2161, %v2162
    %v2164 = vadd.f32 %v1497, %v2133
    %v2165 = vadd.f32 %v1498, %v2134
    %v2166 = vadd.f32 %v1499, %v2135
    %v2167 = vadd.f32 %v1500, %v2136
    %v2168 = vadd.f32 %v1501, %v2137
    %v2169 = vadd.f32 %v1502, %v2138
    %v2170 = vadd.f32 %v1503, %v2139
    %v2171 = vadd.f32 %v1504, %v2140
    %2173 = vset.pattern.permute.xlu0 0
    %2174 = vperm.xlu0 %2173, %v2133
    %v2175 = vpop.permute.xlu0 %2174
    %2178 = vset.pattern.permute.xlu0 0
    %2179 = vperm.xlu0 %2178, %v2134
    %v2180 = vpop.permute.xlu0 %2179
    %2183 = vset.pattern.permute.xlu0 0
    %2184 = vperm.xlu0 %2183, %v2135
    %v2185 = vpop.permute.xlu0 %2184
    %2188 = vset.pattern.permute.xlu0 0
    %2189 = vperm.xlu0 %2188, %v2136
    %v2190 = vpop.permute.xlu0 %2189
    %2193 = vset.pattern.permute.xlu0 0
    %2194 = vperm.xlu0 %2193, %v2137
    %v2195 = vpop.permute.xlu0 %2194
    %2198 = vset.pattern.permute.xlu0 0
    %2199 = vperm.xlu0 %2198, %v2138
    %v2200 = vpop.permute.xlu0 %2199
    %2203 = vset.pattern.permute.xlu0 0
    %2204 = vperm.xlu0 %2203, %v2139
    %v2205 = vpop.permute.xlu0 %2204
    %2208 = vset.pattern.permute.xlu0 0
    %2209 = vperm.xlu0 %2208, %v2140
    %v2210 = vpop.permute.xlu0 %2209
    %v2212 = vmul.f32 %v2175, %v946
    %v2213 = vmul.f32 %v2180, %v947
    %v2214 = vmul.f32 %v2185, %v948
    %v2215 = vmul.f32 %v2190, %v949
    %v2216 = vmul.f32 %v2195, %v950
    %v2217 = vmul.f32 %v2200, %v951
    %v2218 = vmul.f32 %v2205, %v952
    %v2219 = vmul.f32 %v2210, %v953
    %v2220 = vsel %vm191, %v2212, 0.0
    %v2221 = vsel %vm191, %v2213, 0.0
    %v2222 = vadd.f32 %v2220, %v2221
    %v2223 = vsel %vm191, %v2214, 0.0
    %v2224 = vadd.f32 %v2222, %v2223
    %v2225 = vsel %vm191, %v2215, 0.0
    %v2226 = vadd.f32 %v2224, %v2225
    %v2227 = vsel %vm191, %v2216, 0.0
    %v2228 = vadd.f32 %v2226, %v2227
    %v2229 = vsel %vm191, %v2217, 0.0
    %v2230 = vadd.f32 %v2228, %v2229
    %v2231 = vsel %vm191, %v2218, 0.0
    %v2232 = vadd.f32 %v2230, %v2231
    %v2233 = vsel %vm191, %v2219, 0.0
    %v2234 = vadd.f32 %v2232, %v2233
    %2235 = vrot.lane.b32.xlu0 %v630, 32
    %v2236 = vpop.permute.xlu0 %2235
    %2239 = vrot.lane.b32.xlu0 %v2234, 32
    %v2240 = vpop.permute.xlu0 %2239
    %v2242 = vsel %vm300, %v2236, %v2240
    %v2243 = vpack.c.bf16 %v2242, %v2242
    %v2245 = vsel %vm943, %v2243, 0
    %2247 = vmatprep.subr.bf16.mxu0 0
    %2248 = vmatpush1.bf16.msra.mxu0 %v1601
    %2249 = vmatprep.subr.bf16.mxu0 0
    %2250 = vmatpush1.bf16.msra.mxu0 %v1602
    %2251 = vmatprep.subr.bf16.mxu0 0
    %2252 = vmatpush1.bf16.msra.mxu0 %v1603
    %2253 = vmatprep.subr.bf16.mxu0 0
    %2254 = vmatpush1.bf16.msra.mxu0 %v1604
    %2255 = vmatprep.subr.bf16.mxu0 0
    %2256 = vmatpush1.bf16.msra.mxu0 %v1605
    %2257 = vmatprep.subr.bf16.mxu0 0
    %2258 = vmatpush1.bf16.msra.mxu0 %v1606
    %2259 = vmatprep.subr.bf16.mxu0 0
    %2260 = vmatpush1.bf16.msra.mxu0 0
    %2261 = vmatprep.subr.bf16.mxu0 0
    %2262 = vmatpush1.bf16.msra.mxu0 0
    %2263 = vmatprep.subr.bf16.mxu0 0
    %2264 = vmatpush1.bf16.msra.mxu0 0
    %2265 = vmatprep.subr.bf16.mxu0 0
    %2266 = vmatpush1.bf16.msra.mxu0 0
    %2267 = vmatprep.subr.bf16.mxu0 0
    %2268 = vmatpush1.bf16.msra.mxu0 0
    %2269 = vmatprep.subr.bf16.mxu0 0
    %2270 = vmatpush1.bf16.msra.mxu0 0
    %2271 = vmatprep.subr.bf16.mxu0 0
    %2272 = vmatpush1.bf16.msra.mxu0 0
    %2273 = vmatprep.subr.bf16.mxu0 0
    %2274 = vmatpush1.bf16.msra.mxu0 0
    %2275 = vmatprep.subr.bf16.mxu0 0
    %2276 = vmatpush1.bf16.msra.mxu0 0
    %2277 = vmatprep.subr.bf16.mxu0 0
    %2278 = vmatpush1.bf16.msra.mxu0 0
    %2279 = vmatprep.mubr.bf16.mxu0 0
    %2280 = vmatmul.mubr.bf16.gmra.mrb[0].mxu0 %v2245
    %v2281 = vpop.f32.mrb[0].mxu0
    %v2282 = vadd.f32 %v1194, %v2281
    %v2283 = vpop.f32.mrb[0].mxu0
    %v2284 = vpop.f32.mrb[0].mxu0
    %v2285 = vpop.f32.mrb[0].mxu0
    %2286 = vdwg.mxu0
    %v2287 = vxor.u32 %v2282, 2147483648
    %v2288 = vmul.f32 %v2287, 1.442695
    %v2289 = vpow.pop %v2288
    %v2290 = vadd.f32 %v2289, 1.0
    %v2291 = vrcp.pop %v2290
    %v2292 = vmul.f32 1.0, %v2291
    %2293 = vmatprep.subr.bf16.mxu0 0
    %2294 = vmatpush1.bf16.msra.mxu0 %v1690
    %2295 = vmatprep.subr.bf16.mxu0 0
    %2296 = vmatpush1.bf16.msra.mxu0 %v1691
    %2297 = vmatprep.subr.bf16.mxu0 0
    %2298 = vmatpush1.bf16.msra.mxu0 %v1692
    %2299 = vmatprep.subr.bf16.mxu0 0
    %2300 = vmatpush1.bf16.msra.mxu0 %v1693
    %2301 = vmatprep.subr.bf16.mxu0 0
    %2302 = vmatpush1.bf16.msra.mxu0 %v1694
    %2303 = vmatprep.subr.bf16.mxu0 0
    %2304 = vmatpush1.bf16.msra.mxu0 %v1695
    %2305 = vmatprep.subr.bf16.mxu0 0
    %2306 = vmatpush1.bf16.msra.mxu0 0
    %2307 = vmatprep.subr.bf16.mxu0 0
    %2308 = vmatpush1.bf16.msra.mxu0 0
    %2309 = vmatprep.subr.bf16.mxu0 0
    %2310 = vmatpush1.bf16.msra.mxu0 0
    %2311 = vmatprep.subr.bf16.mxu0 0
    %2312 = vmatpush1.bf16.msra.mxu0 0
    %2313 = vmatprep.subr.bf16.mxu0 0
    %2314 = vmatpush1.bf16.msra.mxu0 0
    %2315 = vmatprep.subr.bf16.mxu0 0
    %2316 = vmatpush1.bf16.msra.mxu0 0
    %2317 = vmatprep.subr.bf16.mxu0 0
    %2318 = vmatpush1.bf16.msra.mxu0 0
    %2319 = vmatprep.subr.bf16.mxu0 0
    %2320 = vmatpush1.bf16.msra.mxu0 0
    %2321 = vmatprep.subr.bf16.mxu0 0
    %2322 = vmatpush1.bf16.msra.mxu0 0
    %2323 = vmatprep.subr.bf16.mxu0 0
    %2324 = vmatpush1.bf16.msra.mxu0 0
    %2325 = vmatprep.mubr.bf16.mxu0 0
    %2326 = vmatmul.mubr.bf16.gmra.mrb[0].mxu0 %v2245
    %v2327 = vpop.f32.mrb[0].mxu0
    %v2328 = vadd.f32 %v1665, %v2327
    %v2329 = vpop.f32.mrb[0].mxu0
    %v2330 = vpop.f32.mrb[0].mxu0
    %v2331 = vpop.f32.mrb[0].mxu0
    %2332 = vdwg.mxu0
    %v2333 = vpack.c.bf16 %v2328, %v2328
    %2334 = vmatprep.subr.bf16.mxu0 0
    %2335 = vmatpush1.bf16.msra.mxu0 %v1779
    %2336 = vmatprep.subr.bf16.mxu0 0
    %2337 = vmatpush1.bf16.msra.mxu0 %v1780
    %2338 = vmatprep.subr.bf16.mxu0 0
    %2339 = vmatpush1.bf16.msra.mxu0 %v1781
    %2340 = vmatprep.subr.bf16.mxu0 0
    %2341 = vmatpush1.bf16.msra.mxu0 %v1782
    %2342 = vmatprep.subr.bf16.mxu0 0
    %2343 = vmatpush1.bf16.msra.mxu0 %v1783
    %2344 = vmatprep.subr.bf16.mxu0 0
    %2345 = vmatpush1.bf16.msra.mxu0 %v1784
    %2346 = vmatprep.subr.bf16.mxu0 0
    %2347 = vmatpush1.bf16.msra.mxu0 %v1785
    %2348 = vmatprep.subr.bf16.mxu0 0
    %2349 = vmatpush1.bf16.msra.mxu0 %v1786
    %2350 = vmatprep.subr.bf16.mxu0 0
    %2351 = vmatpush1.bf16.msra.mxu0 0
    %2352 = vmatprep.subr.bf16.mxu0 0
    %2353 = vmatpush1.bf16.msra.mxu0 0
    %2354 = vmatprep.subr.bf16.mxu0 0
    %2355 = vmatpush1.bf16.msra.mxu0 0
    %2356 = vmatprep.subr.bf16.mxu0 0
    %2357 = vmatpush1.bf16.msra.mxu0 0
    %2358 = vmatprep.subr.bf16.mxu0 0
    %2359 = vmatpush1.bf16.msra.mxu0 0
    %2360 = vmatprep.subr.bf16.mxu0 0
    %2361 = vmatpush1.bf16.msra.mxu0 0
    %2362 = vmatprep.subr.bf16.mxu0 0
    %2363 = vmatpush1.bf16.msra.mxu0 0
    %2364 = vmatprep.subr.bf16.mxu0 0
    %2365 = vmatpush1.bf16.msra.mxu0 0
    %2366 = vmatprep.mubr.bf16.mxu0 0
    %2367 = vmatmul.mubr.bf16.gmra.mrb[0].mxu0 %v2333
    %v2368 = vpop.f32.mrb[0].mxu0
    %v2369 = vadd.f32 %v1746, %v2368
    %v2370 = vpop.f32.mrb[0].mxu0
    %v2371 = vpop.f32.mrb[0].mxu0
    %v2372 = vpop.f32.mrb[0].mxu0
    %2373 = vdwg.mxu0
    %2374 = vmax.xlane.f32.xlu0 %v2369
    %v2375 = vpop.xlane.xlu0 %2374
    %v2376 = vsub.f32 %v2369, %v2375
    %v2377 = vmul.f32 %v2376, 1.442695
    %v2378 = vpow.pop %v2377
    %2379 = vadd.xlane.f32.xlu0 %v2378
    %v2380 = vpop.xlane.xlu0 %2379
    %v2381 = vrcp.pop %v2380
    %v2382 = vmul.f32 %v2378, %v2381
    %v2383 = vld [vmem:[#allocation2] sm:$0xff]
    %v2384 = vld [vmem:[#allocation2 + $0x8] sm:$0xff]
    %v2385 = vld [vmem:[#allocation2 + $0x10] sm:$0xff]
    %v2386 = vld [vmem:[#allocation2 + $0x18] sm:$0xff]
    %v2387 = vld [vmem:[#allocation2 + $0x20] sm:$0xff]
    %v2388 = vld [vmem:[#allocation2 + $0x28] sm:$0xff]
    %v2389 = vld [vmem:[#allocation2 + $0x30] sm:$0xff]
    %v2390 = vld [vmem:[#allocation2 + $0x38] sm:$0xff]
    %v2391 = vmul.f32 %v2383, %v2175
    %v2392 = vmul.f32 %v2384, %v2180
    %v2393 = vmul.f32 %v2385, %v2185
    %v2394 = vmul.f32 %v2386, %v2190
    %v2395 = vmul.f32 %v2387, %v2195
    %v2396 = vmul.f32 %v2388, %v2200
    %v2397 = vmul.f32 %v2389, %v2205
    %v2398 = vmul.f32 %v2390, %v2210
    %v2399 = vadd.f32 %v2391, %v2392
    %v2400 = vadd.f32 %v2399, %v2393
    %v2401 = vadd.f32 %v2400, %v2394
    %v2402 = vadd.f32 %v2401, %v2395
    %v2403 = vadd.f32 %v2402, %v2396
    %v2404 = vadd.f32 %v2403, %v2397
    %v2405 = vadd.f32 %v2404, %v2398
    %2407 = vset.pattern.permute.xlu0 0
    %2408 = vperm.xlu0 %2407, %v2292
    %v2409 = vpop.permute.xlu0 %2408
    %v2411 = vmul.f32 %v2382, %v2409
    %v2412 = vsub.f32 1.0, %v2292
    %2414 = vset.pattern.permute.xlu0 0
    %2415 = vperm.xlu0 %2414, %v2412
    %v2416 = vpop.permute.xlu0 %2415
    %v2418 = vmul.f32 %v2405, %v2416
    %v2419 = vadd.f32 %v2411, %v2418
    %s2420 = scalar_lea.vmem [#allocation8], 8
    %2421 = vst [vmem:[%s2420] sm:$0xff] %v2419
    %v2422 = vpack.c.bf16 %v779, %v779
    %2424 = vrot.lane.b32.xlu0 %v2422, 32
    %v2425 = vpop.permute.xlu0 %2424
    %v2427 = vsel %vm300, %v2425, 0
    %2429 = vmatprep.subr.bf16.mxu0 0
    %2430 = vmatpush1.bf16.msra.mxu0 %v1209
    %2431 = vmatprep.subr.bf16.mxu0 0
    %2432 = vmatpush1.bf16.msra.mxu0 %v1210
    %2433 = vmatprep.subr.bf16.mxu0 0
    %2434 = vmatpush1.bf16.msra.mxu0 0
    %2435 = vmatprep.subr.bf16.mxu0 0
    %2436 = vmatpush1.bf16.msra.mxu0 0
    %2437 = vmatprep.subr.bf16.mxu0 0
    %2438 = vmatpush1.bf16.msra.mxu0 0
    %2439 = vmatprep.subr.bf16.mxu0 0
    %2440 = vmatpush1.bf16.msra.mxu0 0
    %2441 = vmatprep.subr.bf16.mxu0 0
    %2442 = vmatpush1.bf16.msra.mxu0 0
    %2443 = vmatprep.subr.bf16.mxu0 0
    %2444 = vmatpush1.bf16.msra.mxu0 0
    %2445 = vmatprep.subr.bf16.mxu0 0
    %2446 = vmatpush1.bf16.msra.mxu0 0
    %2447 = vmatprep.subr.bf16.mxu0 0
    %2448 = vmatpush1.bf16.msra.mxu0 0
    %2449 = vmatprep.subr.bf16.mxu0 0
    %2450 = vmatpush1.bf16.msra.mxu0 0
    %2451 = vmatprep.subr.bf16.mxu0 0
    %2452 = vmatpush1.bf16.msra.mxu0 0
    %2453 = vmatprep.subr.bf16.mxu0 0
    %2454 = vmatpush1.bf16.msra.mxu0 0
    %2455 = vmatprep.subr.bf16.mxu0 0
    %2456 = vmatpush1.bf16.msra.mxu0 0
    %2457 = vmatprep.subr.bf16.mxu0 0
    %2458 = vmatpush1.bf16.msra.mxu0 0
    %2459 = vmatprep.subr.bf16.mxu0 0
    %2460 = vmatpush1.bf16.msra.mxu0 0
    %2461 = vmatprep.mubr.bf16.mxu0 0
    %2462 = vmatmul.mubr.bf16.gmra.mrb[0].mxu0 %v2427
    %v2463 = vpop.f32.mrb[0].mxu0
    %v2464 = vadd.f32 0.0, %v2463
    %v2465 = vpop.f32.mrb[0].mxu0
    %v2466 = vpop.f32.mrb[0].mxu0
    %v2467 = vpop.f32.mrb[0].mxu0
    %2468 = vdwg.mxu0
    %v2469 = vadd.f32 %v1033, %v2464
    %v2470 = vadd.f32 %v1036, %v2464
    %v2471 = vadd.f32 %v1041, %v2464
    %v2472 = vadd.f32 %v1044, %v2464
    %v2473 = vadd.f32 %v1049, %v2464
    %v2474 = vadd.f32 %v1052, %v2464
    %v2475 = vadd.f32 %v1057, %v2464
    %v2476 = vadd.f32 %v1060, %v2464
    %2478 = vset.pattern.permute.xlu0 0
    %2479 = vperm.xlu0 %2478, %v2164
    %v2480 = vpop.permute.xlu0 %2479
    %2483 = vset.pattern.permute.xlu0 0
    %2484 = vperm.xlu0 %2483, %v2165
    %v2485 = vpop.permute.xlu0 %2484
    %2488 = vset.pattern.permute.xlu0 0
    %2489 = vperm.xlu0 %2488, %v2166
    %v2490 = vpop.permute.xlu0 %2489
    %2493 = vset.pattern.permute.xlu0 0
    %2494 = vperm.xlu0 %2493, %v2167
    %v2495 = vpop.permute.xlu0 %2494
    %2498 = vset.pattern.permute.xlu0 0
    %2499 = vperm.xlu0 %2498, %v2168
    %v2500 = vpop.permute.xlu0 %2499
    %2503 = vset.pattern.permute.xlu0 0
    %2504 = vperm.xlu0 %2503, %v2169
    %v2505 = vpop.permute.xlu0 %2504
    %2508 = vset.pattern.permute.xlu0 0
    %2509 = vperm.xlu0 %2508, %v2170
    %v2510 = vpop.permute.xlu0 %2509
    %2513 = vset.pattern.permute.xlu0 0
    %2514 = vperm.xlu0 %2513, %v2171
    %v2515 = vpop.permute.xlu0 %2514
    %v2517 = vmul.f32 %v2480, %v1267
    %v2518 = vmul.f32 %v2485, %v1267
    %v2519 = vmul.f32 %v2490, %v1267
    %v2520 = vmul.f32 %v2495, %v1267
    %v2521 = vmul.f32 %v2500, %v1267
    %v2522 = vmul.f32 %v2505, %v1267
    %v2523 = vmul.f32 %v2510, %v1267
    %v2524 = vmul.f32 %v2515, %v1267
    %v2525 = vadd.f32 %v2469, %v2517
    %v2526 = vadd.f32 %v2470, %v2518
    %v2527 = vadd.f32 %v2471, %v2519
    %v2528 = vadd.f32 %v2472, %v2520
    %v2529 = vadd.f32 %v2473, %v2521
    %v2530 = vadd.f32 %v2474, %v2522
    %v2531 = vadd.f32 %v2475, %v2523
    %v2532 = vadd.f32 %v2476, %v2524
    %v2533 = vtanh.pop %v2525
    %v2534 = vtanh.pop %v2526
    %v2535 = vtanh.pop %v2527
    %v2536 = vtanh.pop %v2528
    %v2537 = vtanh.pop %v2529
    %v2538 = vtanh.pop %v2530
    %v2539 = vtanh.pop %v2531
    %v2540 = vtanh.pop %v2532
    %v2541 = vpack.c.bf16 %v2534, %v2533
    %v2542 = vpack.c.bf16 %v2536, %v2535
    %v2543 = vpack.c.bf16 %v2538, %v2537
    %v2544 = vpack.c.bf16 %v2540, %v2539
    %2545 = vmatprep.subr.bf16.mxu0 0
    %2546 = vmatpush1.bf16.msra.mxu0 %v1321
    %2547 = vmatprep.subr.bf16.mxu0 0
    %2548 = vmatpush1.bf16.msra.mxu0 %v1322
    %2549 = vmatprep.subr.bf16.mxu0 0
    %2550 = vmatpush1.bf16.msra.mxu0 %v1323
    %2551 = vmatprep.subr.bf16.mxu0 0
    %2552 = vmatpush1.bf16.msra.mxu0 %v1324
    %2553 = vmatprep.subr.bf16.mxu0 0
    %2554 = vmatpush1.bf16.msra.mxu0 %v1325
    %2555 = vmatprep.subr.bf16.mxu0 0
    %2556 = vmatpush1.bf16.msra.mxu0 %v1326
    %2557 = vmatprep.subr.bf16.mxu0 0
    %2558 = vmatpush1.bf16.msra.mxu0 %v1327
    %2559 = vmatprep.subr.bf16.mxu0 0
    %2560 = vmatpush1.bf16.msra.mxu0 %v1328
    %2561 = vmatprep.subr.bf16.mxu0 0
    %2562 = vmatpush1.bf16.msra.mxu0 0
    %2563 = vmatprep.subr.bf16.mxu0 0
    %2564 = vmatpush1.bf16.msra.mxu0 0
    %2565 = vmatprep.subr.bf16.mxu0 0
    %2566 = vmatpush1.bf16.msra.mxu0 0
    %2567 = vmatprep.subr.bf16.mxu0 0
    %2568 = vmatpush1.bf16.msra.mxu0 0
    %2569 = vmatprep.subr.bf16.mxu0 0
    %2570 = vmatpush1.bf16.msra.mxu0 0
    %2571 = vmatprep.subr.bf16.mxu0 0
    %2572 = vmatpush1.bf16.msra.mxu0 0
    %2573 = vmatprep.subr.bf16.mxu0 0
    %2574 = vmatpush1.bf16.msra.mxu0 0
    %2575 = vmatprep.subr.bf16.mxu0 0
    %2576 = vmatpush1.bf16.msra.mxu0 0
    %2577 = vmatprep.mubr.bf16.mxu0 0
    %2578 = vmatmul.mubr.bf16.gmra.mrb[0].mxu0 %v2541
    %v2579 = vpop.f32.mrb[0].mxu0
    %v2580 = vadd.f32 0.0, %v2579
    %v2581 = vpop.f32.mrb[0].mxu0
    %v2582 = vpop.f32.mrb[0].mxu0
    %v2583 = vadd.f32 0.0, %v2582
    %v2584 = vpop.f32.mrb[0].mxu0
    %2585 = vmatprep.mubr.bf16.mxu0 0
    %2586 = vmatmul.mubr.bf16.gmra.mrb[0].mxu0 %v2542
    %v2587 = vpop.f32.mrb[0].mxu0
    %v2588 = vadd.f32 0.0, %v2587
    %v2589 = vpop.f32.mrb[0].mxu0
    %v2590 = vpop.f32.mrb[0].mxu0
    %v2591 = vadd.f32 0.0, %v2590
    %v2592 = vpop.f32.mrb[0].mxu0
    %2593 = vmatprep.mubr.bf16.mxu0 0
    %2594 = vmatmul.mubr.bf16.gmra.mrb[0].mxu0 %v2543
    %v2595 = vpop.f32.mrb[0].mxu0
    %v2596 = vadd.f32 0.0, %v2595
    %v2597 = vpop.f32.mrb[0].mxu0
    %v2598 = vpop.f32.mrb[0].mxu0
    %v2599 = vadd.f32 0.0, %v2598
    %v2600 = vpop.f32.mrb[0].mxu0
    %2601 = vmatprep.mubr.bf16.mxu0 0
    %2602 = vmatmul.mubr.bf16.gmra.mrb[0].mxu0 %v2544
    %v2603 = vpop.f32.mrb[0].mxu0
    %v2604 = vadd.f32 0.0, %v2603
    %v2605 = vpop.f32.mrb[0].mxu0
    %v2606 = vpop.f32.mrb[0].mxu0
    %v2607 = vadd.f32 0.0, %v2606
    %v2608 = vpop.f32.mrb[0].mxu0
    %2609 = vdwg.mxu0
    %v2610 = vadd.f32 %v2580, %v1063
    %v2611 = vadd.f32 %v2583, %v1064
    %v2612 = vadd.f32 %v2588, %v1065
    %v2613 = vadd.f32 %v2591, %v1066
    %v2614 = vadd.f32 %v2596, %v1067
    %v2615 = vadd.f32 %v2599, %v1068
    %v2616 = vadd.f32 %v2604, %v1069
    %v2617 = vadd.f32 %v2607, %v1070
    %v2618 = vsel %vm1410, %v2610, -inf
    %v2619 = vsel %vm1410, %v2611, -inf
    %v2620 = vsel %vm1410, %v2612, -inf
    %v2621 = vsel %vm1410, %v2613, -inf
    %v2622 = vsel %vm1410, %v2614, -inf
    %v2623 = vmax.f32 %v2618, %v2622
    %v2624 = vsel %vm1410, %v2615, -inf
    %v2625 = vmax.f32 %v2619, %v2624
    %v2626 = vsel %vm1410, %v2616, -inf
    %v2627 = vmax.f32 %v2620, %v2626
    %v2628 = vsel %vm1410, %v2617, -inf
    %v2629 = vmax.f32 %v2621, %v2628
    %v2630 = vmax.f32 %v2623, %v2625
    %v2631 = vmax.f32 %v2627, %v2629
    %v2632 = vmax.f32 %v2630, %v2631
    %v2633 = vsub.f32 %v2610, %v2632
    %v2634 = vsub.f32 %v2611, %v2632
    %v2635 = vsub.f32 %v2612, %v2632
    %v2636 = vsub.f32 %v2613, %v2632
    %v2637 = vsub.f32 %v2614, %v2632
    %v2638 = vsub.f32 %v2615, %v2632
    %v2639 = vsub.f32 %v2616, %v2632
    %v2640 = vsub.f32 %v2617, %v2632
    %v2641 = vmul.f32 %v2633, 1.442695
    %v2642 = vpow.pop %v2641
    %v2643 = vmul.f32 %v2634, 1.442695
    %v2644 = vpow.pop %v2643
    %v2645 = vmul.f32 %v2635, 1.442695
    %v2646 = vpow.pop %v2645
    %v2647 = vmul.f32 %v2636, 1.442695
    %v2648 = vpow.pop %v2647
    %v2649 = vmul.f32 %v2637, 1.442695
    %v2650 = vpow.pop %v2649
    %v2651 = vmul.f32 %v2638, 1.442695
    %v2652 = vpow.pop %v2651
    %v2653 = vmul.f32 %v2639, 1.442695
    %v2654 = vpow.pop %v2653
    %v2655 = vmul.f32 %v2640, 1.442695
    %v2656 = vpow.pop %v2655
    %v2657 = vsel %vm1410, %v2642, 0.0
    %v2658 = vsel %vm1410, %v2644, 0.0
    %v2659 = vadd.f32 %v2657, %v2658
    %v2660 = vsel %vm1410, %v2646, 0.0
    %v2661 = vadd.f32 %v2659, %v2660
    %v2662 = vsel %vm1410, %v2648, 0.0
    %v2663 = vadd.f32 %v2661, %v2662
    %v2664 = vsel %vm1410, %v2650, 0.0
    %v2665 = vadd.f32 %v2663, %v2664
    %v2666 = vsel %vm1410, %v2652, 0.0
    %v2667 = vadd.f32 %v2665, %v2666
    %v2668 = vsel %vm1410, %v2654, 0.0
    %v2669 = vadd.f32 %v2667, %v2668
    %v2670 = vsel %vm1410, %v2656, 0.0
    %v2671 = vadd.f32 %v2669, %v2670
    %v2672 = vrcp.pop %v2671
    %v2673 = vmul.f32 %v2642, %v2672
    %v2674 = vmul.f32 %v2644, %v2672
    %v2675 = vmul.f32 %v2646, %v2672
    %v2676 = vmul.f32 %v2648, %v2672
    %v2677 = vmul.f32 %v2650, %v2672
    %v2678 = vmul.f32 %v2652, %v2672
    %v2679 = vmul.f32 %v2654, %v2672
    %v2680 = vmul.f32 %v2656, %v2672
    %v2681 = vmin.f32 %v2673, %v2164
    %v2682 = vmin.f32 %v2674, %v2165
    %v2683 = vmin.f32 %v2675, %v2166
    %v2684 = vmin.f32 %v2676, %v2167
    %v2685 = vmin.f32 %v2677, %v2168
    %v2686 = vmin.f32 %v2678, %v2169
    %v2687 = vmin.f32 %v2679, %v2170
    %v2688 = vmin.f32 %v2680, %v2171
    %v2689 = vsel %vm1410, %v2681, 0.0
    %v2690 = vsel %vm1410, %v2682, 0.0
    %v2691 = vadd.f32 %v2689, %v2690
    %v2692 = vsel %vm1410, %v2683, 0.0
    %v2693 = vadd.f32 %v2691, %v2692
    %v2694 = vsel %vm1410, %v2684, 0.0
    %v2695 = vadd.f32 %v2693, %v2694
    %v2696 = vsel %vm1410, %v2685, 0.0
    %v2697 = vadd.f32 %v2695, %v2696
    %v2698 = vsel %vm1410, %v2686, 0.0
    %v2699 = vadd.f32 %v2697, %v2698
    %v2700 = vsel %vm1410, %v2687, 0.0
    %v2701 = vadd.f32 %v2699, %v2700
    %v2702 = vsel %vm1410, %v2688, 0.0
    %v2703 = vadd.f32 %v2701, %v2702
    %v2704 = vadd.f32 %v2164, %v2673
    %v2705 = vadd.f32 %v2165, %v2674
    %v2706 = vadd.f32 %v2166, %v2675
    %v2707 = vadd.f32 %v2167, %v2676
    %v2708 = vadd.f32 %v2168, %v2677
    %v2709 = vadd.f32 %v2169, %v2678
    %v2710 = vadd.f32 %v2170, %v2679
    %v2711 = vadd.f32 %v2171, %v2680
    %2713 = vset.pattern.permute.xlu0 0
    %2714 = vperm.xlu0 %2713, %v2673
    %v2715 = vpop.permute.xlu0 %2714
    %2718 = vset.pattern.permute.xlu0 0
    %2719 = vperm.xlu0 %2718, %v2674
    %v2720 = vpop.permute.xlu0 %2719
    %2723 = vset.pattern.permute.xlu0 0
    %2724 = vperm.xlu0 %2723, %v2675
    %v2725 = vpop.permute.xlu0 %2724
    %2728 = vset.pattern.permute.xlu0 0
    %2729 = vperm.xlu0 %2728, %v2676
    %v2730 = vpop.permute.xlu0 %2729
    %2733 = vset.pattern.permute.xlu0 0
    %2734 = vperm.xlu0 %2733, %v2677
    %v2735 = vpop.permute.xlu0 %2734
    %2738 = vset.pattern.permute.xlu0 0
    %2739 = vperm.xlu0 %2738, %v2678
    %v2740 = vpop.permute.xlu0 %2739
    %2743 = vset.pattern.permute.xlu0 0
    %2744 = vperm.xlu0 %2743, %v2679
    %v2745 = vpop.permute.xlu0 %2744
    %2748 = vset.pattern.permute.xlu0 0
    %2749 = vperm.xlu0 %2748, %v2680
    %v2750 = vpop.permute.xlu0 %2749
    %v2752 = vmul.f32 %v2715, %v946
    %v2753 = vmul.f32 %v2720, %v947
    %v2754 = vmul.f32 %v2725, %v948
    %v2755 = vmul.f32 %v2730, %v949
    %v2756 = vmul.f32 %v2735, %v950
    %v2757 = vmul.f32 %v2740, %v951
    %v2758 = vmul.f32 %v2745, %v952
    %v2759 = vmul.f32 %v2750, %v953
    %v2760 = vsel %vm191, %v2752, 0.0
    %v2761 = vsel %vm191, %v2753, 0.0
    %v2762 = vadd.f32 %v2760, %v2761
    %v2763 = vsel %vm191, %v2754, 0.0
    %v2764 = vadd.f32 %v2762, %v2763
    %v2765 = vsel %vm191, %v2755, 0.0
    %v2766 = vadd.f32 %v2764, %v2765
    %v2767 = vsel %vm191, %v2756, 0.0
    %v2768 = vadd.f32 %v2766, %v2767
    %v2769 = vsel %vm191, %v2757, 0.0
    %v2770 = vadd.f32 %v2768, %v2769
    %v2771 = vsel %vm191, %v2758, 0.0
    %v2772 = vadd.f32 %v2770, %v2771
    %v2773 = vsel %vm191, %v2759, 0.0
    %v2774 = vadd.f32 %v2772, %v2773
    %2775 = vrot.lane.b32.xlu0 %v779, 32
    %v2776 = vpop.permute.xlu0 %2775
    %2779 = vrot.lane.b32.xlu0 %v2774, 32
    %v2780 = vpop.permute.xlu0 %2779
    %v2782 = vsel %vm300, %v2776, %v2780
    %v2783 = vpack.c.bf16 %v2782, %v2782
    %v2785 = vsel %vm943, %v2783, 0
    %2787 = vmatprep.subr.bf16.mxu0 0
    %2788 = vmatpush1.bf16.msra.mxu0 %v1601
    %2789 = vmatprep.subr.bf16.mxu0 0
    %2790 = vmatpush1.bf16.msra.mxu0 %v1602
    %2791 = vmatprep.subr.bf16.mxu0 0
    %2792 = vmatpush1.bf16.msra.mxu0 %v1603
    %2793 = vmatprep.subr.bf16.mxu0 0
    %2794 = vmatpush1.bf16.msra.mxu0 %v1604
    %2795 = vmatprep.subr.bf16.mxu0 0
    %2796 = vmatpush1.bf16.msra.mxu0 %v1605
    %2797 = vmatprep.subr.bf16.mxu0 0
    %2798 = vmatpush1.bf16.msra.mxu0 %v1606
    %2799 = vmatprep.subr.bf16.mxu0 0
    %2800 = vmatpush1.bf16.msra.mxu0 0
    %2801 = vmatprep.subr.bf16.mxu0 0
    %2802 = vmatpush1.bf16.msra.mxu0 0
    %2803 = vmatprep.subr.bf16.mxu0 0
    %2804 = vmatpush1.bf16.msra.mxu0 0
    %2805 = vmatprep.subr.bf16.mxu0 0
    %2806 = vmatpush1.bf16.msra.mxu0 0
    %2807 = vmatprep.subr.bf16.mxu0 0
    %2808 = vmatpush1.bf16.msra.mxu0 0
    %2809 = vmatprep.subr.bf16.mxu0 0
    %2810 = vmatpush1.bf16.msra.mxu0 0
    %2811 = vmatprep.subr.bf16.mxu0 0
    %2812 = vmatpush1.bf16.msra.mxu0 0
    %2813 = vmatprep.subr.bf16.mxu0 0
    %2814 = vmatpush1.bf16.msra.mxu0 0
    %2815 = vmatprep.subr.bf16.mxu0 0
    %2816 = vmatpush1.bf16.msra.mxu0 0
    %2817 = vmatprep.subr.bf16.mxu0 0
    %2818 = vmatpush1.bf16.msra.mxu0 0
    %2819 = vmatprep.mubr.bf16.mxu0 0
    %2820 = vmatmul.mubr.bf16.gmra.mrb[0].mxu0 %v2785
    %v2821 = vpop.f32.mrb[0].mxu0
    %v2822 = vadd.f32 %v1195, %v2821
    %v2823 = vpop.f32.mrb[0].mxu0
    %v2824 = vpop.f32.mrb[0].mxu0
    %v2825 = vpop.f32.mrb[0].mxu0
    %2826 = vdwg.mxu0
    %v2827 = vxor.u32 %v2822, 2147483648
    %v2828 = vmul.f32 %v2827, 1.442695
    %v2829 = vpow.pop %v2828
    %v2830 = vadd.f32 %v2829, 1.0
    %v2831 = vrcp.pop %v2830
    %v2832 = vmul.f32 1.0, %v2831
    %2833 = vmatprep.subr.bf16.mxu0 0
    %2834 = vmatpush1.bf16.msra.mxu0 %v1690
    %2835 = vmatprep.subr.bf16.mxu0 0
    %2836 = vmatpush1.bf16.msra.mxu0 %v1691
    %2837 = vmatprep.subr.bf16.mxu0 0
    %2838 = vmatpush1.bf16.msra.mxu0 %v1692
    %2839 = vmatprep.subr.bf16.mxu0 0
    %2840 = vmatpush1.bf16.msra.mxu0 %v1693
    %2841 = vmatprep.subr.bf16.mxu0 0
    %2842 = vmatpush1.bf16.msra.mxu0 %v1694
    %2843 = vmatprep.subr.bf16.mxu0 0
    %2844 = vmatpush1.bf16.msra.mxu0 %v1695
    %2845 = vmatprep.subr.bf16.mxu0 0
    %2846 = vmatpush1.bf16.msra.mxu0 0
    %2847 = vmatprep.subr.bf16.mxu0 0
    %2848 = vmatpush1.bf16.msra.mxu0 0
    %2849 = vmatprep.subr.bf16.mxu0 0
    %2850 = vmatpush1.bf16.msra.mxu0 0
    %2851 = vmatprep.subr.bf16.mxu0 0
    %2852 = vmatpush1.bf16.msra.mxu0 0
    %2853 = vmatprep.subr.bf16.mxu0 0
    %2854 = vmatpush1.bf16.msra.mxu0 0
    %2855 = vmatprep.subr.bf16.mxu0 0
    %2856 = vmatpush1.bf16.msra.mxu0 0
    %2857 = vmatprep.subr.bf16.mxu0 0
    %2858 = vmatpush1.bf16.msra.mxu0 0
    %2859 = vmatprep.subr.bf16.mxu0 0
    %2860 = vmatpush1.bf16.msra.mxu0 0
    %2861 = vmatprep.subr.bf16.mxu0 0
    %2862 = vmatpush1.bf16.msra.mxu0 0
    %2863 = vmatprep.subr.bf16.mxu0 0
    %2864 = vmatpush1.bf16.msra.mxu0 0
    %2865 = vmatprep.mubr.bf16.mxu0 0
    %2866 = vmatmul.mubr.bf16.gmra.mrb[0].mxu0 %v2785
    %v2867 = vpop.f32.mrb[0].mxu0
    %v2868 = vadd.f32 %v1665, %v2867
    %v2869 = vpop.f32.mrb[0].mxu0
    %v2870 = vpop.f32.mrb[0].mxu0
    %v2871 = vpop.f32.mrb[0].mxu0
    %2872 = vdwg.mxu0
    %v2873 = vpack.c.bf16 %v2868, %v2868
    %2874 = vmatprep.subr.bf16.mxu0 0
    %2875 = vmatpush1.bf16.msra.mxu0 %v1779
    %2876 = vmatprep.subr.bf16.mxu0 0
    %2877 = vmatpush1.bf16.msra.mxu0 %v1780
    %2878 = vmatprep.subr.bf16.mxu0 0
    %2879 = vmatpush1.bf16.msra.mxu0 %v1781
    %2880 = vmatprep.subr.bf16.mxu0 0
    %2881 = vmatpush1.bf16.msra.mxu0 %v1782
    %2882 = vmatprep.subr.bf16.mxu0 0
    %2883 = vmatpush1.bf16.msra.mxu0 %v1783
    %2884 = vmatprep.subr.bf16.mxu0 0
    %2885 = vmatpush1.bf16.msra.mxu0 %v1784
    %2886 = vmatprep.subr.bf16.mxu0 0
    %2887 = vmatpush1.bf16.msra.mxu0 %v1785
    %2888 = vmatprep.subr.bf16.mxu0 0
    %2889 = vmatpush1.bf16.msra.mxu0 %v1786
    %2890 = vmatprep.subr.bf16.mxu0 0
    %2891 = vmatpush1.bf16.msra.mxu0 0
    %2892 = vmatprep.subr.bf16.mxu0 0
    %2893 = vmatpush1.bf16.msra.mxu0 0
    %2894 = vmatprep.subr.bf16.mxu0 0
    %2895 = vmatpush1.bf16.msra.mxu0 0
    %2896 = vmatprep.subr.bf16.mxu0 0
    %2897 = vmatpush1.bf16.msra.mxu0 0
    %2898 = vmatprep.subr.bf16.mxu0 0
    %2899 = vmatpush1.bf16.msra.mxu0 0
    %2900 = vmatprep.subr.bf16.mxu0 0
    %2901 = vmatpush1.bf16.msra.mxu0 0
    %2902 = vmatprep.subr.bf16.mxu0 0
    %2903 = vmatpush1.bf16.msra.mxu0 0
    %2904 = vmatprep.subr.bf16.mxu0 0
    %2905 = vmatpush1.bf16.msra.mxu0 0
    %2906 = vmatprep.mubr.bf16.mxu0 0
    %2907 = vmatmul.mubr.bf16.gmra.mrb[0].mxu0 %v2873
    %v2908 = vpop.f32.mrb[0].mxu0
    %v2909 = vadd.f32 %v1746, %v2908
    %v2910 = vpop.f32.mrb[0].mxu0
    %v2911 = vpop.f32.mrb[0].mxu0
    %v2912 = vpop.f32.mrb[0].mxu0
    %2913 = vdwg.mxu0
    %2914 = vmax.xlane.f32.xlu0 %v2909
    %v2915 = vpop.xlane.xlu0 %2914
    %v2916 = vsub.f32 %v2909, %v2915
    %v2917 = vmul.f32 %v2916, 1.442695
    %v2918 = vpow.pop %v2917
    %2919 = vadd.xlane.f32.xlu0 %v2918
    %v2920 = vpop.xlane.xlu0 %2919
    %v2921 = vrcp.pop %v2920
    %v2922 = vmul.f32 %v2918, %v2921
    %v2923 = vld [vmem:[#allocation2] sm:$0xff]
    %v2924 = vld [vmem:[#allocation2 + $0x8] sm:$0xff]
    %v2925 = vld [vmem:[#allocation2 + $0x10] sm:$0xff]
    %v2926 = vld [vmem:[#allocation2 + $0x18] sm:$0xff]
    %v2927 = vld [vmem:[#allocation2 + $0x20] sm:$0xff]
    %v2928 = vld [vmem:[#allocation2 + $0x28] sm:$0xff]
    %v2929 = vld [vmem:[#allocation2 + $0x30] sm:$0xff]
    %v2930 = vld [vmem:[#allocation2 + $0x38] sm:$0xff]
    %v2931 = vmul.f32 %v2923, %v2715
    %v2932 = vmul.f32 %v2924, %v2720
    %v2933 = vmul.f32 %v2925, %v2725
    %v2934 = vmul.f32 %v2926, %v2730
    %v2935 = vmul.f32 %v2927, %v2735
    %v2936 = vmul.f32 %v2928, %v2740
    %v2937 = vmul.f32 %v2929, %v2745
    %v2938 = vmul.f32 %v2930, %v2750
    %v2939 = vadd.f32 %v2931, %v2932
    %v2940 = vadd.f32 %v2939, %v2933
    %v2941 = vadd.f32 %v2940, %v2934
    %v2942 = vadd.f32 %v2941, %v2935
    %v2943 = vadd.f32 %v2942, %v2936
    %v2944 = vadd.f32 %v2943, %v2937
    %v2945 = vadd.f32 %v2944, %v2938
    %2947 = vset.pattern.permute.xlu0 0
    %2948 = vperm.xlu0 %2947, %v2832
    %v2949 = vpop.permute.xlu0 %2948
    %v2951 = vmul.f32 %v2922, %v2949
    %v2952 = vsub.f32 1.0, %v2832
    %2954 = vset.pattern.permute.xlu0 0
    %2955 = vperm.xlu0 %2954, %v2952
    %v2956 = vpop.permute.xlu0 %2955
    %v2958 = vmul.f32 %v2945, %v2956
    %v2959 = vadd.f32 %v2951, %v2958
    %s2960 = scalar_lea.vmem [#allocation8], 16
    %2961 = vst [vmem:[%s2960] sm:$0xff] %v2959
    %v2962 = vpack.c.bf16 %v928, %v928
    %2964 = vrot.lane.b32.xlu0 %v2962, 32
    %v2965 = vpop.permute.xlu0 %2964
    %v2967 = vsel %vm300, %v2965, 0
    %2969 = vmatprep.subr.bf16.mxu0 0
    %2970 = vmatpush1.bf16.msra.mxu0 %v1209
    %2971 = vmatprep.subr.bf16.mxu0 0
    %2972 = vmatpush1.bf16.msra.mxu0 %v1210
    %2973 = vmatprep.subr.bf16.mxu0 0
    %2974 = vmatpush1.bf16.msra.mxu0 0
    %2975 = vmatprep.subr.bf16.mxu0 0
    %2976 = vmatpush1.bf16.msra.mxu0 0
    %2977 = vmatprep.subr.bf16.mxu0 0
    %2978 = vmatpush1.bf16.msra.mxu0 0
    %2979 = vmatprep.subr.bf16.mxu0 0
    %2980 = vmatpush1.bf16.msra.mxu0 0
    %2981 = vmatprep.subr.bf16.mxu0 0
    %2982 = vmatpush1.bf16.msra.mxu0 0
    %2983 = vmatprep.subr.bf16.mxu0 0
    %2984 = vmatpush1.bf16.msra.mxu0 0
    %2985 = vmatprep.subr.bf16.mxu0 0
    %2986 = vmatpush1.bf16.msra.mxu0 0
    %2987 = vmatprep.subr.bf16.mxu0 0
    %2988 = vmatpush1.bf16.msra.mxu0 0
    %2989 = vmatprep.subr.bf16.mxu0 0
    %2990 = vmatpush1.bf16.msra.mxu0 0
    %2991 = vmatprep.subr.bf16.mxu0 0
    %2992 = vmatpush1.bf16.msra.mxu0 0
    %2993 = vmatprep.subr.bf16.mxu0 0
    %2994 = vmatpush1.bf16.msra.mxu0 0
    %2995 = vmatprep.subr.bf16.mxu0 0
    %2996 = vmatpush1.bf16.msra.mxu0 0
    %2997 = vmatprep.subr.bf16.mxu0 0
    %2998 = vmatpush1.bf16.msra.mxu0 0
    %2999 = vmatprep.subr.bf16.mxu0 0
    %3000 = vmatpush1.bf16.msra.mxu0 0
    %3001 = vmatprep.mubr.bf16.mxu0 0
    %3002 = vmatmul.mubr.bf16.gmra.mrb[0].mxu0 %v2967
    %v3003 = vpop.f32.mrb[0].mxu0
    %v3004 = vadd.f32 0.0, %v3003
    %v3005 = vpop.f32.mrb[0].mxu0
    %v3006 = vpop.f32.mrb[0].mxu0
    %v3007 = vpop.f32.mrb[0].mxu0
    %3008 = vdwg.mxu0
    %v3009 = vadd.f32 %v1033, %v3004
    %v3010 = vadd.f32 %v1036, %v3004
    %v3011 = vadd.f32 %v1041, %v3004
    %v3012 = vadd.f32 %v1044, %v3004
    %v3013 = vadd.f32 %v1049, %v3004
    %v3014 = vadd.f32 %v1052, %v3004
    %v3015 = vadd.f32 %v1057, %v3004
    %v3016 = vadd.f32 %v1060, %v3004
    %3018 = vset.pattern.permute.xlu0 0
    %3019 = vperm.xlu0 %3018, %v2704
    %v3020 = vpop.permute.xlu0 %3019
    %3023 = vset.pattern.permute.xlu0 0
    %3024 = vperm.xlu0 %3023, %v2705
    %v3025 = vpop.permute.xlu0 %3024
    %3028 = vset.pattern.permute.xlu0 0
    %3029 = vperm.xlu0 %3028, %v2706
    %v3030 = vpop.permute.xlu0 %3029
    %3033 = vset.pattern.permute.xlu0 0
    %3034 = vperm.xlu0 %3033, %v2707
    %v3035 = vpop.permute.xlu0 %3034
    %3038 = vset.pattern.permute.xlu0 0
    %3039 = vperm.xlu0 %3038, %v2708
    %v3040 = vpop.permute.xlu0 %3039
    %3043 = vset.pattern.permute.xlu0 0
    %3044 = vperm.xlu0 %3043, %v2709
    %v3045 = vpop.permute.xlu0 %3044
    %3048 = vset.pattern.permute.xlu0 0
    %3049 = vperm.xlu0 %3048, %v2710
    %v3050 = vpop.permute.xlu0 %3049
    %3053 = vset.pattern.permute.xlu0 0
    %3054 = vperm.xlu0 %3053, %v2711
    %v3055 = vpop.permute.xlu0 %3054
    %v3057 = vmul.f32 %v3020, %v1267
    %v3058 = vmul.f32 %v3025, %v1267
    %v3059 = vmul.f32 %v3030, %v1267
    %v3060 = vmul.f32 %v3035, %v1267
    %v3061 = vmul.f32 %v3040, %v1267
    %v3062 = vmul.f32 %v3045, %v1267
    %v3063 = vmul.f32 %v3050, %v1267
    %v3064 = vmul.f32 %v3055, %v1267
    %v3065 = vadd.f32 %v3009, %v3057
    %v3066 = vadd.f32 %v3010, %v3058
    %v3067 = vadd.f32 %v3011, %v3059
    %v3068 = vadd.f32 %v3012, %v3060
    %v3069 = vadd.f32 %v3013, %v3061
    %v3070 = vadd.f32 %v3014, %v3062
    %v3071 = vadd.f32 %v3015, %v3063
    %v3072 = vadd.f32 %v3016, %v3064
    %v3073 = vtanh.pop %v3065
    %v3074 = vtanh.pop %v3066
    %v3075 = vtanh.pop %v3067
    %v3076 = vtanh.pop %v3068
    %v3077 = vtanh.pop %v3069
    %v3078 = vtanh.pop %v3070
    %v3079 = vtanh.pop %v3071
    %v3080 = vtanh.pop %v3072
    %v3081 = vpack.c.bf16 %v3074, %v3073
    %v3082 = vpack.c.bf16 %v3076, %v3075
    %v3083 = vpack.c.bf16 %v3078, %v3077
    %v3084 = vpack.c.bf16 %v3080, %v3079
    %3085 = vmatprep.subr.bf16.mxu0 0
    %3086 = vmatpush1.bf16.msra.mxu0 %v1321
    %3087 = vmatprep.subr.bf16.mxu0 0
    %3088 = vmatpush1.bf16.msra.mxu0 %v1322
    %3089 = vmatprep.subr.bf16.mxu0 0
    %3090 = vmatpush1.bf16.msra.mxu0 %v1323
    %3091 = vmatprep.subr.bf16.mxu0 0
    %3092 = vmatpush1.bf16.msra.mxu0 %v1324
    %3093 = vmatprep.subr.bf16.mxu0 0
    %3094 = vmatpush1.bf16.msra.mxu0 %v1325
    %3095 = vmatprep.subr.bf16.mxu0 0
    %3096 = vmatpush1.bf16.msra.mxu0 %v1326
    %3097 = vmatprep.subr.bf16.mxu0 0
    %3098 = vmatpush1.bf16.msra.mxu0 %v1327
    %3099 = vmatprep.subr.bf16.mxu0 0
    %3100 = vmatpush1.bf16.msra.mxu0 %v1328
    %3101 = vmatprep.subr.bf16.mxu0 0
    %3102 = vmatpush1.bf16.msra.mxu0 0
    %3103 = vmatprep.subr.bf16.mxu0 0
    %3104 = vmatpush1.bf16.msra.mxu0 0
    %3105 = vmatprep.subr.bf16.mxu0 0
    %3106 = vmatpush1.bf16.msra.mxu0 0
    %3107 = vmatprep.subr.bf16.mxu0 0
    %3108 = vmatpush1.bf16.msra.mxu0 0
    %3109 = vmatprep.subr.bf16.mxu0 0
    %3110 = vmatpush1.bf16.msra.mxu0 0
    %3111 = vmatprep.subr.bf16.mxu0 0
    %3112 = vmatpush1.bf16.msra.mxu0 0
    %3113 = vmatprep.subr.bf16.mxu0 0
    %3114 = vmatpush1.bf16.msra.mxu0 0
    %3115 = vmatprep.subr.bf16.mxu0 0
    %3116 = vmatpush1.bf16.msra.mxu0 0
    %3117 = vmatprep.mubr.bf16.mxu0 0
    %3118 = vmatmul.mubr.bf16.gmra.mrb[0].mxu0 %v3081
    %v3119 = vpop.f32.mrb[0].mxu0
    %v3120 = vadd.f32 0.0, %v3119
    %v3121 = vpop.f32.mrb[0].mxu0
    %v3122 = vpop.f32.mrb[0].mxu0
    %v3123 = vadd.f32 0.0, %v3122
    %v3124 = vpop.f32.mrb[0].mxu0
    %3125 = vmatprep.mubr.bf16.mxu0 0
    %3126 = vmatmul.mubr.bf16.gmra.mrb[0].mxu0 %v3082
    %v3127 = vpop.f32.mrb[0].mxu0
    %v3128 = vadd.f32 0.0, %v3127
    %v3129 = vpop.f32.mrb[0].mxu0
    %v3130 = vpop.f32.mrb[0].mxu0
    %v3131 = vadd.f32 0.0, %v3130
    %v3132 = vpop.f32.mrb[0].mxu0
    %3133 = vmatprep.mubr.bf16.mxu0 0
    %3134 = vmatmul.mubr.bf16.gmra.mrb[0].mxu0 %v3083
    %v3135 = vpop.f32.mrb[0].mxu0
    %v3136 = vadd.f32 0.0, %v3135
    %v3137 = vpop.f32.mrb[0].mxu0
    %v3138 = vpop.f32.mrb[0].mxu0
    %v3139 = vadd.f32 0.0, %v3138
    %v3140 = vpop.f32.mrb[0].mxu0
    %3141 = vmatprep.mubr.bf16.mxu0 0
    %3142 = vmatmul.mubr.bf16.gmra.mrb[0].mxu0 %v3084
    %v3143 = vpop.f32.mrb[0].mxu0
    %v3144 = vadd.f32 0.0, %v3143
    %v3145 = vpop.f32.mrb[0].mxu0
    %v3146 = vpop.f32.mrb[0].mxu0
    %v3147 = vadd.f32 0.0, %v3146
    %v3148 = vpop.f32.mrb[0].mxu0
    %3149 = vdwg.mxu0
    %v3150 = vadd.f32 %v3120, %v1063
    %v3151 = vadd.f32 %v3123, %v1064
    %v3152 = vadd.f32 %v3128, %v1065
    %v3153 = vadd.f32 %v3131, %v1066
    %v3154 = vadd.f32 %v3136, %v1067
    %v3155 = vadd.f32 %v3139, %v1068
    %v3156 = vadd.f32 %v3144, %v1069
    %v3157 = vadd.f32 %v3147, %v1070
    %v3158 = vsel %vm1410, %v3150, -inf
    %v3159 = vsel %vm1410, %v3151, -inf
    %v3160 = vsel %vm1410, %v3152, -inf
    %v3161 = vsel %vm1410, %v3153, -inf
    %v3162 = vsel %vm1410, %v3154, -inf
    %v3163 = vmax.f32 %v3158, %v3162
    %v3164 = vsel %vm1410, %v3155, -inf
    %v3165 = vmax.f32 %v3159, %v3164
    %v3166 = vsel %vm1410, %v3156, -inf
    %v3167 = vmax.f32 %v3160, %v3166
    %v3168 = vsel %vm1410, %v3157, -inf
    %v3169 = vmax.f32 %v3161, %v3168
    %v3170 = vmax.f32 %v3163, %v3165
    %v3171 = vmax.f32 %v3167, %v3169
    %v3172 = vmax.f32 %v3170, %v3171
    %v3173 = vsub.f32 %v3150, %v3172
    %v3174 = vsub.f32 %v3151, %v3172
    %v3175 = vsub.f32 %v3152, %v3172
    %v3176 = vsub.f32 %v3153, %v3172
    %v3177 = vsub.f32 %v3154, %v3172
    %v3178 = vsub.f32 %v3155, %v3172
    %v3179 = vsub.f32 %v3156, %v3172
    %v3180 = vsub.f32 %v3157, %v3172
    %v3181 = vmul.f32 %v3173, 1.442695
    %v3182 = vpow.pop %v3181
    %v3183 = vmul.f32 %v3174, 1.442695
    %v3184 = vpow.pop %v3183
    %v3185 = vmul.f32 %v3175, 1.442695
    %v3186 = vpow.pop %v3185
    %v3187 = vmul.f32 %v3176, 1.442695
    %v3188 = vpow.pop %v3187
    %v3189 = vmul.f32 %v3177, 1.442695
    %v3190 = vpow.pop %v3189
    %v3191 = vmul.f32 %v3178, 1.442695
    %v3192 = vpow.pop %v3191
    %v3193 = vmul.f32 %v3179, 1.442695
    %v3194 = vpow.pop %v3193
    %v3195 = vmul.f32 %v3180, 1.442695
    %v3196 = vpow.pop %v3195
    %v3197 = vsel %vm1410, %v3182, 0.0
    %v3198 = vsel %vm1410, %v3184, 0.0
    %v3199 = vadd.f32 %v3197, %v3198
    %v3200 = vsel %vm1410, %v3186, 0.0
    %v3201 = vadd.f32 %v3199, %v3200
    %v3202 = vsel %vm1410, %v3188, 0.0
    %v3203 = vadd.f32 %v3201, %v3202
    %v3204 = vsel %vm1410, %v3190, 0.0
    %v3205 = vadd.f32 %v3203, %v3204
    %v3206 = vsel %vm1410, %v3192, 0.0
    %v3207 = vadd.f32 %v3205, %v3206
    %v3208 = vsel %vm1410, %v3194, 0.0
    %v3209 = vadd.f32 %v3207, %v3208
    %v3210 = vsel %vm1410, %v3196, 0.0
    %v3211 = vadd.f32 %v3209, %v3210
    %v3212 = vrcp.pop %v3211
    %v3213 = vmul.f32 %v3182, %v3212
    %v3214 = vmul.f32 %v3184, %v3212
    %v3215 = vmul.f32 %v3186, %v3212
    %v3216 = vmul.f32 %v3188, %v3212
    %v3217 = vmul.f32 %v3190, %v3212
    %v3218 = vmul.f32 %v3192, %v3212
    %v3219 = vmul.f32 %v3194, %v3212
    %v3220 = vmul.f32 %v3196, %v3212
    %v3221 = vmin.f32 %v3213, %v2704
    %v3222 = vmin.f32 %v3214, %v2705
    %v3223 = vmin.f32 %v3215, %v2706
    %v3224 = vmin.f32 %v3216, %v2707
    %v3225 = vmin.f32 %v3217, %v2708
    %v3226 = vmin.f32 %v3218, %v2709
    %v3227 = vmin.f32 %v3219, %v2710
    %v3228 = vmin.f32 %v3220, %v2711
    %v3229 = vsel %vm1410, %v3221, 0.0
    %v3230 = vsel %vm1410, %v3222, 0.0
    %v3231 = vadd.f32 %v3229, %v3230
    %v3232 = vsel %vm1410, %v3223, 0.0
    %v3233 = vadd.f32 %v3231, %v3232
    %v3234 = vsel %vm1410, %v3224, 0.0
    %v3235 = vadd.f32 %v3233, %v3234
    %v3236 = vsel %vm1410, %v3225, 0.0
    %v3237 = vadd.f32 %v3235, %v3236
    %v3238 = vsel %vm1410, %v3226, 0.0
    %v3239 = vadd.f32 %v3237, %v3238
    %v3240 = vsel %vm1410, %v3227, 0.0
    %v3241 = vadd.f32 %v3239, %v3240
    %v3242 = vsel %vm1410, %v3228, 0.0
    %v3243 = vadd.f32 %v3241, %v3242
    %v3244 = vadd.f32 %v2704, %v3213
    %v3245 = vadd.f32 %v2705, %v3214
    %v3246 = vadd.f32 %v2706, %v3215
    %v3247 = vadd.f32 %v2707, %v3216
    %v3248 = vadd.f32 %v2708, %v3217
    %v3249 = vadd.f32 %v2709, %v3218
    %v3250 = vadd.f32 %v2710, %v3219
    %v3251 = vadd.f32 %v2711, %v3220
    %3253 = vset.pattern.permute.xlu0 0
    %3254 = vperm.xlu0 %3253, %v3213
    %v3255 = vpop.permute.xlu0 %3254
    %3258 = vset.pattern.permute.xlu0 0
    %3259 = vperm.xlu0 %3258, %v3214
    %v3260 = vpop.permute.xlu0 %3259
    %3263 = vset.pattern.permute.xlu0 0
    %3264 = vperm.xlu0 %3263, %v3215
    %v3265 = vpop.permute.xlu0 %3264
    %3268 = vset.pattern.permute.xlu0 0
    %3269 = vperm.xlu0 %3268, %v3216
    %v3270 = vpop.permute.xlu0 %3269
    %3273 = vset.pattern.permute.xlu0 0
    %3274 = vperm.xlu0 %3273, %v3217
    %v3275 = vpop.permute.xlu0 %3274
    %3278 = vset.pattern.permute.xlu0 0
    %3279 = vperm.xlu0 %3278, %v3218
    %v3280 = vpop.permute.xlu0 %3279
    %3283 = vset.pattern.permute.xlu0 0
    %3284 = vperm.xlu0 %3283, %v3219
    %v3285 = vpop.permute.xlu0 %3284
    %3288 = vset.pattern.permute.xlu0 0
    %3289 = vperm.xlu0 %3288, %v3220
    %v3290 = vpop.permute.xlu0 %3289
    %v3292 = vmul.f32 %v3255, %v946
    %v3293 = vmul.f32 %v3260, %v947
    %v3294 = vmul.f32 %v3265, %v948
    %v3295 = vmul.f32 %v3270, %v949
    %v3296 = vmul.f32 %v3275, %v950
    %v3297 = vmul.f32 %v3280, %v951
    %v3298 = vmul.f32 %v3285, %v952
    %v3299 = vmul.f32 %v3290, %v953
    %v3300 = vsel %vm191, %v3292, 0.0
    %v3301 = vsel %vm191, %v3293, 0.0
    %v3302 = vadd.f32 %v3300, %v3301
    %v3303 = vsel %vm191, %v3294, 0.0
    %v3304 = vadd.f32 %v3302, %v3303
    %v3305 = vsel %vm191, %v3295, 0.0
    %v3306 = vadd.f32 %v3304, %v3305
    %v3307 = vsel %vm191, %v3296, 0.0
    %v3308 = vadd.f32 %v3306, %v3307
    %v3309 = vsel %vm191, %v3297, 0.0
    %v3310 = vadd.f32 %v3308, %v3309
    %v3311 = vsel %vm191, %v3298, 0.0
    %v3312 = vadd.f32 %v3310, %v3311
    %v3313 = vsel %vm191, %v3299, 0.0
    %v3314 = vadd.f32 %v3312, %v3313
    %3315 = vrot.lane.b32.xlu0 %v928, 32
    %v3316 = vpop.permute.xlu0 %3315
    %3319 = vrot.lane.b32.xlu0 %v3314, 32
    %v3320 = vpop.permute.xlu0 %3319
    %v3322 = vsel %vm300, %v3316, %v3320
    %v3323 = vpack.c.bf16 %v3322, %v3322
    %v3325 = vsel %vm943, %v3323, 0
    %3327 = vmatprep.subr.bf16.mxu0 0
    %3328 = vmatpush1.bf16.msra.mxu0 %v1601
    %3329 = vmatprep.subr.bf16.mxu0 0
    %3330 = vmatpush1.bf16.msra.mxu0 %v1602
    %3331 = vmatprep.subr.bf16.mxu0 0
    %3332 = vmatpush1.bf16.msra.mxu0 %v1603
    %3333 = vmatprep.subr.bf16.mxu0 0
    %3334 = vmatpush1.bf16.msra.mxu0 %v1604
    %3335 = vmatprep.subr.bf16.mxu0 0
    %3336 = vmatpush1.bf16.msra.mxu0 %v1605
    %3337 = vmatprep.subr.bf16.mxu0 0
    %3338 = vmatpush1.bf16.msra.mxu0 %v1606
    %3339 = vmatprep.subr.bf16.mxu0 0
    %3340 = vmatpush1.bf16.msra.mxu0 0
    %3341 = vmatprep.subr.bf16.mxu0 0
    %3342 = vmatpush1.bf16.msra.mxu0 0
    %3343 = vmatprep.subr.bf16.mxu0 0
    %3344 = vmatpush1.bf16.msra.mxu0 0
    %3345 = vmatprep.subr.bf16.mxu0 0
    %3346 = vmatpush1.bf16.msra.mxu0 0
    %3347 = vmatprep.subr.bf16.mxu0 0
    %3348 = vmatpush1.bf16.msra.mxu0 0
    %3349 = vmatprep.subr.bf16.mxu0 0
    %3350 = vmatpush1.bf16.msra.mxu0 0
    %3351 = vmatprep.subr.bf16.mxu0 0
    %3352 = vmatpush1.bf16.msra.mxu0 0
    %3353 = vmatprep.subr.bf16.mxu0 0
    %3354 = vmatpush1.bf16.msra.mxu0 0
    %3355 = vmatprep.subr.bf16.mxu0 0
    %3356 = vmatpush1.bf16.msra.mxu0 0
    %3357 = vmatprep.subr.bf16.mxu0 0
    %3358 = vmatpush1.bf16.msra.mxu0 0
    %3359 = vmatprep.mubr.bf16.mxu0 0
    %3360 = vmatmul.mubr.bf16.gmra.mrb[0].mxu0 %v3325
    %v3361 = vpop.f32.mrb[0].mxu0
    %v3362 = vadd.f32 %v1196, %v3361
    %v3363 = vpop.f32.mrb[0].mxu0
    %v3364 = vpop.f32.mrb[0].mxu0
    %v3365 = vpop.f32.mrb[0].mxu0
    %3366 = vdwg.mxu0
    %v3367 = vxor.u32 %v3362, 2147483648
    %v3368 = vmul.f32 %v3367, 1.442695
    %v3369 = vpow.pop %v3368
    %v3370 = vadd.f32 %v3369, 1.0
    %v3371 = vrcp.pop %v3370
    %v3372 = vmul.f32 1.0, %v3371
    %3373 = vmatprep.subr.bf16.mxu0 0
    %3374 = vmatpush1.bf16.msra.mxu0 %v1690
    %3375 = vmatprep.subr.bf16.mxu0 0
    %3376 = vmatpush1.bf16.msra.mxu0 %v1691
    %3377 = vmatprep.subr.bf16.mxu0 0
    %3378 = vmatpush1.bf16.msra.mxu0 %v1692
    %3379 = vmatprep.subr.bf16.mxu0 0
    %3380 = vmatpush1.bf16.msra.mxu0 %v1693
    %3381 = vmatprep.subr.bf16.mxu0 0
    %3382 = vmatpush1.bf16.msra.mxu0 %v1694
    %3383 = vmatprep.subr.bf16.mxu0 0
    %3384 = vmatpush1.bf16.msra.mxu0 %v1695
    %3385 = vmatprep.subr.bf16.mxu0 0
    %3386 = vmatpush1.bf16.msra.mxu0 0
    %3387 = vmatprep.subr.bf16.mxu0 0
    %3388 = vmatpush1.bf16.msra.mxu0 0
    %3389 = vmatprep.subr.bf16.mxu0 0
    %3390 = vmatpush1.bf16.msra.mxu0 0
    %3391 = vmatprep.subr.bf16.mxu0 0
    %3392 = vmatpush1.bf16.msra.mxu0 0
    %3393 = vmatprep.subr.bf16.mxu0 0
    %3394 = vmatpush1.bf16.msra.mxu0 0
    %3395 = vmatprep.subr.bf16.mxu0 0
    %3396 = vmatpush1.bf16.msra.mxu0 0
    %3397 = vmatprep.subr.bf16.mxu0 0
    %3398 = vmatpush1.bf16.msra.mxu0 0
    %3399 = vmatprep.subr.bf16.mxu0 0
    %3400 = vmatpush1.bf16.msra.mxu0 0
    %3401 = vmatprep.subr.bf16.mxu0 0
    %3402 = vmatpush1.bf16.msra.mxu0 0
    %3403 = vmatprep.subr.bf16.mxu0 0
    %3404 = vmatpush1.bf16.msra.mxu0 0
    %3405 = vmatprep.mubr.bf16.mxu0 0
    %3406 = vmatmul.mubr.bf16.gmra.mrb[0].mxu0 %v3325
    %v3407 = vpop.f32.mrb[0].mxu0
    %v3408 = vadd.f32 %v1665, %v3407
    %v3409 = vpop.f32.mrb[0].mxu0
    %v3410 = vpop.f32.mrb[0].mxu0
    %v3411 = vpop.f32.mrb[0].mxu0
    %3412 = vdwg.mxu0
    %v3413 = vpack.c.bf16 %v3408, %v3408
    %3414 = vmatprep.subr.bf16.mxu0 0
    %3415 = vmatpush1.bf16.msra.mxu0 %v1779
    %3416 = vmatprep.subr.bf16.mxu0 0
    %3417 = vmatpush1.bf16.msra.mxu0 %v1780
    %3418 = vmatprep.subr.bf16.mxu0 0
    %3419 = vmatpush1.bf16.msra.mxu0 %v1781
    %3420 = vmatprep.subr.bf16.mxu0 0
    %3421 = vmatpush1.bf16.msra.mxu0 %v1782
    %3422 = vmatprep.subr.bf16.mxu0 0
    %3423 = vmatpush1.bf16.msra.mxu0 %v1783
    %3424 = vmatprep.subr.bf16.mxu0 0
    %3425 = vmatpush1.bf16.msra.mxu0 %v1784
    %3426 = vmatprep.subr.bf16.mxu0 0
    %3427 = vmatpush1.bf16.msra.mxu0 %v1785
    %3428 = vmatprep.subr.bf16.mxu0 0
    %3429 = vmatpush1.bf16.msra.mxu0 %v1786
    %3430 = vmatprep.subr.bf16.mxu0 0
    %3431 = vmatpush1.bf16.msra.mxu0 0
    %3432 = vmatprep.subr.bf16.mxu0 0
    %3433 = vmatpush1.bf16.msra.mxu0 0
    %3434 = vmatprep.subr.bf16.mxu0 0
    %3435 = vmatpush1.bf16.msra.mxu0 0
    %3436 = vmatprep.subr.bf16.mxu0 0
    %3437 = vmatpush1.bf16.msra.mxu0 0
    %3438 = vmatprep.subr.bf16.mxu0 0
    %3439 = vmatpush1.bf16.msra.mxu0 0
    %3440 = vmatprep.subr.bf16.mxu0 0
    %3441 = vmatpush1.bf16.msra.mxu0 0
    %3442 = vmatprep.subr.bf16.mxu0 0
    %3443 = vmatpush1.bf16.msra.mxu0 0
    %3444 = vmatprep.subr.bf16.mxu0 0
    %3445 = vmatpush1.bf16.msra.mxu0 0
    %3446 = vmatprep.mubr.bf16.mxu0 0
    %3447 = vmatmul.mubr.bf16.gmra.mrb[0].mxu0 %v3413
    %v3448 = vpop.f32.mrb[0].mxu0
    %v3449 = vadd.f32 %v1746, %v3448
    %v3450 = vpop.f32.mrb[0].mxu0
    %v3451 = vpop.f32.mrb[0].mxu0
    %v3452 = vpop.f32.mrb[0].mxu0
    %3453 = vdwg.mxu0
    %3454 = vmax.xlane.f32.xlu0 %v3449
    %v3455 = vpop.xlane.xlu0 %3454
    %v3456 = vsub.f32 %v3449, %v3455
    %v3457 = vmul.f32 %v3456, 1.442695
    %v3458 = vpow.pop %v3457
    %3459 = vadd.xlane.f32.xlu0 %v3458
    %v3460 = vpop.xlane.xlu0 %3459
    %v3461 = vrcp.pop %v3460
    %v3462 = vmul.f32 %v3458, %v3461
    %v3463 = vld [vmem:[#allocation2] sm:$0xff]
    %v3464 = vld [vmem:[#allocation2 + $0x8] sm:$0xff]
    %v3465 = vld [vmem:[#allocation2 + $0x10] sm:$0xff]
    %v3466 = vld [vmem:[#allocation2 + $0x18] sm:$0xff]
    %v3467 = vld [vmem:[#allocation2 + $0x20] sm:$0xff]
    %v3468 = vld [vmem:[#allocation2 + $0x28] sm:$0xff]
    %v3469 = vld [vmem:[#allocation2 + $0x30] sm:$0xff]
    %v3470 = vld [vmem:[#allocation2 + $0x38] sm:$0xff]
    %v3471 = vmul.f32 %v3463, %v3255
    %v3472 = vmul.f32 %v3464, %v3260
    %v3473 = vmul.f32 %v3465, %v3265
    %v3474 = vmul.f32 %v3466, %v3270
    %v3475 = vmul.f32 %v3467, %v3275
    %v3476 = vmul.f32 %v3468, %v3280
    %v3477 = vmul.f32 %v3469, %v3285
    %v3478 = vmul.f32 %v3470, %v3290
    %v3479 = vadd.f32 %v3471, %v3472
    %v3480 = vadd.f32 %v3479, %v3473
    %v3481 = vadd.f32 %v3480, %v3474
    %v3482 = vadd.f32 %v3481, %v3475
    %v3483 = vadd.f32 %v3482, %v3476
    %v3484 = vadd.f32 %v3483, %v3477
    %v3485 = vadd.f32 %v3484, %v3478
    %3487 = vset.pattern.permute.xlu0 0
    %3488 = vperm.xlu0 %3487, %v3372
    %v3489 = vpop.permute.xlu0 %3488
    %v3491 = vmul.f32 %v3462, %v3489
    %v3492 = vsub.f32 1.0, %v3372
    %3494 = vset.pattern.permute.xlu0 0
    %3495 = vperm.xlu0 %3494, %v3492
    %v3496 = vpop.permute.xlu0 %3495
    %v3498 = vmul.f32 %v3485, %v3496
    %v3499 = vadd.f32 %v3491, %v3498
    %s3500 = scalar_lea.vmem [#allocation8], 24
    %3501 = vst [vmem:[%s3500] sm:$0xff] %v3499
    %3503 = vrot.lane.b32.xlu0 %v2163, 1
    %v3504 = vpop.permute.xlu0 %3503
    %3507 = vrot.lane.b32.xlu0 %v2703, 2
    %v3508 = vpop.permute.xlu0 %3507
    %3511 = vrot.lane.b32.xlu0 %v3243, 3
    %v3512 = vpop.permute.xlu0 %3511
    %3515 = vrot.lane.b32.xlu0 %v3244, 4
    %v3516 = vpop.permute.xlu0 %3515
    %3519 = vrot.lane.b32.xlu0 %v3245, 5
    %v3520 = vpop.permute.xlu0 %3519
    %3523 = vrot.lane.b32.xlu0 %v3246, 6
    %v3524 = vpop.permute.xlu0 %3523
    %3527 = vrot.lane.b32.xlu0 %v3247, 7
    %v3528 = vpop.permute.xlu0 %3527
    %3531 = vrot.lane.b32.xlu0 %v3248, 8
    %v3532 = vpop.permute.xlu0 %3531
    %3535 = vrot.lane.b32.xlu0 %v3249, 9
    %v3536 = vpop.permute.xlu0 %3535
    %3539 = vrot.lane.b32.xlu0 %v3250, 10
    %v3540 = vpop.permute.xlu0 %3539
    %3543 = vrot.lane.b32.xlu0 %v3251, 11
    %v3544 = vpop.permute.xlu0 %3543
    %v3546 = vsel %vm1410, %v1496, %v3504
    %vm3547 = vcmask 15360
    %v3548 = vsel %vm3547, %v3546, %v3508
    %vm3549 = vcmask 23552
    %v3550 = vsel %vm3549, %v3548, %v3512
    %vm3551 = vcmask 31744
    %v3552 = vsel %vm3551, %v3550, %v3516
    %vm3553 = vcmask 39936
    %v3554 = vsel %vm3553, %v3552, %v3520
    %vm3555 = vcmask 48128
    %v3556 = vsel %vm3555, %v3554, %v3524
    %vm3557 = vcmask 56320
    %v3558 = vsel %vm3557, %v3556, %v3528
    %vm3559 = vcmask 64512
    %v3560 = vsel %vm3559, %v3558, %v3532
    %vm3561 = vcmask 72704
    %v3562 = vsel %vm3561, %v3560, %v3536
    %vm3563 = vcmask 80896
    %v3564 = vsel %vm3563, %v3562, %v3540
    %vm3565 = vcmask 89088
    %v3566 = vsel %vm3565, %v3564, %v3544
    %vm3567 = vcmask 97280
    %v3568 = vsel %vm3567, %v3566, 0.0
    %3569 = vst [vmem:[#allocation9 + $0x8] sm:$0xff] %v3568
    // Predicated region
    $region42: #{tpu_custom_call.1} parent=1 // pred_check
      _
    $region43: #{tpu_custom_call.1} parent=1 // pred_check_branch
      %3571 = sbr.rel (0) target = $region45
    $region44: #{tpu_custom_call.1} parent=1 // pred_region
      %s3573 = ssub.s32 512, 512
      %3574 = vsyncadd [#allocation5], %s3573
      %s3575 = sshll.u32 [#allocation8], 4
      %s3576 = int_to_ptr.vmem [resolvable:$true] %s3575
      %3581 = dma.vmem_to_hbm [thread:$0]  %s3576, 512, %s8, [#allocation5], 128, 128, 8
    $region45: #{tpu_custom_call.1} parent=1 // pred_fallthru
      _
    // Predicated region
    $region46: #{tpu_custom_call.1} parent=1 // pred_check
      _
    $region47: #{tpu_custom_call.1} parent=1 // pred_check_branch
      %3583 = sbr.rel (0) target = $region49
    $region48: #{tpu_custom_call.1} parent=1 // pred_region
      %s3585 = ssub.s32 256, 256
      %3586 = vsyncadd [#allocation10], %s3585
      %s3587 = sshll.u32 [#allocation9], 4
      %s3588 = int_to_ptr.vmem [resolvable:$true] %s3587
      %3593 = dma.vmem_to_hbm [thread:$0]  %s3588, 256, %s9, [#allocation10], 128, 128, 8
    $region49: #{tpu_custom_call.1} parent=1 // pred_fallthru
      _
    // Predicated region
    $region50: #{tpu_custom_call.1} parent=1 // pred_check
      _
    $region51: #{tpu_custom_call.1} parent=1 // pred_check_branch
      %3595 = sbr.rel (0) target = $region53
    $region52: #{tpu_custom_call.1} parent=1 // pred_region
      %3596 = dma.done [#allocation5], 512
    $region53: #{tpu_custom_call.1} parent=1 // pred_fallthru
      _
    // Predicated region
    $region54: #{tpu_custom_call.1} parent=1 // pred_check
      _
    $region55: #{tpu_custom_call.1} parent=1 // pred_check_branch
      %3598 = sbr.rel (0) target = $region57
    $region56: #{tpu_custom_call.1} parent=1 // pred_region
      %3599 = dma.done [#allocation10], 256
    $region57: #{tpu_custom_call.1} parent=1 // pred_fallthru
      _
    %3600 = vsyncpa [#allocation4], 1
    %3601 = vsyncpa [#allocation5], 1
    %3602 = vsyncpa [#allocation10], 1
    %3603 = vsyncpa [#allocation6], 1

</llo_original>
